<compile_context>
chip_gen: v5e
topology: v5e:2x2
jax: 0.10.0
libtpu: 0.0.40
codegen_flags: <defaults>
</compile_context>

<pallas_src>
import functools
import math

import numpy as np

import jax
import jax.numpy as jnp
from jax import lax
from jax.experimental import pallas as pl
from jax.experimental.pallas import tpu as pltpu


# ----------------------- fused conv-GEMM + IAF kernel -----------------------
def _conv_iaf_kernel(w_ref, p_ref, o_ref, z_ref):
    """w_ref: (Cout, K) bf16; p_ref: (K, T*bm) bf16 (time folded on lanes,
    t-major); o_ref: (T, Cout, bm) f32 spikes; z_ref: VMEM scratch (Cout, T*bm).

    One GEMM per M-tile (covers all timesteps), then the IAF recurrence walks
    aligned lane slices of the scratch-resident pre-activations.
    """
    T, Cout, bm = o_ref.shape
    z_ref[...] = lax.dot_general(
        w_ref[...], p_ref[...],
        dimension_numbers=(((1,), (0,)), ((), ())),
        preferred_element_type=jnp.float32,
    )
    v = jnp.zeros((Cout, bm), jnp.float32)
    for t in range(T):                                   # T small & static -> unrolled
        v = v + z_ref[:, t * bm:(t + 1) * bm]
        s = jnp.floor(jnp.maximum(v, 0.0))               # MultiSpike (threshold = 1.0)
        o_ref[t] = s
        v = jnp.maximum(v - s, -1.0)                     # MembraneSubtract + min_v_mem


# ------------------- fused tail kernel (conv3/conv4/FC) ---------------------
def _tail_kernel(p3_ref, w3_ref, pmat_ref, w4s_ref, wl_ref, o_ref):
    """Fully VMEM-resident tail: conv3-GEMM+IAF, 2x2 avg-pool (matmul with a
    constant matrix), conv4 (expressed as 4 per-position dense matmuls, valid
    for the 2x2/pad-1 case), IAF, flatten (baked into weight layout), FC + IAF.

    p3_ref : (T*M3, K3) conv3 patches, rows ordered (t, b, ho, wo)
    w3_ref : (K3, C3)
    pmat_ref: (4*BP, M3) pooling matrix, rows ((hp*2+wp)*BP + b)
    w4s_ref: (4, C3, C4*4) per-input-position conv4 weights, cols (co, ho, wo)
    wl_ref : (NO, C4*4) PyTorch Linear weight (out, in), used un-transposed
    o_ref  : (B, T, NO) spikes, PyTorch (b, t) row order
    """
    B, T, NO = o_ref.shape
    M3 = p3_ref.shape[0] // T
    C3 = w3_ref.shape[1]
    BP = pmat_ref.shape[0] // 4
    F4 = w4s_ref.shape[2]

    # conv3 GEMM hoisted out of the time loop (covers all T at once).
    z3 = jnp.dot(p3_ref[...], w3_ref[...], preferred_element_type=jnp.float32)
    pmat = pmat_ref[...]
    wl = wl_ref[...]

    v3 = jnp.zeros((M3, C3), jnp.float32)
    v4 = jnp.zeros((BP, F4), jnp.float32)
    v5 = jnp.zeros((BP, NO), jnp.float32)
    for t in range(T):
        # ---- conv3 IAF ----
        v3 = v3 + z3[t * M3:(t + 1) * M3, :]
        s3 = jnp.floor(jnp.maximum(v3, 0.0))
        v3 = jnp.maximum(v3 - s3, -1.0)
        # ---- AvgPool2d(2,2): rows (b,4,4) -> rows ((hp*2+wp)*BP + b) ----
        pooled = jnp.dot(pmat, s3, preferred_element_type=jnp.float32)
        # ---- conv4 on 2x2 input (pad 1) as 4 per-position dense matmuls ----
        z4 = jnp.zeros((BP, F4), jnp.float32)
        for spos in range(4):
            z4 = z4 + jnp.dot(pooled[spos * BP:(spos + 1) * BP, :],
                              w4s_ref[spos],
                              preferred_element_type=jnp.float32)
        v4 = v4 + z4
        s4 = jnp.floor(jnp.maximum(v4, 0.0))
        v4 = jnp.maximum(v4 - s4, -1.0)
        # ---- Flatten (already in (co,ho,wo) order) + Linear + IAF ----
        z5 = lax.dot_general(s4, wl,
                             dimension_numbers=(((1,), (1,)), ((), ())),
                             preferred_element_type=jnp.float32)
        v5 = v5 + z5
        s5 = jnp.floor(jnp.maximum(v5, 0.0))
        v5 = jnp.maximum(v5 - s5, -1.0)
        o_ref[:, t, :] = s5[:B, :]


# ------------------------------ JAX-level glue ------------------------------
def avgpool2x2(x):
    """AvgPool2d(2,2) on (T, C, B, H, W) as reshape+mean (fused by XLA into the
    neighbouring patch-extraction fusion; no separate kernel)."""
    T, C, B, H, W = x.shape
    return x.reshape(T, C, B, H // 2, 2, W // 2, 2).mean(axis=(4, 6))


def _taps(x, kh, kw, stride, pad):
    """x: (T, C, B, H, W) -> (T, C, kh*kw, B, Ho, Wo) tap stack."""
    T, C, B, H, W = x.shape
    Ho = (H + 2 * pad - kh) // stride + 1
    Wo = (W + 2 * pad - kw) // stride + 1
    xp = jnp.pad(x, ((0, 0), (0, 0), (0, 0), (pad, pad), (pad, pad)))
    taps = []
    for i in range(kh):
        for j in range(kw):
            taps.append(
                lax.slice(
                    xp,
                    (0, 0, 0, i, j),
                    (T, C, B, i + stride * (Ho - 1) + 1, j + stride * (Wo - 1) + 1),
                    (1, 1, 1, stride, stride),
                )
            )
    return jnp.stack(taps, axis=2), Ho, Wo


def _make_patches_lanes(x, kh, kw, stride, pad, nt):
    """Patches for the big layers, shape (nt, K, T*bm) bf16 with time folded
    onto the lane axis (t-major within each M tile)."""
    # TODO(synk): layers 1-2 could extract patches fully in-kernel via a 9-long
    # 'arbitrary' grid axis to avoid materializing the 9x patch tensor in HBM.
    T, C, B, _, _ = x.shape
    p, Ho, Wo = _taps(x, kh, kw, stride, pad)            # (T, C, khkw, B, Ho, Wo)
    K = C * kh * kw
    M = B * Ho * Wo
    bm = M // nt
    p = p.reshape(T, K, nt, bm)
    p = jnp.transpose(p, (2, 1, 0, 3)).reshape(nt, K, T * bm)
    return p.astype(jnp.bfloat16), Ho, Wo, bm


def conv_iaf(x, w, *, stride=1, pad=1):
    """Fused Conv2d(bias=False) + IAFSqueeze in one pallas_call.

    x: (T, Cin, B, H, W);  w: (Cout, Cin, kh, kw).
    Returns spikes in image layout (T, Cout, B, Ho, Wo), f32.
    """
    T, Cin, B, H, W = x.shape
    Cout, _, kh, kw = w.shape
    K = Cin * kh * kw
    Mfull = B * ((H + 2 * pad - kh) // stride + 1) * ((W + 2 * pad - kw) // stride + 1)
    # 2 lane-dense M tiles on a "parallel" axis when big enough (v7x megacore);
    # near-zero cost on single-TC v5e/v6e.
    nt = 2 if (Mfull >= 256 and (Mfull // 2) % 128 == 0) else 1

    p, Ho, Wo, bm = _make_patches_lanes(x, kh, kw, stride, pad, nt)   # (nt, K, T*bm)
    M = B * Ho * Wo
    wm = w.reshape(Cout, K).astype(jnp.bfloat16)

    spikes = pl.pallas_call(
        _conv_iaf_kernel,
        out_shape=jax.ShapeDtypeStruct((T, Cout, M), jnp.float32),
        grid=(nt,),
        in_specs=[
            pl.BlockSpec((Cout, K), lambda i: (0, 0)),
            pl.BlockSpec((None, K, T * bm), lambda i: (i, 0, 0)),
        ],
        out_specs=pl.BlockSpec((T, Cout, bm), lambda i: (0, 0, i)),
        scratch_shapes=[pltpu.VMEM((Cout, T * bm), jnp.float32)],
        compiler_params=pltpu.CompilerParams(dimension_semantics=("parallel",)),
    )(wm, p)
    return spikes.reshape(T, Cout, B, Ho, Wo)


def _im2col_rows(x, kh, kw, stride, pad):
    """x: (T, C, B, H, W) -> patches with rows (t, b, ho, wo), lanes (c, kh, kw)."""
    T, C, B, _, _ = x.shape
    p, Ho, Wo = _taps(x, kh, kw, stride, pad)            # (T, C, khkw, B, Ho, Wo)
    p = jnp.transpose(p, (0, 3, 4, 5, 1, 2))             # (T, B, Ho, Wo, C, khkw)
    return p.reshape(T * B * Ho * Wo, C * kh * kw), Ho, Wo


def _pool_rows_matrix(B, Hin, Win, BP):
    """Constant matrix mapping rows (b, h, w) of an (Hin x Win) grid to pooled
    rows ((hp*Wout + wp)*BP + b); built with NumPy at trace time."""
    Hout, Wout = Hin // 2, Win // 2
    P = np.zeros((Hout * Wout * BP, B * Hin * Win), np.float32)
    for hp in range(Hout):
        for wp in range(Wout):
            for b in range(B):
                r = (hp * Wout + wp) * BP + b
                for dh in range(2):
                    for dw in range(2):
                        P[r, b * Hin * Win + (2 * hp + dh) * Win + (2 * wp + dw)] = 0.25
    return jnp.asarray(P)


def _conv4_as_fc_weights(w4):
    """3x3/pad-1 conv on a 2x2 input == dense map per input position.
    Returns (4, C3, C4*4): for input pos s=(hi,wi), [ci, co*4 + ho*2 + wo]."""
    C4, C3 = w4.shape[0], w4.shape[1]
    mats = []
    for hi in range(2):
        for wi in range(2):
            cols = []
            for ho in range(2):
                for wo in range(2):
                    cols.append(w4[:, :, 1 + hi - ho, 1 + wi - wo])   # (C4, C3)
            m = jnp.stack(cols, axis=2)                               # (C4, C3, 4)
            m = jnp.transpose(m, (1, 0, 2)).reshape(C3, C4 * 4)
            mats.append(m)
    return jnp.stack(mats, axis=0)


def tail_fused(s2, w3, w4, wl):
    """Fused tail: pool -> conv3 -> IAF -> pool -> conv4 -> IAF -> flatten ->
    FC -> IAF in ONE pallas_call.  s2: (T, C2, B, 16, 16) conv2 spikes."""
    T, C2, B = s2.shape[0], s2.shape[1], s2.shape[2]
    a = avgpool2x2(s2)                                    # (T, C2, B, 8, 8)
    p3, Ho3, Wo3 = _im2col_rows(a, 3, 3, 2, 1)            # (T*B*16, C2*9)
    M3 = B * Ho3 * Wo3
    C3 = w3.shape[0]
    K3 = C2 * 9
    assert Ho3 // 2 == 2 and Wo3 // 2 == 2, "tail kernel assumes 2x2 conv4 input"

    w3t = jnp.transpose(w3.reshape(C3, K3))               # (K3, C3)
    BP = max(8, ((B + 7) // 8) * 8)                       # pad batch rows to 8
    pmat = _pool_rows_matrix(B, Ho3, Wo3, BP)             # (4*BP, M3)
    w4s = _conv4_as_fc_weights(w4)                        # (4, C3, C4*4)
    NO = wl.shape[0]

    out = pl.pallas_call(
        _tail_kernel,
        out_shape=jax.ShapeDtypeStruct((B, T, NO), jnp.float32),
        grid=(1,),
        in_specs=[
            pl.BlockSpec((T * M3, K3), lambda i: (0, 0)),
            pl.BlockSpec((K3, C3), lambda i: (0, 0)),
            pl.BlockSpec(pmat.shape, lambda i: (0, 0)),
            pl.BlockSpec(w4s.shape, lambda i: (0, 0, 0)),
            pl.BlockSpec(wl.shape, lambda i: (0, 0)),
        ],
        out_specs=pl.BlockSpec((B, T, NO), lambda i: (0, 0, 0)),
    )(p3, w3t, pmat, w4s, wl)
    return out.reshape(B * T, NO)                         # rows ordered (b, t)


# --------------------------------- Forward ----------------------------------
def snn_bptt_forward(x, params, batch_size=4):
    w1, w2, w3, w4, wl = params
    BT = x.shape[0]
    B = batch_size
    T = BT // B
    C, H, W = x.shape[1:]

    # (B*T, C, H, W), rows ordered batch-major / time-fast -> (T, C, B, H, W)
    xi = jnp.transpose(x.reshape(B, T, C, H, W), (1, 2, 0, 3, 4))

    s = conv_iaf(xi, w1, stride=1, pad=1)    # (T,  8, B, 32, 32)
    s = avgpool2x2(s)                        # (T,  8, B, 16, 16)
    s = conv_iaf(s, w2, stride=1, pad=1)     # (T, 16, B, 16, 16)
    out = tail_fused(s, w3, w4, wl)          # (B*T, 10) -- pool/conv3/pool/conv4/FC fused
    return out


# ----------------------------------- Main ------------------------------------
if __name__ == "__main__":
    key = jax.random.PRNGKey(0)
    k_in, k1, k2, k3, k4, kl = jax.random.split(key, 6)

    B_IAF, T = 4, 2          # IAFSqueeze batch_size = 4, choose 2 timesteps
    # Spatial 32x32 is implied by Flatten -> Linear(64*2*2, 10)
    x = jax.random.normal(k_in, (B_IAF * T, 2, 32, 32), dtype=jnp.float32)

    def winit(k, shape):
        fan_in = math.prod(shape[1:])
        return jax.random.normal(k, shape, dtype=jnp.float32) * (2.0 / fan_in) ** 0.5

    params = (
        winit(k1, (8, 2, 3, 3)),
        winit(k2, (16, 8, 3, 3)),
        winit(k3, (32, 16, 3, 3)),
        winit(k4, (64, 32, 3, 3)),
        winit(kl, (10, 64 * 2 * 2)),
    )

    fwd = jax.jit(functools.partial(snn_bptt_forward, batch_size=B_IAF))
    out = fwd(x, params)
    out = jax.block_until_ready(out)

    assert out.shape == (B_IAF * T, 10), out.shape
    assert bool(jnp.all(jnp.isfinite(out)))
    print("KERNEL_OK")
</pallas_src>

<mosaic_0001>
module attributes {stable_mosaic.version = 11 : i64} {
  func.func @_conv_iaf_kernel(%arg0: i32, %arg1: memref<8x18xbf16, #tpu.memory_space<vmem>>, %arg2: memref<1x18x4096xbf16, #tpu.memory_space<vmem>>, %arg3: memref<2x8x2048xf32, #tpu.memory_space<vmem>>, %arg4: memref<8x4096xf32, #tpu.memory_space<vmem>>) attributes {dimension_semantics = [#tpu.dimension_semantics<parallel>], iteration_bounds = array<i64: 2>, scalar_prefetch = 0 : i64, scratch_operands = 1 : i64, tpu.core_type = #tpu.core_type<tc>, window_params = [{pipeline_mode = #tpu.pipeline_mode<synchronous>, transform_indices = @transform_0, window_bounds = array<i64: 8, 18>}, {transform_indices = @transform_1, window_bounds = array<i64: 1, 18, 4096>}, {transform_indices = @transform_2, window_bounds = array<i64: 2, 8, 2048>}]} {
    %c0 = arith.constant 0 : index
    %c0_0 = arith.constant 0 : index
    %0 = vector.load %arg1[%c0, %c0_0] : memref<8x18xbf16, #tpu.memory_space<vmem>>, vector<8x18xbf16>
    %c0_1 = arith.constant 0 : index
    %c0_2 = arith.constant 0 : index
    %c0_3 = arith.constant 0 : index
    %1 = vector.load %arg2[%c0_1, %c0_2, %c0_3] : memref<1x18x4096xbf16, #tpu.memory_space<vmem>>, vector<1x18x4096xbf16>
    %2 = vector.shape_cast %1 : vector<1x18x4096xbf16> to vector<18x4096xbf16>
    %cst = arith.constant dense<0.000000e+00> : vector<8x4096xf32>
    %3 = tpu.matmul %0, %2, %cst {dimension_numbers = #tpu.dot_dimension_numbers<[1], [0], [0], [1], [0, 0, 1, 1], [], []>} : vector<8x18xbf16>, vector<18x4096xbf16>, vector<8x4096xf32> -> vector<8x4096xf32>
    %c0_4 = arith.constant 0 : index
    %c0_5 = arith.constant 0 : index
    %4 = vector.load %arg4[%c0_4, %c0_5] : memref<8x4096xf32, #tpu.memory_space<vmem>>, vector<8x4096xf32>
    tpu.vector_store %arg4[%c0_4, %c0_5], %3 {strides = array<i32>} : memref<8x4096xf32, #tpu.memory_space<vmem>>, vector<8x4096xf32>,
    %cst_6 = arith.constant 0.000000e+00 : f32
    %5 = vector.broadcast %cst_6 : f32 to vector<8x2048xf32>
    %c0_7 = arith.constant 0 : index
    %c0_8 = arith.constant 0 : index
    %6 = vector.load %arg4[%c0_7, %c0_8] : memref<8x4096xf32, #tpu.memory_space<vmem>>, vector<8x2048xf32>
    %7 = arith.addf %5, %6 : vector<8x2048xf32>
    %cst_9 = arith.constant 0.000000e+00 : f32
    %8 = vector.broadcast %cst_9 : f32 to vector<8x2048xf32>
    %9 = arith.maximumf %7, %8 : vector<8x2048xf32>
    %10 = math.floor %9 : vector<8x2048xf32>
    %c0_10 = arith.constant 0 : index
    %c0_11 = arith.constant 0 : index
    %c0_12 = arith.constant 0 : index
    %11 = vector.load %arg3[%c0_10, %c0_11, %c0_12] : memref<2x8x2048xf32, #tpu.memory_space<vmem>>, vector<1x8x2048xf32>
    %12 = vector.shape_cast %11 : vector<1x8x2048xf32> to vector<8x2048xf32>
    %13 = vector.shape_cast %10 : vector<8x2048xf32> to vector<1x8x2048xf32>
    tpu.vector_store %arg3[%c0_10, %c0_11, %c0_12], %13 {strides = array<i32>} : memref<2x8x2048xf32, #tpu.memory_space<vmem>>, vector<1x8x2048xf32>,
    %14 = arith.subf %7, %10 : vector<8x2048xf32>
    %cst_13 = arith.constant -1.000000e+00 : f32
    %15 = vector.broadcast %cst_13 : f32 to vector<8x2048xf32>
    %16 = arith.maximumf %14, %15 : vector<8x2048xf32>
    %c0_14 = arith.constant 0 : index
    %c2048 = arith.constant 2048 : index
    %17 = vector.load %arg4[%c0_14, %c2048] : memref<8x4096xf32, #tpu.memory_space<vmem>>, vector<8x2048xf32>
    %18 = arith.addf %16, %17 : vector<8x2048xf32>
    %cst_15 = arith.constant 0.000000e+00 : f32
    %19 = vector.broadcast %cst_15 : f32 to vector<8x2048xf32>
    %20 = arith.maximumf %18, %19 : vector<8x2048xf32>
    %21 = math.floor %20 : vector<8x2048xf32>
    %c1 = arith.constant 1 : index
    %c0_16 = arith.constant 0 : index
    %c0_17 = arith.constant 0 : index
    %22 = vector.load %arg3[%c1, %c0_16, %c0_17] : memref<2x8x2048xf32, #tpu.memory_space<vmem>>, vector<1x8x2048xf32>
    %23 = vector.shape_cast %22 : vector<1x8x2048xf32> to vector<8x2048xf32>
    %24 = vector.shape_cast %21 : vector<8x2048xf32> to vector<1x8x2048xf32>
    tpu.vector_store %arg3[%c1, %c0_16, %c0_17], %24 {strides = array<i32>} : memref<2x8x2048xf32, #tpu.memory_space<vmem>>, vector<1x8x2048xf32>,
    return
  }
  func.func @transform_0(%arg0: i32) -> (i32, i32) {
    %c0_i32 = arith.constant 0 : i32
    %c0_i32_0 = arith.constant 0 : i32
    %c0_i32_1 = arith.constant 0 : i32
    return %c0_i32, %c0_i32_0 : i32, i32
  }
  func.func @transform_1(%arg0: i32) -> (i32, i32, i32) {
    %c0_i32 = arith.constant 0 : i32
    %c0_i32_0 = arith.constant 0 : i32
    %c0_i32_1 = arith.constant 0 : i32
    return %arg0, %c0_i32, %c0_i32_0 : i32, i32, i32
  }
  func.func @transform_2(%arg0: i32) -> (i32, i32, i32) {
    %c0_i32 = arith.constant 0 : i32
    %c0_i32_0 = arith.constant 0 : i32
    %c0_i32_1 = arith.constant 0 : i32
    return %c0_i32, %c0_i32_0, %arg0 : i32, i32, i32
  }
}

module attributes {stable_mosaic.version = 11 : i64} {
  func.func @_conv_iaf_kernel(%arg0: i32, %arg1: memref<16x72xbf16, #tpu.memory_space<vmem>>, %arg2: memref<1x72x1024xbf16, #tpu.memory_space<vmem>>, %arg3: memref<2x16x512xf32, #tpu.memory_space<vmem>>, %arg4: memref<16x1024xf32, #tpu.memory_space<vmem>>) attributes {dimension_semantics = [#tpu.dimension_semantics<parallel>], iteration_bounds = array<i64: 2>, scalar_prefetch = 0 : i64, scratch_operands = 1 : i64, tpu.core_type = #tpu.core_type<tc>, window_params = [{pipeline_mode = #tpu.pipeline_mode<synchronous>, transform_indices = @transform_0, window_bounds = array<i64: 16, 72>}, {transform_indices = @transform_1, window_bounds = array<i64: 1, 72, 1024>}, {transform_indices = @transform_2, window_bounds = array<i64: 2, 16, 512>}]} {
    %c0 = arith.constant 0 : index
    %c0_0 = arith.constant 0 : index
    %0 = vector.load %arg1[%c0, %c0_0] : memref<16x72xbf16, #tpu.memory_space<vmem>>, vector<16x72xbf16>
    %c0_1 = arith.constant 0 : index
    %c0_2 = arith.constant 0 : index
    %c0_3 = arith.constant 0 : index
    %1 = vector.load %arg2[%c0_1, %c0_2, %c0_3] : memref<1x72x1024xbf16, #tpu.memory_space<vmem>>, vector<1x72x1024xbf16>
    %2 = vector.shape_cast %1 : vector<1x72x1024xbf16> to vector<72x1024xbf16>
    %cst = arith.constant dense<0.000000e+00> : vector<16x1024xf32>
    %3 = tpu.matmul %0, %2, %cst {dimension_numbers = #tpu.dot_dimension_numbers<[1], [0], [0], [1], [0, 0, 1, 1], [], []>} : vector<16x72xbf16>, vector<72x1024xbf16>, vector<16x1024xf32> -> vector<16x1024xf32>
    %c0_4 = arith.constant 0 : index
    %c0_5 = arith.constant 0 : index
    %4 = vector.load %arg4[%c0_4, %c0_5] : memref<16x1024xf32, #tpu.memory_space<vmem>>, vector<16x1024xf32>
    tpu.vector_store %arg4[%c0_4, %c0_5], %3 {strides = array<i32>} : memref<16x1024xf32, #tpu.memory_space<vmem>>, vector<16x1024xf32>,
    %cst_6 = arith.constant 0.000000e+00 : f32
    %5 = vector.broadcast %cst_6 : f32 to vector<16x512xf32>
    %c0_7 = arith.constant 0 : index
    %c0_8 = arith.constant 0 : index
    %6 = vector.load %arg4[%c0_7, %c0_8] : memref<16x1024xf32, #tpu.memory_space<vmem>>, vector<16x512xf32>
    %7 = arith.addf %5, %6 : vector<16x512xf32>
    %cst_9 = arith.constant 0.000000e+00 : f32
    %8 = vector.broadcast %cst_9 : f32 to vector<16x512xf32>
    %9 = arith.maximumf %7, %8 : vector<16x512xf32>
    %10 = math.floor %9 : vector<16x512xf32>
    %c0_10 = arith.constant 0 : index
    %c0_11 = arith.constant 0 : index
    %c0_12 = arith.constant 0 : index
    %11 = vector.load %arg3[%c0_10, %c0_11, %c0_12] : memref<2x16x512xf32, #tpu.memory_space<vmem>>, vector<1x16x512xf32>
    %12 = vector.shape_cast %11 : vector<1x16x512xf32> to vector<16x512xf32>
    %13 = vector.shape_cast %10 : vector<16x512xf32> to vector<1x16x512xf32>
    tpu.vector_store %arg3[%c0_10, %c0_11, %c0_12], %13 {strides = array<i32>} : memref<2x16x512xf32, #tpu.memory_space<vmem>>, vector<1x16x512xf32>,
    %14 = arith.subf %7, %10 : vector<16x512xf32>
    %cst_13 = arith.constant -1.000000e+00 : f32
    %15 = vector.broadcast %cst_13 : f32 to vector<16x512xf32>
    %16 = arith.maximumf %14, %15 : vector<16x512xf32>
    %c0_14 = arith.constant 0 : index
    %c512 = arith.constant 512 : index
    %17 = vector.load %arg4[%c0_14, %c512] : memref<16x1024xf32, #tpu.memory_space<vmem>>, vector<16x512xf32>
    %18 = arith.addf %16, %17 : vector<16x512xf32>
    %cst_15 = arith.constant 0.000000e+00 : f32
    %19 = vector.broadcast %cst_15 : f32 to vector<16x512xf32>
    %20 = arith.maximumf %18, %19 : vector<16x512xf32>
    %21 = math.floor %20 : vector<16x512xf32>
    %c1 = arith.constant 1 : index
    %c0_16 = arith.constant 0 : index
    %c0_17 = arith.constant 0 : index
    %22 = vector.load %arg3[%c1, %c0_16, %c0_17] : memref<2x16x512xf32, #tpu.memory_space<vmem>>, vector<1x16x512xf32>
    %23 = vector.shape_cast %22 : vector<1x16x512xf32> to vector<16x512xf32>
    %24 = vector.shape_cast %21 : vector<16x512xf32> to vector<1x16x512xf32>
    tpu.vector_store %arg3[%c1, %c0_16, %c0_17], %24 {strides = array<i32>} : memref<2x16x512xf32, #tpu.memory_space<vmem>>, vector<1x16x512xf32>,
    return
  }
  func.func @transform_0(%arg0: i32) -> (i32, i32) {
    %c0_i32 = arith.constant 0 : i32
    %c0_i32_0 = arith.constant 0 : i32
    %c0_i32_1 = arith.constant 0 : i32
    return %c0_i32, %c0_i32_0 : i32, i32
  }
  func.func @transform_1(%arg0: i32) -> (i32, i32, i32) {
    %c0_i32 = arith.constant 0 : i32
    %c0_i32_0 = arith.constant 0 : i32
    %c0_i32_1 = arith.constant 0 : i32
    return %arg0, %c0_i32, %c0_i32_0 : i32, i32, i32
  }
  func.func @transform_2(%arg0: i32) -> (i32, i32, i32) {
    %c0_i32 = arith.constant 0 : i32
    %c0_i32_0 = arith.constant 0 : i32
    %c0_i32_1 = arith.constant 0 : i32
    return %c0_i32, %c0_i32_0, %arg0 : i32, i32, i32
  }
}

module attributes {stable_mosaic.version = 11 : i64} {
  func.func @_tail_kernel(%arg0: i32, %arg1: memref<128x144xf32, #tpu.memory_space<vmem>>, %arg2: memref<144x32xf32, #tpu.memory_space<vmem>>, %arg3: memref<32x64xf32, #tpu.memory_space<vmem>>, %arg4: memref<4x32x256xf32, #tpu.memory_space<vmem>>, %arg5: memref<10x256xf32, #tpu.memory_space<vmem>>, %arg6: memref<4x2x10xf32, #tpu.memory_space<vmem>>) attributes {dimension_semantics = [#tpu.dimension_semantics<arbitrary>], iteration_bounds = array<i64: 1>, scalar_prefetch = 0 : i64, scratch_operands = 0 : i64, tpu.core_type = #tpu.core_type<tc>, window_params = [{pipeline_mode = #tpu.pipeline_mode<synchronous>, transform_indices = @transform_0, window_bounds = array<i64: 128, 144>}, {pipeline_mode = #tpu.pipeline_mode<synchronous>, transform_indices = @transform_1, window_bounds = array<i64: 144, 32>}, {pipeline_mode = #tpu.pipeline_mode<synchronous>, transform_indices = @transform_2, window_bounds = array<i64: 32, 64>}, {pipeline_mode = #tpu.pipeline_mode<synchronous>, transform_indices = @transform_3, window_bounds = array<i64: 4, 32, 256>}, {pipeline_mode = #tpu.pipeline_mode<synchronous>, transform_indices = @transform_4, window_bounds = array<i64: 10, 256>}, {pipeline_mode = #tpu.pipeline_mode<synchronous>, transform_indices = @transform_5, window_bounds = array<i64: 4, 2, 10>}]} {
    %c0 = arith.constant 0 : index
    %c0_0 = arith.constant 0 : index
    %0 = vector.load %arg1[%c0, %c0_0] : memref<128x144xf32, #tpu.memory_space<vmem>>, vector<128x144xf32>
    %c0_1 = arith.constant 0 : index
    %c0_2 = arith.constant 0 : index
    %1 = vector.load %arg2[%c0_1, %c0_2] : memref<144x32xf32, #tpu.memory_space<vmem>>, vector<144x32xf32>
    %cst = arith.constant dense<0.000000e+00> : vector<128x32xf32>
    %2 = tpu.matmul %0, %1, %cst {dimension_numbers = #tpu.dot_dimension_numbers<[1], [0], [0], [1], [0, 0, 1, 1], [], []>} : vector<128x144xf32>, vector<144x32xf32>, vector<128x32xf32> -> vector<128x32xf32>
    %c0_3 = arith.constant 0 : index
    %c0_4 = arith.constant 0 : index
    %3 = vector.load %arg3[%c0_3, %c0_4] : memref<32x64xf32, #tpu.memory_space<vmem>>, vector<32x64xf32>
    %c0_5 = arith.constant 0 : index
    %c0_6 = arith.constant 0 : index
    %4 = vector.load %arg5[%c0_5, %c0_6] : memref<10x256xf32, #tpu.memory_space<vmem>>, vector<10x256xf32>
    %cst_7 = arith.constant 0.000000e+00 : f32
    %5 = vector.broadcast %cst_7 : f32 to vector<64x32xf32>
    %cst_8 = arith.constant 0.000000e+00 : f32
    %6 = vector.broadcast %cst_8 : f32 to vector<8x256xf32>
    %cst_9 = arith.constant 0.000000e+00 : f32
    %7 = vector.broadcast %cst_9 : f32 to vector<8x10xf32>
    %8 = vector.extract_strided_slice %2 {offsets = [0, 0], sizes = [64, 32], strides = [1, 1]} : vector<128x32xf32> to vector<64x32xf32>
    %9 = arith.addf %5, %8 : vector<64x32xf32>
    %cst_10 = arith.constant 0.000000e+00 : f32
    %10 = vector.broadcast %cst_10 : f32 to vector<64x32xf32>
    %11 = arith.maximumf %9, %10 : vector<64x32xf32>
    %12 = math.floor %11 : vector<64x32xf32>
    %13 = arith.subf %9, %12 : vector<64x32xf32>
    %cst_11 = arith.constant -1.000000e+00 : f32
    %14 = vector.broadcast %cst_11 : f32 to vector<64x32xf32>
    %15 = arith.maximumf %13, %14 : vector<64x32xf32>
    %cst_12 = arith.constant dense<0.000000e+00> : vector<32x32xf32>
    %16 = tpu.matmul %3, %12, %cst_12 {dimension_numbers = #tpu.dot_dimension_numbers<[1], [0], [0], [1], [0, 0, 1, 1], [], []>} : vector<32x64xf32>, vector<64x32xf32>, vector<32x32xf32> -> vector<32x32xf32>
    %cst_13 = arith.constant 0.000000e+00 : f32
    %17 = vector.broadcast %cst_13 : f32 to vector<8x256xf32>
    %18 = vector.extract_strided_slice %16 {offsets = [0, 0], sizes = [8, 32], strides = [1, 1]} : vector<32x32xf32> to vector<8x32xf32>
    %c0_14 = arith.constant 0 : index
    %c0_15 = arith.constant 0 : index
    %c0_16 = arith.constant 0 : index
    %19 = vector.load %arg4[%c0_14, %c0_15, %c0_16] : memref<4x32x256xf32, #tpu.memory_space<vmem>>, vector<1x32x256xf32>
    %20 = vector.shape_cast %19 : vector<1x32x256xf32> to vector<32x256xf32>
    %cst_17 = arith.constant dense<0.000000e+00> : vector<8x256xf32>
    %21 = tpu.matmul %18, %20, %cst_17 {dimension_numbers = #tpu.dot_dimension_numbers<[1], [0], [0], [1], [0, 0, 1, 1], [], []>} : vector<8x32xf32>, vector<32x256xf32>, vector<8x256xf32> -> vector<8x256xf32>
    %22 = arith.addf %17, %21 : vector<8x256xf32>
    %23 = vector.extract_strided_slice %16 {offsets = [8, 0], sizes = [8, 32], strides = [1, 1]} : vector<32x32xf32> to vector<8x32xf32>
    %c1 = arith.constant 1 : index
    %c0_18 = arith.constant 0 : index
    %c0_19 = arith.constant 0 : index
    %24 = vector.load %arg4[%c1, %c0_18, %c0_19] : memref<4x32x256xf32, #tpu.memory_space<vmem>>, vector<1x32x256xf32>
    %25 = vector.shape_cast %24 : vector<1x32x256xf32> to vector<32x256xf32>
    %cst_20 = arith.constant dense<0.000000e+00> : vector<8x256xf32>
    %26 = tpu.matmul %23, %25, %cst_20 {dimension_numbers = #tpu.dot_dimension_numbers<[1], [0], [0], [1], [0, 0, 1, 1], [], []>} : vector<8x32xf32>, vector<32x256xf32>, vector<8x256xf32> -> vector<8x256xf32>
    %27 = arith.addf %22, %26 : vector<8x256xf32>
    %28 = vector.extract_strided_slice %16 {offsets = [16, 0], sizes = [8, 32], strides = [1, 1]} : vector<32x32xf32> to vector<8x32xf32>
    %c2 = arith.constant 2 : index
    %c0_21 = arith.constant 0 : index
    %c0_22 = arith.constant 0 : index
    %29 = vector.load %arg4[%c2, %c0_21, %c0_22] : memref<4x32x256xf32, #tpu.memory_space<vmem>>, vector<1x32x256xf32>
    %30 = vector.shape_cast %29 : vector<1x32x256xf32> to vector<32x256xf32>
    %cst_23 = arith.constant dense<0.000000e+00> : vector<8x256xf32>
    %31 = tpu.matmul %28, %30, %cst_23 {dimension_numbers = #tpu.dot_dimension_numbers<[1], [0], [0], [1], [0, 0, 1, 1], [], []>} : vector<8x32xf32>, vector<32x256xf32>, vector<8x256xf32> -> vector<8x256xf32>
    %32 = arith.addf %27, %31 : vector<8x256xf32>
    %33 = vector.extract_strided_slice %16 {offsets = [24, 0], sizes = [8, 32], strides = [1, 1]} : vector<32x32xf32> to vector<8x32xf32>
    %c3 = arith.constant 3 : index
    %c0_24 = arith.constant 0 : index
    %c0_25 = arith.constant 0 : index
    %34 = vector.load %arg4[%c3, %c0_24, %c0_25] : memref<4x32x256xf32, #tpu.memory_space<vmem>>, vector<1x32x256xf32>
    %35 = vector.shape_cast %34 : vector<1x32x256xf32> to vector<32x256xf32>
    %cst_26 = arith.constant dense<0.000000e+00> : vector<8x256xf32>
    %36 = tpu.matmul %33, %35, %cst_26 {dimension_numbers = #tpu.dot_dimension_numbers<[1], [0], [0], [1], [0, 0, 1, 1], [], []>} : vector<8x32xf32>, vector<32x256xf32>, vector<8x256xf32> -> vector<8x256xf32>
    %37 = arith.addf %32, %36 : vector<8x256xf32>
    %38 = arith.addf %6, %37 : vector<8x256xf32>
    %cst_27 = arith.constant 0.000000e+00 : f32
    %39 = vector.broadcast %cst_27 : f32 to vector<8x256xf32>
    %40 = arith.maximumf %38, %39 : vector<8x256xf32>
    %41 = math.floor %40 : vector<8x256xf32>
    %42 = arith.subf %38, %41 : vector<8x256xf32>
    %cst_28 = arith.constant -1.000000e+00 : f32
    %43 = vector.broadcast %cst_28 : f32 to vector<8x256xf32>
    %44 = arith.maximumf %42, %43 : vector<8x256xf32>
    %cst_29 = arith.constant dense<0.000000e+00> : vector<8x10xf32>
    %45 = tpu.matmul %41, %4, %cst_29 {dimension_numbers = #tpu.dot_dimension_numbers<[1], [1], [0], [0], [0, 0, 1, 0], [], []>} : vector<8x256xf32>, vector<10x256xf32>, vector<8x10xf32> -> vector<8x10xf32>
    %46 = arith.addf %7, %45 : vector<8x10xf32>
    %cst_30 = arith.constant 0.000000e+00 : f32
    %47 = vector.broadcast %cst_30 : f32 to vector<8x10xf32>
    %48 = arith.maximumf %46, %47 : vector<8x10xf32>
    %49 = math.floor %48 : vector<8x10xf32>
    %50 = arith.subf %46, %49 : vector<8x10xf32>
    %cst_31 = arith.constant -1.000000e+00 : f32
    %51 = vector.broadcast %cst_31 : f32 to vector<8x10xf32>
    %52 = arith.maximumf %50, %51 : vector<8x10xf32>
    %53 = vector.extract_strided_slice %49 {offsets = [0, 0], sizes = [4, 10], strides = [1, 1]} : vector<8x10xf32> to vector<4x10xf32>
    %c0_32 = arith.constant 0 : index
    %c0_33 = arith.constant 0 : index
    %c0_34 = arith.constant 0 : index
    %54 = vector.load %arg6[%c0_32, %c0_33, %c0_34] : memref<4x2x10xf32, #tpu.memory_space<vmem>>, vector<4x1x10xf32>
    %55 = vector.shape_cast %54 : vector<4x1x10xf32> to vector<4x10xf32>
    %56 = vector.shape_cast %53 : vector<4x10xf32> to vector<4x1x10xf32>
    tpu.vector_store %arg6[%c0_32, %c0_33, %c0_34], %56 {strides = array<i32>} : memref<4x2x10xf32, #tpu.memory_space<vmem>>, vector<4x1x10xf32>,
    %57 = vector.extract_strided_slice %2 {offsets = [64, 0], sizes = [64, 32], strides = [1, 1]} : vector<128x32xf32> to vector<64x32xf32>
    %58 = arith.addf %15, %57 : vector<64x32xf32>
    %cst_35 = arith.constant 0.000000e+00 : f32
    %59 = vector.broadcast %cst_35 : f32 to vector<64x32xf32>
    %60 = arith.maximumf %58, %59 : vector<64x32xf32>
    %61 = math.floor %60 : vector<64x32xf32>
    %cst_36 = arith.constant dense<0.000000e+00> : vector<32x32xf32>
    %62 = tpu.matmul %3, %61, %cst_36 {dimension_numbers = #tpu.dot_dimension_numbers<[1], [0], [0], [1], [0, 0, 1, 1], [], []>} : vector<32x64xf32>, vector<64x32xf32>, vector<32x32xf32> -> vector<32x32xf32>
    %cst_37 = arith.constant 0.000000e+00 : f32
    %63 = vector.broadcast %cst_37 : f32 to vector<8x256xf32>
    %64 = vector.extract_strided_slice %62 {offsets = [0, 0], sizes = [8, 32], strides = [1, 1]} : vector<32x32xf32> to vector<8x32xf32>
    %c0_38 = arith.constant 0 : index
    %c0_39 = arith.constant 0 : index
    %c0_40 = arith.constant 0 : index
    %65 = vector.load %arg4[%c0_38, %c0_39, %c0_40] : memref<4x32x256xf32, #tpu.memory_space<vmem>>, vector<1x32x256xf32>
    %66 = vector.shape_cast %65 : vector<1x32x256xf32> to vector<32x256xf32>
    %cst_41 = arith.constant dense<0.000000e+00> : vector<8x256xf32>
    %67 = tpu.matmul %64, %66, %cst_41 {dimension_numbers = #tpu.dot_dimension_numbers<[1], [0], [0], [1], [0, 0, 1, 1], [], []>} : vector<8x32xf32>, vector<32x256xf32>, vector<8x256xf32> -> vector<8x256xf32>
    %68 = arith.addf %63, %67 : vector<8x256xf32>
    %69 = vector.extract_strided_slice %62 {offsets = [8, 0], sizes = [8, 32], strides = [1, 1]} : vector<32x32xf32> to vector<8x32xf32>
    %c1_42 = arith.constant 1 : index
    %c0_43 = arith.constant 0 : index
    %c0_44 = arith.constant 0 : index
    %70 = vector.load %arg4[%c1_42, %c0_43, %c0_44] : memref<4x32x256xf32, #tpu.memory_space<vmem>>, vector<1x32x256xf32>
    %71 = vector.shape_cast %70 : vector<1x32x256xf32> to vector<32x256xf32>
    %cst_45 = arith.constant dense<0.000000e+00> : vector<8x256xf32>
    %72 = tpu.matmul %69, %71, %cst_45 {dimension_numbers = #tpu.dot_dimension_numbers<[1], [0], [0], [1], [0, 0, 1, 1], [], []>} : vector<8x32xf32>, vector<32x256xf32>, vector<8x256xf32> -> vector<8x256xf32>
    %73 = arith.addf %68, %72 : vector<8x256xf32>
    %74 = vector.extract_strided_slice %62 {offsets = [16, 0], sizes = [8, 32], strides = [1, 1]} : vector<32x32xf32> to vector<8x32xf32>
    %c2_46 = arith.constant 2 : index
    %c0_47 = arith.constant 0 : index
    %c0_48 = arith.constant 0 : index
    %75 = vector.load %arg4[%c2_46, %c0_47, %c0_48] : memref<4x32x256xf32, #tpu.memory_space<vmem>>, vector<1x32x256xf32>
    %76 = vector.shape_cast %75 : vector<1x32x256xf32> to vector<32x256xf32>
    %cst_49 = arith.constant dense<0.000000e+00> : vector<8x256xf32>
    %77 = tpu.matmul %74, %76, %cst_49 {dimension_numbers = #tpu.dot_dimension_numbers<[1], [0], [0], [1], [0, 0, 1, 1], [], []>} : vector<8x32xf32>, vector<32x256xf32>, vector<8x256xf32> -> vector<8x256xf32>
    %78 = arith.addf %73, %77 : vector<8x256xf32>
    %79 = vector.extract_strided_slice %62 {offsets = [24, 0], sizes = [8, 32], strides = [1, 1]} : vector<32x32xf32> to vector<8x32xf32>
    %c3_50 = arith.constant 3 : index
    %c0_51 = arith.constant 0 : index
    %c0_52 = arith.constant 0 : index
    %80 = vector.load %arg4[%c3_50, %c0_51, %c0_52] : memref<4x32x256xf32, #tpu.memory_space<vmem>>, vector<1x32x256xf32>
    %81 = vector.shape_cast %80 : vector<1x32x256xf32> to vector<32x256xf32>
    %cst_53 = arith.constant dense<0.000000e+00> : vector<8x256xf32>
    %82 = tpu.matmul %79, %81, %cst_53 {dimension_numbers = #tpu.dot_dimension_numbers<[1], [0], [0], [1], [0, 0, 1, 1], [], []>} : vector<8x32xf32>, vector<32x256xf32>, vector<8x256xf32> -> vector<8x256xf32>
    %83 = arith.addf %78, %82 : vector<8x256xf32>
    %84 = arith.addf %44, %83 : vector<8x256xf32>
    %cst_54 = arith.constant 0.000000e+00 : f32
    %85 = vector.broadcast %cst_54 : f32 to vector<8x256xf32>
    %86 = arith.maximumf %84, %85 : vector<8x256xf32>
    %87 = math.floor %86 : vector<8x256xf32>
    %cst_55 = arith.constant dense<0.000000e+00> : vector<8x10xf32>
    %88 = tpu.matmul %87, %4, %cst_55 {dimension_numbers = #tpu.dot_dimension_numbers<[1], [1], [0], [0], [0, 0, 1, 0], [], []>} : vector<8x256xf32>, vector<10x256xf32>, vector<8x10xf32> -> vector<8x10xf32>
    %89 = arith.addf %52, %88 : vector<8x10xf32>
    %cst_56 = arith.constant 0.000000e+00 : f32
    %90 = vector.broadcast %cst_56 : f32 to vector<8x10xf32>
    %91 = arith.maximumf %89, %90 : vector<8x10xf32>
    %92 = math.floor %91 : vector<8x10xf32>
    %93 = vector.extract_strided_slice %92 {offsets = [0, 0], sizes = [4, 10], strides = [1, 1]} : vector<8x10xf32> to vector<4x10xf32>
    %c0_57 = arith.constant 0 : index
    %c1_58 = arith.constant 1 : index
    %c0_59 = arith.constant 0 : index
    %94 = vector.load %arg6[%c0_57, %c1_58, %c0_59] : memref<4x2x10xf32, #tpu.memory_space<vmem>>, vector<4x1x10xf32>
    %95 = vector.shape_cast %94 : vector<4x1x10xf32> to vector<4x10xf32>
    %96 = vector.shape_cast %93 : vector<4x10xf32> to vector<4x1x10xf32>
    tpu.vector_store %arg6[%c0_57, %c1_58, %c0_59], %96 {strides = array<i32>} : memref<4x2x10xf32, #tpu.memory_space<vmem>>, vector<4x1x10xf32>,
    return
  }
  func.func @transform_0(%arg0: i32) -> (i32, i32) {
    %c0_i32 = arith.constant 0 : i32
    %c0_i32_0 = arith.constant 0 : i32
    %c0_i32_1 = arith.constant 0 : i32
    return %c0_i32, %c0_i32_0 : i32, i32
  }
  func.func @transform_1(%arg0: i32) -> (i32, i32) {
    %c0_i32 = arith.constant 0 : i32
    %c0_i32_0 = arith.constant 0 : i32
    %c0_i32_1 = arith.constant 0 : i32
    return %c0_i32, %c0_i32_0 : i32, i32
  }
  func.func @transform_2(%arg0: i32) -> (i32, i32) {
    %c0_i32 = arith.constant 0 : i32
    %c0_i32_0 = arith.constant 0 : i32
    %c0_i32_1 = arith.constant 0 : i32
    return %c0_i32, %c0_i32_0 : i32, i32
  }
  func.func @transform_3(%arg0: i32) -> (i32, i32, i32) {
    %c0_i32 = arith.constant 0 : i32
    %c0_i32_0 = arith.constant 0 : i32
    %c0_i32_1 = arith.constant 0 : i32
    %c0_i32_2 = arith.constant 0 : i32
    return %c0_i32, %c0_i32_0, %c0_i32_1 : i32, i32, i32
  }
  func.func @transform_4(%arg0: i32) -> (i32, i32) {
    %c0_i32 = arith.constant 0 : i32
    %c0_i32_0 = arith.constant 0 : i32
    %c0_i32_1 = arith.constant 0 : i32
    return %c0_i32, %c0_i32_0 : i32, i32
  }
  func.func @transform_5(%arg0: i32) -> (i32, i32, i32) {
    %c0_i32 = arith.constant 0 : i32
    %c0_i32_0 = arith.constant 0 : i32
    %c0_i32_1 = arith.constant 0 : i32
    %c0_i32_2 = arith.constant 0 : i32
    return %c0_i32, %c0_i32_0, %c0_i32_1 : i32, i32, i32
  }
}

</mosaic_0001>

<llo_original>
// kernel: snn_bptt_forward.3
$region0: #{snn_bptt_forward.3}
  #allocation0 [shape = 'u32[]', space=smem, size = 0x4, offset = 0x4, fixed_abs, tag = 'smem constant byte address 0x4 - core index']
  #allocation1 [shape = 'u32[72,128]{1,0:T(1,128)}', space=vmem, size = 0x9000, scoped, tag = 'internal scratch']
  #allocation2 [shape = 'f32[8,4096]{1,0:T(8,128)}', space=vmem, size = 0x20000, scoped, tag = 'scratch operand']
  %s0 = inlined_call_operand.vmem [shape: bf16[8,18], index: 0, kind: input, shape index: {}]
  %s1 = inlined_call_operand.vmem [shape: bf16[2,18,4096], index: 1, kind: input, shape index: {}]
  %s2 = inlined_call_operand.vmem [shape: f32[2,8,4096], index: 2, kind: output, shape index: {}]
  %s3 = sld [smem:[#allocation0]]
  $region60: #{snn_bptt_forward.3} parent=0
    _
  %s5 = ssub.s32 1, %s3
  %s6 = scalar_select 0, %s5, %s3
  $region1: #{snn_bptt_forward.3} parent=0
    #allocation3 [shape = 'u8[262144]{0}', space=vmem, size = 0x40000, scoped, tag = 'output window, operand 0']
    loop: start=0, step=1, limit=4
    $region2: #{snn_bptt_forward.3} parent=1 // loop_pre_header
      _
    $region3: #{snn_bptt_forward.3} parent=1 // loop_header
      %s8 = sphi 0, %s12
      %p9 = scmp.ge.s32.totalorder %s8, 4
      %s16 = sphi 0, %s16
      %s18 = sphi 0, %s16
      %s19 = sphi 0, %s18
      %s33 = sphi 0, %s19
      %s39 = sphi 0, %s41
      %s42 = sphi 0, %s39
      %s43 = sphi 0, %s42
      %s59 = sphi 0, %s43
      %s65 = sphi 0, %s67
      %s68 = sphi 0, %s65
      %s69 = sphi 0, %s68
      %s85 = sphi 0, %s69
    $region4: #{snn_bptt_forward.3} parent=1 // loop_header_branch
      %11 = sbr.rel (%p9) target = $region8
    $region5: #{snn_bptt_forward.3} parent=1 // loop_body
      %s13 = ssub.s32 %s8, 1
      %s14 = ssub.s32 %s8, 2
      %s15 = sadd.s32 %s8, 1
      %s17 = sadd.s32 %s16, 1
      %p20 = scmp.eq.s32.totalorder %s8, 1
      %p21 = scmp.ne.s32.totalorder %s16, %s18
      %p22 = scmp.eq.s32.totalorder %s8, 0
      %p23 = por %p21, %p22
      %p24 = scmp.ne.s32.totalorder %s16, %s18
      %p25 = scmp.eq.s32.totalorder %s13, 1
      %p26 = por %p24, %p25
      %p27 = scmp.ne.s32.totalorder %s18, %s19
      %p28 = scmp.eq.s32.totalorder %s13, 0
      %p29 = por %p27, %p28
      %p30 = scmp.ne.s32.totalorder %s18, %s19
      %p31 = scmp.eq.s32.totalorder %s14, 1
      %p32 = por %p30, %p31
      %p34 = scmp.ne.s32.totalorder %s19, %s33
      %p35 = scmp.eq.s32.totalorder %s14, 0
      %p36 = por %p34, %p35
      %s37 = ssub.s32 %s8, %s15
      %p38 = scmp.eq.s32.totalorder %s37, 0
      %s40 = sadd.s32 %s39, 1
      %s41 = scalar_select %p38, %s39, %s40
      %p44 = pneg %p38
      %p45 = scmp.eq.s32.totalorder %s8, 1
      %p46 = por %p44, %p45
      %p47 = scmp.ne.s32.totalorder %s39, %s42
      %p48 = scmp.eq.s32.totalorder %s8, 0
      %p49 = por %p47, %p48
      %p50 = scmp.ne.s32.totalorder %s39, %s42
      %p51 = scmp.eq.s32.totalorder %s13, 1
      %p52 = por %p50, %p51
      %p53 = scmp.ne.s32.totalorder %s42, %s43
      %p54 = scmp.eq.s32.totalorder %s13, 0
      %p55 = por %p53, %p54
      %p56 = scmp.ne.s32.totalorder %s42, %s43
      %p57 = scmp.eq.s32.totalorder %s14, 1
      %p58 = por %p56, %p57
      %p60 = scmp.ne.s32.totalorder %s43, %s59
      %p61 = scmp.eq.s32.totalorder %s14, 0
      %p62 = por %p60, %p61
      %s63 = ssub.s32 %s8, %s15
      %p64 = scmp.eq.s32.totalorder %s63, 0
      %s66 = sadd.s32 %s65, 1
      %s67 = scalar_select %p64, %s65, %s66
      %p70 = pneg %p64
      %p71 = scmp.eq.s32.totalorder %s8, 1
      %p72 = por %p70, %p71
      %p73 = scmp.ne.s32.totalorder %s65, %s68
      %p74 = scmp.eq.s32.totalorder %s8, 0
      %p75 = por %p73, %p74
      %p76 = scmp.ne.s32.totalorder %s65, %s68
      %p77 = scmp.eq.s32.totalorder %s13, 1
      %p78 = por %p76, %p77
      %p79 = scmp.ne.s32.totalorder %s68, %s69
      %p80 = scmp.eq.s32.totalorder %s13, 0
      %p81 = por %p79, %p80
      %p82 = scmp.ne.s32.totalorder %s68, %s69
      %p83 = scmp.eq.s32.totalorder %s14, 1
      %p84 = por %p82, %p83
      %p86 = scmp.ne.s32.totalorder %s69, %s85
      %p87 = scmp.eq.s32.totalorder %s14, 0
      %p88 = por %p86, %p87
      %p89 = scmp.le.s32.totalorder 1, %s8
      %p90 = scmp.lt.s32.totalorder %s8, 3
      %p91 = pnand %p89, %p90
      %p92 = pneg %p91
      // Predicated region
      $region9: #{snn_bptt_forward.3} parent=5 // pred_check
        _
      $region10: #{snn_bptt_forward.3} parent=5 // pred_check_branch
        %94 = sbr.rel (%p91) target = $region12
      $region11: #{snn_bptt_forward.3} parent=5 // pred_region
        %s95 = ssub.s32 %s8, 1
        // Predicated region
        $region13: #{snn_bptt_forward.3} parent=11 // pred_check
          %p96 = pneg %p29
        $region14: #{snn_bptt_forward.3} parent=11 // pred_check_branch
          %98 = sbr.rel (%p96) target = $region16
        $region15: #{snn_bptt_forward.3} parent=11 // pred_region
          _
        $region16: #{snn_bptt_forward.3} parent=11 // pred_fallthru
          _
      $region12: #{snn_bptt_forward.3} parent=5 // pred_fallthru
        _
      %p99 = scmp.lt.s32.totalorder %s8, 2
      // Predicated region
      $region17: #{snn_bptt_forward.3} parent=5 // pred_check
        %p100 = pneg %p99
      $region18: #{snn_bptt_forward.3} parent=5 // pred_check_branch
        %102 = sbr.rel (%p100) target = $region20
      $region19: #{snn_bptt_forward.3} parent=5 // pred_region
        // Predicated region
        $region21: #{snn_bptt_forward.3} parent=19 // pred_check
          %p103 = pneg %p49
        $region22: #{snn_bptt_forward.3} parent=19 // pred_check_branch
          %105 = sbr.rel (%p103) target = $region24
        $region23: #{snn_bptt_forward.3} parent=19 // pred_region
          %p106 = scmp.lt.s32.totalorder %s8, 1
          %s107 = scalar_select %p106, %s8, 1
          %s108 = smul.addr %s107, 96
          %s109 = smul.addr %s108, 4
          %s110 = scalar_lea.vmem %s1, %s109
        $region24: #{snn_bptt_forward.3} parent=19 // pred_fallthru
          _
      $region20: #{snn_bptt_forward.3} parent=5 // pred_fallthru
        _
      %p111 = scmp.le.s32.totalorder 1, %s8
      %p112 = scmp.lt.s32.totalorder %s8, 3
      %p113 = pnand %p111, %p112
      %p114 = pneg %p113
      // Predicated region
      $region25: #{snn_bptt_forward.3} parent=5 // pred_check
        _
      $region26: #{snn_bptt_forward.3} parent=5 // pred_check_branch
        %116 = sbr.rel (%p113) target = $region28
      $region27: #{snn_bptt_forward.3} parent=5 // pred_region
        %s117 = ssub.s32 %s8, 1
        %p118 = pneg %p29
        %p119 = pneg %p26
        %p120 = scmp.lt.s32.totalorder %s13, 1
        %s121 = scalar_select %p120, %s13, 1
        %s122 = smul.addr %s121, 96
        %s123 = smul.addr %s122, 4
        %s124 = scalar_lea.vmem %s1, %s123
        %p125 = pneg %p55
        %p126 = pneg %p52
        %p127 = pneg %p81
        %p128 = pneg %p78
        %s129 = sand.u32 %s68, 1
        %s130 = sand.u32 %s68, 1
        %s131 = smul.addr %s130, 256
        %s132 = scalar_lea.vmem [#allocation3], %s131
        %p133 = scmp.lt.s32.totalorder %s13, 1
        %s134 = scalar_select %p133, %s13, 1
        %s135 = smul.addr %s134, 96
        %s136 = smul.addr %s135, 4
        %s137 = scalar_lea.vmem %s1, %s136
        %s138 = smul.u32 16, %s13
        %v140 = vld [vmem:[%s0] sm:$0xf]
        %v141 = vld [vmem:[%s137] sm:$0xff]
        %v142 = vld [vmem:[%s137 + $0x8] sm:$0xff]
        %v143 = vld [vmem:[%s137 + $0x10] sm:$0xff]
        %v144 = vld [vmem:[%s137 + $0x18] sm:$0xff]
        %v145 = vld [vmem:[%s137 + $0x20] sm:$0xff]
        %v146 = vld [vmem:[%s137 + $0x28] sm:$0xff]
        %v147 = vld [vmem:[%s137 + $0x30] sm:$0xff]
        %v148 = vld [vmem:[%s137 + $0x38] sm:$0xff]
        %v149 = vld [vmem:[%s137 + $0x40] sm:$0xff]
        %v150 = vld [vmem:[%s137 + $0x48] sm:$0xff]
        %v151 = vld [vmem:[%s137 + $0x50] sm:$0xff]
        %v152 = vld [vmem:[%s137 + $0x58] sm:$0xff]
        %v153 = vld [vmem:[%s137 + $0x60] sm:$0xff]
        %v154 = vld [vmem:[%s137 + $0x68] sm:$0xff]
        %v155 = vld [vmem:[%s137 + $0x70] sm:$0xff]
        %v156 = vld [vmem:[%s137 + $0x78] sm:$0xff]
        %v157 = vld [vmem:[%s137 + $0x80] sm:$0xff]
        %v158 = vld [vmem:[%s137 + $0x88] sm:$0xff]
        %v159 = vld [vmem:[%s137 + $0x90] sm:$0xff]
        %v160 = vld [vmem:[%s137 + $0x98] sm:$0xff]
        %v161 = vld [vmem:[%s137 + $0xa0] sm:$0xff]
        %v162 = vld [vmem:[%s137 + $0xa8] sm:$0xff]
        %v163 = vld [vmem:[%s137 + $0xb0] sm:$0xff]
        %v164 = vld [vmem:[%s137 + $0xb8] sm:$0xff]
        %v165 = vld [vmem:[%s137 + $0xc0] sm:$0xff]
        %v166 = vld [vmem:[%s137 + $0xc8] sm:$0xff]
        %v167 = vld [vmem:[%s137 + $0xd0] sm:$0xff]
        %v168 = vld [vmem:[%s137 + $0xd8] sm:$0xff]
        %v169 = vld [vmem:[%s137 + $0xe0] sm:$0xff]
        %v170 = vld [vmem:[%s137 + $0xe8] sm:$0xff]
        %v171 = vld [vmem:[%s137 + $0xf0] sm:$0xff]
        %v172 = vld [vmem:[%s137 + $0xf8] sm:$0xff]
        %v173 = vld [vmem:[%s137 + $0x100] sm:$0x11]
        %v174 = vld [vmem:[%s137 + $0x108] sm:$0x11]
        %v175 = vld [vmem:[%s137 + $0x110] sm:$0x11]
        %v176 = vld [vmem:[%s137 + $0x118] sm:$0x11]
        %v177 = vld [vmem:[%s137 + $0x120] sm:$0x11]
        %v178 = vld [vmem:[%s137 + $0x128] sm:$0x11]
        %v179 = vld [vmem:[%s137 + $0x130] sm:$0x11]
        %v180 = vld [vmem:[%s137 + $0x138] sm:$0x11]
        %v181 = vld [vmem:[%s137 + $0x140] sm:$0x11]
        %v182 = vld [vmem:[%s137 + $0x148] sm:$0x11]
        %v183 = vld [vmem:[%s137 + $0x150] sm:$0x11]
        %v184 = vld [vmem:[%s137 + $0x158] sm:$0x11]
        %v185 = vld [vmem:[%s137 + $0x160] sm:$0x11]
        %v186 = vld [vmem:[%s137 + $0x168] sm:$0x11]
        %v187 = vld [vmem:[%s137 + $0x170] sm:$0x11]
        %v188 = vld [vmem:[%s137 + $0x178] sm:$0x11]
        %v237 = vunpack.c.l.b16 %v141
        %v238 = vunpack.c.h.b16 %v141
        %v239 = vunpack.c.l.b16 %v142
        %v240 = vunpack.c.h.b16 %v142
        %v241 = vunpack.c.l.b16 %v143
        %v242 = vunpack.c.h.b16 %v143
        %v243 = vunpack.c.l.b16 %v144
        %v244 = vunpack.c.h.b16 %v144
        %v245 = vunpack.c.l.b16 %v145
        %v246 = vunpack.c.h.b16 %v145
        %v247 = vunpack.c.l.b16 %v146
        %v248 = vunpack.c.h.b16 %v146
        %v249 = vunpack.c.l.b16 %v147
        %v250 = vunpack.c.h.b16 %v147
        %v251 = vunpack.c.l.b16 %v148
        %v252 = vunpack.c.h.b16 %v148
        %v253 = vunpack.c.l.b16 %v149
        %v254 = vunpack.c.h.b16 %v149
        %v255 = vunpack.c.l.b16 %v150
        %v256 = vunpack.c.h.b16 %v150
        %v257 = vunpack.c.l.b16 %v151
        %v258 = vunpack.c.h.b16 %v151
        %v259 = vunpack.c.l.b16 %v152
        %v260 = vunpack.c.h.b16 %v152
        %v261 = vunpack.c.l.b16 %v153
        %v262 = vunpack.c.h.b16 %v153
        %v263 = vunpack.c.l.b16 %v154
        %v264 = vunpack.c.h.b16 %v154
        %v265 = vunpack.c.l.b16 %v155
        %v266 = vunpack.c.h.b16 %v155
        %v267 = vunpack.c.l.b16 %v156
        %v268 = vunpack.c.h.b16 %v156
        %v269 = vunpack.c.l.b16 %v157
        %v270 = vunpack.c.h.b16 %v157
        %v271 = vunpack.c.l.b16 %v158
        %v272 = vunpack.c.h.b16 %v158
        %v273 = vunpack.c.l.b16 %v159
        %v274 = vunpack.c.h.b16 %v159
        %v275 = vunpack.c.l.b16 %v160
        %v276 = vunpack.c.h.b16 %v160
        %v277 = vunpack.c.l.b16 %v161
        %v278 = vunpack.c.h.b16 %v161
        %v279 = vunpack.c.l.b16 %v162
        %v280 = vunpack.c.h.b16 %v162
        %v281 = vunpack.c.l.b16 %v163
        %v282 = vunpack.c.h.b16 %v163
        %v283 = vunpack.c.l.b16 %v164
        %v284 = vunpack.c.h.b16 %v164
        %v285 = vunpack.c.l.b16 %v165
        %v286 = vunpack.c.h.b16 %v165
        %v287 = vunpack.c.l.b16 %v166
        %v288 = vunpack.c.h.b16 %v166
        %v289 = vunpack.c.l.b16 %v167
        %v290 = vunpack.c.h.b16 %v167
        %v291 = vunpack.c.l.b16 %v168
        %v292 = vunpack.c.h.b16 %v168
        %v293 = vunpack.c.l.b16 %v169
        %v294 = vunpack.c.h.b16 %v169
        %v295 = vunpack.c.l.b16 %v170
        %v296 = vunpack.c.h.b16 %v170
        %v297 = vunpack.c.l.b16 %v171
        %v298 = vunpack.c.h.b16 %v171
        %v299 = vunpack.c.l.b16 %v172
        %v300 = vunpack.c.h.b16 %v172
        %v301 = vunpack.c.l.b16 %v173
        %v302 = vunpack.c.h.b16 %v173
        %v303 = vunpack.c.l.b16 %v174
        %v304 = vunpack.c.h.b16 %v174
        %v305 = vunpack.c.l.b16 %v175
        %v306 = vunpack.c.h.b16 %v175
        %v307 = vunpack.c.l.b16 %v176
        %v308 = vunpack.c.h.b16 %v176
        %v309 = vunpack.c.l.b16 %v177
        %v310 = vunpack.c.h.b16 %v177
        %v311 = vunpack.c.l.b16 %v178
        %v312 = vunpack.c.h.b16 %v178
        %v313 = vunpack.c.l.b16 %v179
        %v314 = vunpack.c.h.b16 %v179
        %v315 = vunpack.c.l.b16 %v180
        %v316 = vunpack.c.h.b16 %v180
        %v317 = vunpack.c.l.b16 %v181
        %v318 = vunpack.c.h.b16 %v181
        %v319 = vunpack.c.l.b16 %v182
        %v320 = vunpack.c.h.b16 %v182
        %v321 = vunpack.c.l.b16 %v183
        %v322 = vunpack.c.h.b16 %v183
        %v323 = vunpack.c.l.b16 %v184
        %v324 = vunpack.c.h.b16 %v184
        %v325 = vunpack.c.l.b16 %v185
        %v326 = vunpack.c.h.b16 %v185
        %v327 = vunpack.c.l.b16 %v186
        %v328 = vunpack.c.h.b16 %v186
        %v329 = vunpack.c.l.b16 %v187
        %v330 = vunpack.c.h.b16 %v187
        %v331 = vunpack.c.l.b16 %v188
        %v332 = vunpack.c.h.b16 %v188
        %v333 = vpack.c.b16 %v269, %v237
        %v334 = vpack.c.b16 %v270, %v238
        %v335 = vpack.c.b16 %v271, %v239
        %v336 = vpack.c.b16 %v272, %v240
        %v337 = vpack.c.b16 %v273, %v241
        %v338 = vpack.c.b16 %v274, %v242
        %v339 = vpack.c.b16 %v275, %v243
        %v340 = vpack.c.b16 %v276, %v244
        %v341 = vpack.c.b16 %v277, %v245
        %v342 = vpack.c.b16 %v278, %v246
        %v343 = vpack.c.b16 %v279, %v247
        %v344 = vpack.c.b16 %v280, %v248
        %v345 = vpack.c.b16 %v281, %v249
        %v346 = vpack.c.b16 %v282, %v250
        %v347 = vpack.c.b16 %v283, %v251
        %v348 = vpack.c.b16 %v284, %v252
        %v349 = vpack.c.b16 %v285, %v253
        %v350 = vpack.c.b16 %v286, %v254
        %v351 = vpack.c.b16 %v287, %v255
        %v352 = vpack.c.b16 %v288, %v256
        %v353 = vpack.c.b16 %v289, %v257
        %v354 = vpack.c.b16 %v290, %v258
        %v355 = vpack.c.b16 %v291, %v259
        %v356 = vpack.c.b16 %v292, %v260
        %v357 = vpack.c.b16 %v293, %v261
        %v358 = vpack.c.b16 %v294, %v262
        %v359 = vpack.c.b16 %v295, %v263
        %v360 = vpack.c.b16 %v296, %v264
        %v361 = vpack.c.b16 %v297, %v265
        %v362 = vpack.c.b16 %v298, %v266
        %v363 = vpack.c.b16 %v299, %v267
        %v364 = vpack.c.b16 %v300, %v268
        %v365 = vpack.c.b16 %v301, %v301
        %v366 = vpack.c.b16 %v302, %v302
        %v367 = vpack.c.b16 %v303, %v303
        %v368 = vpack.c.b16 %v304, %v304
        %v369 = vpack.c.b16 %v305, %v305
        %v370 = vpack.c.b16 %v306, %v306
        %v371 = vpack.c.b16 %v307, %v307
        %v372 = vpack.c.b16 %v308, %v308
        %v373 = vpack.c.b16 %v309, %v309
        %v374 = vpack.c.b16 %v310, %v310
        %v375 = vpack.c.b16 %v311, %v311
        %v376 = vpack.c.b16 %v312, %v312
        %v377 = vpack.c.b16 %v313, %v313
        %v378 = vpack.c.b16 %v314, %v314
        %v379 = vpack.c.b16 %v315, %v315
        %v380 = vpack.c.b16 %v316, %v316
        %v381 = vpack.c.b16 %v317, %v317
        %v382 = vpack.c.b16 %v318, %v318
        %v383 = vpack.c.b16 %v319, %v319
        %v384 = vpack.c.b16 %v320, %v320
        %v385 = vpack.c.b16 %v321, %v321
        %v386 = vpack.c.b16 %v322, %v322
        %v387 = vpack.c.b16 %v323, %v323
        %v388 = vpack.c.b16 %v324, %v324
        %v389 = vpack.c.b16 %v325, %v325
        %v390 = vpack.c.b16 %v326, %v326
        %v391 = vpack.c.b16 %v327, %v327
        %v392 = vpack.c.b16 %v328, %v328
        %v393 = vpack.c.b16 %v329, %v329
        %v394 = vpack.c.b16 %v330, %v330
        %v395 = vpack.c.b16 %v331, %v331
        %v396 = vpack.c.b16 %v332, %v332
        %vm429 = vcmask 146432
        %v431 = vsel %vm429, %v140, 0
        %vm433 = vcmask 1040384
        %v435 = vsel %vm433, %v365, 0
        %v438 = vsel %vm433, %v366, 0
        %v441 = vsel %vm433, %v367, 0
        %v444 = vsel %vm433, %v368, 0
        %v447 = vsel %vm433, %v369, 0
        %v450 = vsel %vm433, %v370, 0
        %v453 = vsel %vm433, %v371, 0
        %v456 = vsel %vm433, %v372, 0
        %v459 = vsel %vm433, %v373, 0
        %v462 = vsel %vm433, %v374, 0
        %v465 = vsel %vm433, %v375, 0
        %v468 = vsel %vm433, %v376, 0
        %v471 = vsel %vm433, %v377, 0
        %v474 = vsel %vm433, %v378, 0
        %v477 = vsel %vm433, %v379, 0
        %v480 = vsel %vm433, %v380, 0
        %v483 = vsel %vm433, %v381, 0
        %v486 = vsel %vm433, %v382, 0
        %v489 = vsel %vm433, %v383, 0
        %v492 = vsel %vm433, %v384, 0
        %v495 = vsel %vm433, %v385, 0
        %v498 = vsel %vm433, %v386, 0
        %v501 = vsel %vm433, %v387, 0
        %v504 = vsel %vm433, %v388, 0
        %v507 = vsel %vm433, %v389, 0
        %v510 = vsel %vm433, %v390, 0
        %v513 = vsel %vm433, %v391, 0
        %v516 = vsel %vm433, %v392, 0
        %v519 = vsel %vm433, %v393, 0
        %v522 = vsel %vm433, %v394, 0
        %v525 = vsel %vm433, %v395, 0
        %v528 = vsel %vm433, %v396, 0
        %530 = vmatpush.bf16.msra.mxu0 0
        %531 = vmatpush.bf16.msra.mxu0 0
        %532 = vmatpush.bf16.msra.mxu0 0
        %533 = vmatpush.bf16.msra.mxu0 0
        %534 = vmatpush.bf16.msra.mxu0 0
        %535 = vmatpush.bf16.msra.mxu0 0
        %536 = vmatpush.bf16.msra.mxu0 %v435
        %537 = vmatpush.bf16.msra.mxu0 %v333
        %538 = vmatmul.bf16.gmra.mxu0 %v431
        %v539 = vpop.f32.mrf.mxu0
        %v540 = vadd.f32 0.0, %v539
        %v541 = vpop.f32.mrf.mxu0
        %542 = vdwg.mxu0
        %543 = vmatpush.bf16.msra.mxu0 0
        %544 = vmatpush.bf16.msra.mxu0 0
        %545 = vmatpush.bf16.msra.mxu0 0
        %546 = vmatpush.bf16.msra.mxu0 0
        %547 = vmatpush.bf16.msra.mxu0 0
        %548 = vmatpush.bf16.msra.mxu0 0
        %549 = vmatpush.bf16.msra.mxu0 %v438
        %550 = vmatpush.bf16.msra.mxu0 %v334
        %551 = vmatmul.bf16.gmra.mxu0 %v431
        %v552 = vpop.f32.mrf.mxu0
        %v553 = vadd.f32 0.0, %v552
        %v554 = vpop.f32.mrf.mxu0
        %555 = vdwg.mxu0
        %556 = vmatpush.bf16.msra.mxu0 0
        %557 = vmatpush.bf16.msra.mxu0 0
        %558 = vmatpush.bf16.msra.mxu0 0
        %559 = vmatpush.bf16.msra.mxu0 0
        %560 = vmatpush.bf16.msra.mxu0 0
        %561 = vmatpush.bf16.msra.mxu0 0
        %562 = vmatpush.bf16.msra.mxu0 %v441
        %563 = vmatpush.bf16.msra.mxu0 %v335
        %564 = vmatmul.bf16.gmra.mxu0 %v431
        %v565 = vpop.f32.mrf.mxu0
        %v566 = vadd.f32 0.0, %v565
        %v567 = vpop.f32.mrf.mxu0
        %568 = vdwg.mxu0
        %569 = vmatpush.bf16.msra.mxu0 0
        %570 = vmatpush.bf16.msra.mxu0 0
        %571 = vmatpush.bf16.msra.mxu0 0
        %572 = vmatpush.bf16.msra.mxu0 0
        %573 = vmatpush.bf16.msra.mxu0 0
        %574 = vmatpush.bf16.msra.mxu0 0
        %575 = vmatpush.bf16.msra.mxu0 %v444
        %576 = vmatpush.bf16.msra.mxu0 %v336
        %577 = vmatmul.bf16.gmra.mxu0 %v431
        %v578 = vpop.f32.mrf.mxu0
        %v579 = vadd.f32 0.0, %v578
        %v580 = vpop.f32.mrf.mxu0
        %581 = vdwg.mxu0
        %582 = vmatpush.bf16.msra.mxu0 0
        %583 = vmatpush.bf16.msra.mxu0 0
        %584 = vmatpush.bf16.msra.mxu0 0
        %585 = vmatpush.bf16.msra.mxu0 0
        %586 = vmatpush.bf16.msra.mxu0 0
        %587 = vmatpush.bf16.msra.mxu0 0
        %588 = vmatpush.bf16.msra.mxu0 %v447
        %589 = vmatpush.bf16.msra.mxu0 %v337
        %590 = vmatmul.bf16.gmra.mxu0 %v431
        %v591 = vpop.f32.mrf.mxu0
        %v592 = vadd.f32 0.0, %v591
        %v593 = vpop.f32.mrf.mxu0
        %594 = vdwg.mxu0
        %595 = vmatpush.bf16.msra.mxu0 0
        %596 = vmatpush.bf16.msra.mxu0 0
        %597 = vmatpush.bf16.msra.mxu0 0
        %598 = vmatpush.bf16.msra.mxu0 0
        %599 = vmatpush.bf16.msra.mxu0 0
        %600 = vmatpush.bf16.msra.mxu0 0
        %601 = vmatpush.bf16.msra.mxu0 %v450
        %602 = vmatpush.bf16.msra.mxu0 %v338
        %603 = vmatmul.bf16.gmra.mxu0 %v431
        %v604 = vpop.f32.mrf.mxu0
        %v605 = vadd.f32 0.0, %v604
        %v606 = vpop.f32.mrf.mxu0
        %607 = vdwg.mxu0
        %608 = vmatpush.bf16.msra.mxu0 0
        %609 = vmatpush.bf16.msra.mxu0 0
        %610 = vmatpush.bf16.msra.mxu0 0
        %611 = vmatpush.bf16.msra.mxu0 0
        %612 = vmatpush.bf16.msra.mxu0 0
        %613 = vmatpush.bf16.msra.mxu0 0
        %614 = vmatpush.bf16.msra.mxu0 %v453
        %615 = vmatpush.bf16.msra.mxu0 %v339
        %616 = vmatmul.bf16.gmra.mxu0 %v431
        %v617 = vpop.f32.mrf.mxu0
        %v618 = vadd.f32 0.0, %v617
        %v619 = vpop.f32.mrf.mxu0
        %620 = vdwg.mxu0
        %621 = vmatpush.bf16.msra.mxu0 0
        %622 = vmatpush.bf16.msra.mxu0 0
        %623 = vmatpush.bf16.msra.mxu0 0
        %624 = vmatpush.bf16.msra.mxu0 0
        %625 = vmatpush.bf16.msra.mxu0 0
        %626 = vmatpush.bf16.msra.mxu0 0
        %627 = vmatpush.bf16.msra.mxu0 %v456
        %628 = vmatpush.bf16.msra.mxu0 %v340
        %629 = vmatmul.bf16.gmra.mxu0 %v431
        %v630 = vpop.f32.mrf.mxu0
        %v631 = vadd.f32 0.0, %v630
        %v632 = vpop.f32.mrf.mxu0
        %633 = vdwg.mxu0
        %634 = vmatpush.bf16.msra.mxu0 0
        %635 = vmatpush.bf16.msra.mxu0 0
        %636 = vmatpush.bf16.msra.mxu0 0
        %637 = vmatpush.bf16.msra.mxu0 0
        %638 = vmatpush.bf16.msra.mxu0 0
        %639 = vmatpush.bf16.msra.mxu0 0
        %640 = vmatpush.bf16.msra.mxu0 %v459
        %641 = vmatpush.bf16.msra.mxu0 %v341
        %642 = vmatmul.bf16.gmra.mxu0 %v431
        %v643 = vpop.f32.mrf.mxu0
        %v644 = vadd.f32 0.0, %v643
        %v645 = vpop.f32.mrf.mxu0
        %646 = vdwg.mxu0
        %647 = vmatpush.bf16.msra.mxu0 0
        %648 = vmatpush.bf16.msra.mxu0 0
        %649 = vmatpush.bf16.msra.mxu0 0
        %650 = vmatpush.bf16.msra.mxu0 0
        %651 = vmatpush.bf16.msra.mxu0 0
        %652 = vmatpush.bf16.msra.mxu0 0
        %653 = vmatpush.bf16.msra.mxu0 %v462
        %654 = vmatpush.bf16.msra.mxu0 %v342
        %655 = vmatmul.bf16.gmra.mxu0 %v431
        %v656 = vpop.f32.mrf.mxu0
        %v657 = vadd.f32 0.0, %v656
        %v658 = vpop.f32.mrf.mxu0
        %659 = vdwg.mxu0
        %660 = vmatpush.bf16.msra.mxu0 0
        %661 = vmatpush.bf16.msra.mxu0 0
        %662 = vmatpush.bf16.msra.mxu0 0
        %663 = vmatpush.bf16.msra.mxu0 0
        %664 = vmatpush.bf16.msra.mxu0 0
        %665 = vmatpush.bf16.msra.mxu0 0
        %666 = vmatpush.bf16.msra.mxu0 %v465
        %667 = vmatpush.bf16.msra.mxu0 %v343
        %668 = vmatmul.bf16.gmra.mxu0 %v431
        %v669 = vpop.f32.mrf.mxu0
        %v670 = vadd.f32 0.0, %v669
        %v671 = vpop.f32.mrf.mxu0
        %672 = vdwg.mxu0
        %673 = vmatpush.bf16.msra.mxu0 0
        %674 = vmatpush.bf16.msra.mxu0 0
        %675 = vmatpush.bf16.msra.mxu0 0
        %676 = vmatpush.bf16.msra.mxu0 0
        %677 = vmatpush.bf16.msra.mxu0 0
        %678 = vmatpush.bf16.msra.mxu0 0
        %679 = vmatpush.bf16.msra.mxu0 %v468
        %680 = vmatpush.bf16.msra.mxu0 %v344
        %681 = vmatmul.bf16.gmra.mxu0 %v431
        %v682 = vpop.f32.mrf.mxu0
        %v683 = vadd.f32 0.0, %v682
        %v684 = vpop.f32.mrf.mxu0
        %685 = vdwg.mxu0
        %686 = vmatpush.bf16.msra.mxu0 0
        %687 = vmatpush.bf16.msra.mxu0 0
        %688 = vmatpush.bf16.msra.mxu0 0
        %689 = vmatpush.bf16.msra.mxu0 0
        %690 = vmatpush.bf16.msra.mxu0 0
        %691 = vmatpush.bf16.msra.mxu0 0
        %692 = vmatpush.bf16.msra.mxu0 %v471
        %693 = vmatpush.bf16.msra.mxu0 %v345
        %694 = vmatmul.bf16.gmra.mxu0 %v431
        %v695 = vpop.f32.mrf.mxu0
        %v696 = vadd.f32 0.0, %v695
        %v697 = vpop.f32.mrf.mxu0
        %698 = vdwg.mxu0
        %699 = vmatpush.bf16.msra.mxu0 0
        %700 = vmatpush.bf16.msra.mxu0 0
        %701 = vmatpush.bf16.msra.mxu0 0
        %702 = vmatpush.bf16.msra.mxu0 0
        %703 = vmatpush.bf16.msra.mxu0 0
        %704 = vmatpush.bf16.msra.mxu0 0
        %705 = vmatpush.bf16.msra.mxu0 %v474
        %706 = vmatpush.bf16.msra.mxu0 %v346
        %707 = vmatmul.bf16.gmra.mxu0 %v431
        %v708 = vpop.f32.mrf.mxu0
        %v709 = vadd.f32 0.0, %v708
        %v710 = vpop.f32.mrf.mxu0
        %711 = vdwg.mxu0
        %712 = vmatpush.bf16.msra.mxu0 0
        %713 = vmatpush.bf16.msra.mxu0 0
        %714 = vmatpush.bf16.msra.mxu0 0
        %715 = vmatpush.bf16.msra.mxu0 0
        %716 = vmatpush.bf16.msra.mxu0 0
        %717 = vmatpush.bf16.msra.mxu0 0
        %718 = vmatpush.bf16.msra.mxu0 %v477
        %719 = vmatpush.bf16.msra.mxu0 %v347
        %720 = vmatmul.bf16.gmra.mxu0 %v431
        %v721 = vpop.f32.mrf.mxu0
        %v722 = vadd.f32 0.0, %v721
        %v723 = vpop.f32.mrf.mxu0
        %724 = vdwg.mxu0
        %725 = vmatpush.bf16.msra.mxu0 0
        %726 = vmatpush.bf16.msra.mxu0 0
        %727 = vmatpush.bf16.msra.mxu0 0
        %728 = vmatpush.bf16.msra.mxu0 0
        %729 = vmatpush.bf16.msra.mxu0 0
        %730 = vmatpush.bf16.msra.mxu0 0
        %731 = vmatpush.bf16.msra.mxu0 %v480
        %732 = vmatpush.bf16.msra.mxu0 %v348
        %733 = vmatmul.bf16.gmra.mxu0 %v431
        %v734 = vpop.f32.mrf.mxu0
        %v735 = vadd.f32 0.0, %v734
        %v736 = vpop.f32.mrf.mxu0
        %737 = vdwg.mxu0
        %738 = vmatpush.bf16.msra.mxu0 0
        %739 = vmatpush.bf16.msra.mxu0 0
        %740 = vmatpush.bf16.msra.mxu0 0
        %741 = vmatpush.bf16.msra.mxu0 0
        %742 = vmatpush.bf16.msra.mxu0 0
        %743 = vmatpush.bf16.msra.mxu0 0
        %744 = vmatpush.bf16.msra.mxu0 %v483
        %745 = vmatpush.bf16.msra.mxu0 %v349
        %746 = vmatmul.bf16.gmra.mxu0 %v431
        %v747 = vpop.f32.mrf.mxu0
        %v748 = vadd.f32 0.0, %v747
        %v749 = vpop.f32.mrf.mxu0
        %750 = vdwg.mxu0
        %751 = vmatpush.bf16.msra.mxu0 0
        %752 = vmatpush.bf16.msra.mxu0 0
        %753 = vmatpush.bf16.msra.mxu0 0
        %754 = vmatpush.bf16.msra.mxu0 0
        %755 = vmatpush.bf16.msra.mxu0 0
        %756 = vmatpush.bf16.msra.mxu0 0
        %757 = vmatpush.bf16.msra.mxu0 %v486
        %758 = vmatpush.bf16.msra.mxu0 %v350
        %759 = vmatmul.bf16.gmra.mxu0 %v431
        %v760 = vpop.f32.mrf.mxu0
        %v761 = vadd.f32 0.0, %v760
        %v762 = vpop.f32.mrf.mxu0
        %763 = vdwg.mxu0
        %764 = vmatpush.bf16.msra.mxu0 0
        %765 = vmatpush.bf16.msra.mxu0 0
        %766 = vmatpush.bf16.msra.mxu0 0
        %767 = vmatpush.bf16.msra.mxu0 0
        %768 = vmatpush.bf16.msra.mxu0 0
        %769 = vmatpush.bf16.msra.mxu0 0
        %770 = vmatpush.bf16.msra.mxu0 %v489
        %771 = vmatpush.bf16.msra.mxu0 %v351
        %772 = vmatmul.bf16.gmra.mxu0 %v431
        %v773 = vpop.f32.mrf.mxu0
        %v774 = vadd.f32 0.0, %v773
        %v775 = vpop.f32.mrf.mxu0
        %776 = vdwg.mxu0
        %777 = vmatpush.bf16.msra.mxu0 0
        %778 = vmatpush.bf16.msra.mxu0 0
        %779 = vmatpush.bf16.msra.mxu0 0
        %780 = vmatpush.bf16.msra.mxu0 0
        %781 = vmatpush.bf16.msra.mxu0 0
        %782 = vmatpush.bf16.msra.mxu0 0
        %783 = vmatpush.bf16.msra.mxu0 %v492
        %784 = vmatpush.bf16.msra.mxu0 %v352
        %785 = vmatmul.bf16.gmra.mxu0 %v431
        %v786 = vpop.f32.mrf.mxu0
        %v787 = vadd.f32 0.0, %v786
        %v788 = vpop.f32.mrf.mxu0
        %789 = vdwg.mxu0
        %790 = vmatpush.bf16.msra.mxu0 0
        %791 = vmatpush.bf16.msra.mxu0 0
        %792 = vmatpush.bf16.msra.mxu0 0
        %793 = vmatpush.bf16.msra.mxu0 0
        %794 = vmatpush.bf16.msra.mxu0 0
        %795 = vmatpush.bf16.msra.mxu0 0
        %796 = vmatpush.bf16.msra.mxu0 %v495
        %797 = vmatpush.bf16.msra.mxu0 %v353
        %798 = vmatmul.bf16.gmra.mxu0 %v431
        %v799 = vpop.f32.mrf.mxu0
        %v800 = vadd.f32 0.0, %v799
        %v801 = vpop.f32.mrf.mxu0
        %802 = vdwg.mxu0
        %803 = vmatpush.bf16.msra.mxu0 0
        %804 = vmatpush.bf16.msra.mxu0 0
        %805 = vmatpush.bf16.msra.mxu0 0
        %806 = vmatpush.bf16.msra.mxu0 0
        %807 = vmatpush.bf16.msra.mxu0 0
        %808 = vmatpush.bf16.msra.mxu0 0
        %809 = vmatpush.bf16.msra.mxu0 %v498
        %810 = vmatpush.bf16.msra.mxu0 %v354
        %811 = vmatmul.bf16.gmra.mxu0 %v431
        %v812 = vpop.f32.mrf.mxu0
        %v813 = vadd.f32 0.0, %v812
        %v814 = vpop.f32.mrf.mxu0
        %815 = vdwg.mxu0
        %816 = vmatpush.bf16.msra.mxu0 0
        %817 = vmatpush.bf16.msra.mxu0 0
        %818 = vmatpush.bf16.msra.mxu0 0
        %819 = vmatpush.bf16.msra.mxu0 0
        %820 = vmatpush.bf16.msra.mxu0 0
        %821 = vmatpush.bf16.msra.mxu0 0
        %822 = vmatpush.bf16.msra.mxu0 %v501
        %823 = vmatpush.bf16.msra.mxu0 %v355
        %824 = vmatmul.bf16.gmra.mxu0 %v431
        %v825 = vpop.f32.mrf.mxu0
        %v826 = vadd.f32 0.0, %v825
        %v827 = vpop.f32.mrf.mxu0
        %828 = vdwg.mxu0
        %829 = vmatpush.bf16.msra.mxu0 0
        %830 = vmatpush.bf16.msra.mxu0 0
        %831 = vmatpush.bf16.msra.mxu0 0
        %832 = vmatpush.bf16.msra.mxu0 0
        %833 = vmatpush.bf16.msra.mxu0 0
        %834 = vmatpush.bf16.msra.mxu0 0
        %835 = vmatpush.bf16.msra.mxu0 %v504
        %836 = vmatpush.bf16.msra.mxu0 %v356
        %837 = vmatmul.bf16.gmra.mxu0 %v431
        %v838 = vpop.f32.mrf.mxu0
        %v839 = vadd.f32 0.0, %v838
        %v840 = vpop.f32.mrf.mxu0
        %841 = vdwg.mxu0
        %842 = vmatpush.bf16.msra.mxu0 0
        %843 = vmatpush.bf16.msra.mxu0 0
        %844 = vmatpush.bf16.msra.mxu0 0
        %845 = vmatpush.bf16.msra.mxu0 0
        %846 = vmatpush.bf16.msra.mxu0 0
        %847 = vmatpush.bf16.msra.mxu0 0
        %848 = vmatpush.bf16.msra.mxu0 %v507
        %849 = vmatpush.bf16.msra.mxu0 %v357
        %850 = vmatmul.bf16.gmra.mxu0 %v431
        %v851 = vpop.f32.mrf.mxu0
        %v852 = vadd.f32 0.0, %v851
        %v853 = vpop.f32.mrf.mxu0
        %854 = vdwg.mxu0
        %855 = vmatpush.bf16.msra.mxu0 0
        %856 = vmatpush.bf16.msra.mxu0 0
        %857 = vmatpush.bf16.msra.mxu0 0
        %858 = vmatpush.bf16.msra.mxu0 0
        %859 = vmatpush.bf16.msra.mxu0 0
        %860 = vmatpush.bf16.msra.mxu0 0
        %861 = vmatpush.bf16.msra.mxu0 %v510
        %862 = vmatpush.bf16.msra.mxu0 %v358
        %863 = vmatmul.bf16.gmra.mxu0 %v431
        %v864 = vpop.f32.mrf.mxu0
        %v865 = vadd.f32 0.0, %v864
        %v866 = vpop.f32.mrf.mxu0
        %867 = vdwg.mxu0
        %868 = vmatpush.bf16.msra.mxu0 0
        %869 = vmatpush.bf16.msra.mxu0 0
        %870 = vmatpush.bf16.msra.mxu0 0
        %871 = vmatpush.bf16.msra.mxu0 0
        %872 = vmatpush.bf16.msra.mxu0 0
        %873 = vmatpush.bf16.msra.mxu0 0
        %874 = vmatpush.bf16.msra.mxu0 %v513
        %875 = vmatpush.bf16.msra.mxu0 %v359
        %876 = vmatmul.bf16.gmra.mxu0 %v431
        %v877 = vpop.f32.mrf.mxu0
        %v878 = vadd.f32 0.0, %v877
        %v879 = vpop.f32.mrf.mxu0
        %880 = vdwg.mxu0
        %881 = vmatpush.bf16.msra.mxu0 0
        %882 = vmatpush.bf16.msra.mxu0 0
        %883 = vmatpush.bf16.msra.mxu0 0
        %884 = vmatpush.bf16.msra.mxu0 0
        %885 = vmatpush.bf16.msra.mxu0 0
        %886 = vmatpush.bf16.msra.mxu0 0
        %887 = vmatpush.bf16.msra.mxu0 %v516
        %888 = vmatpush.bf16.msra.mxu0 %v360
        %889 = vmatmul.bf16.gmra.mxu0 %v431
        %v890 = vpop.f32.mrf.mxu0
        %v891 = vadd.f32 0.0, %v890
        %v892 = vpop.f32.mrf.mxu0
        %893 = vdwg.mxu0
        %894 = vmatpush.bf16.msra.mxu0 0
        %895 = vmatpush.bf16.msra.mxu0 0
        %896 = vmatpush.bf16.msra.mxu0 0
        %897 = vmatpush.bf16.msra.mxu0 0
        %898 = vmatpush.bf16.msra.mxu0 0
        %899 = vmatpush.bf16.msra.mxu0 0
        %900 = vmatpush.bf16.msra.mxu0 %v519
        %901 = vmatpush.bf16.msra.mxu0 %v361
        %902 = vmatmul.bf16.gmra.mxu0 %v431
        %v903 = vpop.f32.mrf.mxu0
        %v904 = vadd.f32 0.0, %v903
        %v905 = vpop.f32.mrf.mxu0
        %906 = vdwg.mxu0
        %907 = vmatpush.bf16.msra.mxu0 0
        %908 = vmatpush.bf16.msra.mxu0 0
        %909 = vmatpush.bf16.msra.mxu0 0
        %910 = vmatpush.bf16.msra.mxu0 0
        %911 = vmatpush.bf16.msra.mxu0 0
        %912 = vmatpush.bf16.msra.mxu0 0
        %913 = vmatpush.bf16.msra.mxu0 %v522
        %914 = vmatpush.bf16.msra.mxu0 %v362
        %915 = vmatmul.bf16.gmra.mxu0 %v431
        %v916 = vpop.f32.mrf.mxu0
        %v917 = vadd.f32 0.0, %v916
        %v918 = vpop.f32.mrf.mxu0
        %919 = vdwg.mxu0
        %920 = vmatpush.bf16.msra.mxu0 0
        %921 = vmatpush.bf16.msra.mxu0 0
        %922 = vmatpush.bf16.msra.mxu0 0
        %923 = vmatpush.bf16.msra.mxu0 0
        %924 = vmatpush.bf16.msra.mxu0 0
        %925 = vmatpush.bf16.msra.mxu0 0
        %926 = vmatpush.bf16.msra.mxu0 %v525
        %927 = vmatpush.bf16.msra.mxu0 %v363
        %928 = vmatmul.bf16.gmra.mxu0 %v431
        %v929 = vpop.f32.mrf.mxu0
        %v930 = vadd.f32 0.0, %v929
        %v931 = vpop.f32.mrf.mxu0
        %932 = vdwg.mxu0
        %933 = vmatpush.bf16.msra.mxu0 0
        %934 = vmatpush.bf16.msra.mxu0 0
        %935 = vmatpush.bf16.msra.mxu0 0
        %936 = vmatpush.bf16.msra.mxu0 0
        %937 = vmatpush.bf16.msra.mxu0 0
        %938 = vmatpush.bf16.msra.mxu0 0
        %939 = vmatpush.bf16.msra.mxu0 %v528
        %940 = vmatpush.bf16.msra.mxu0 %v364
        %941 = vmatmul.bf16.gmra.mxu0 %v431
        %v942 = vpop.f32.mrf.mxu0
        %v943 = vadd.f32 0.0, %v942
        %v944 = vpop.f32.mrf.mxu0
        %945 = vdwg.mxu0
        %946 = vst [vmem:[#allocation2] sm:$0xff] %v540
        %947 = vst [vmem:[#allocation2 + $0x8] sm:$0xff] %v553
        %948 = vst [vmem:[#allocation2 + $0x10] sm:$0xff] %v566
        %949 = vst [vmem:[#allocation2 + $0x18] sm:$0xff] %v579
        %950 = vst [vmem:[#allocation2 + $0x20] sm:$0xff] %v592
        %951 = vst [vmem:[#allocation2 + $0x28] sm:$0xff] %v605
        %952 = vst [vmem:[#allocation2 + $0x30] sm:$0xff] %v618
        %953 = vst [vmem:[#allocation2 + $0x38] sm:$0xff] %v631
        %954 = vst [vmem:[#allocation2 + $0x40] sm:$0xff] %v644
        %955 = vst [vmem:[#allocation2 + $0x48] sm:$0xff] %v657
        %956 = vst [vmem:[#allocation2 + $0x50] sm:$0xff] %v670
        %957 = vst [vmem:[#allocation2 + $0x58] sm:$0xff] %v683
        %958 = vst [vmem:[#allocation2 + $0x60] sm:$0xff] %v696
        %959 = vst [vmem:[#allocation2 + $0x68] sm:$0xff] %v709
        %960 = vst [vmem:[#allocation2 + $0x70] sm:$0xff] %v722
        %961 = vst [vmem:[#allocation2 + $0x78] sm:$0xff] %v735
        %962 = vst [vmem:[#allocation2 + $0x80] sm:$0xff] %v748
        %963 = vst [vmem:[#allocation2 + $0x88] sm:$0xff] %v761
        %964 = vst [vmem:[#allocation2 + $0x90] sm:$0xff] %v774
        %965 = vst [vmem:[#allocation2 + $0x98] sm:$0xff] %v787
        %966 = vst [vmem:[#allocation2 + $0xa0] sm:$0xff] %v800
        %967 = vst [vmem:[#allocation2 + $0xa8] sm:$0xff] %v813
        %968 = vst [vmem:[#allocation2 + $0xb0] sm:$0xff] %v826
        %969 = vst [vmem:[#allocation2 + $0xb8] sm:$0xff] %v839
        %970 = vst [vmem:[#allocation2 + $0xc0] sm:$0xff] %v852
        %971 = vst [vmem:[#allocation2 + $0xc8] sm:$0xff] %v865
        %972 = vst [vmem:[#allocation2 + $0xd0] sm:$0xff] %v878
        %973 = vst [vmem:[#allocation2 + $0xd8] sm:$0xff] %v891
        %974 = vst [vmem:[#allocation2 + $0xe0] sm:$0xff] %v904
        %975 = vst [vmem:[#allocation2 + $0xe8] sm:$0xff] %v917
        %976 = vst [vmem:[#allocation2 + $0xf0] sm:$0xff] %v930
        %977 = vst [vmem:[#allocation2 + $0xf8] sm:$0xff] %v943
        %v978 = vld [vmem:[#allocation2] sm:$0xff]
        %v979 = vld [vmem:[#allocation2 + $0x8] sm:$0xff]
        %v980 = vld [vmem:[#allocation2 + $0x10] sm:$0xff]
        %v981 = vld [vmem:[#allocation2 + $0x18] sm:$0xff]
        %v982 = vld [vmem:[#allocation2 + $0x20] sm:$0xff]
        %v983 = vld [vmem:[#allocation2 + $0x28] sm:$0xff]
        %v984 = vld [vmem:[#allocation2 + $0x30] sm:$0xff]
        %v985 = vld [vmem:[#allocation2 + $0x38] sm:$0xff]
        %v986 = vld [vmem:[#allocation2 + $0x40] sm:$0xff]
        %v987 = vld [vmem:[#allocation2 + $0x48] sm:$0xff]
        %v988 = vld [vmem:[#allocation2 + $0x50] sm:$0xff]
        %v989 = vld [vmem:[#allocation2 + $0x58] sm:$0xff]
        %v990 = vld [vmem:[#allocation2 + $0x60] sm:$0xff]
        %v991 = vld [vmem:[#allocation2 + $0x68] sm:$0xff]
        %v992 = vld [vmem:[#allocation2 + $0x70] sm:$0xff]
        %v993 = vld [vmem:[#allocation2 + $0x78] sm:$0xff]
        %v994 = vadd.f32 %v978, 0.0
        %v995 = vadd.f32 %v979, 0.0
        %v996 = vadd.f32 %v980, 0.0
        %v997 = vadd.f32 %v981, 0.0
        %v998 = vadd.f32 %v982, 0.0
        %v999 = vadd.f32 %v983, 0.0
        %v1000 = vadd.f32 %v984, 0.0
        %v1001 = vadd.f32 %v985, 0.0
        %v1002 = vadd.f32 %v986, 0.0
        %v1003 = vadd.f32 %v987, 0.0
        %v1004 = vadd.f32 %v988, 0.0
        %v1005 = vadd.f32 %v989, 0.0
        %v1006 = vadd.f32 %v990, 0.0
        %v1007 = vadd.f32 %v991, 0.0
        %v1008 = vadd.f32 %v992, 0.0
        %v1009 = vadd.f32 %v993, 0.0
        %v1010 = vmax.f32 %v994, 0.0
        %v1011 = vmax.f32 %v995, 0.0
        %v1012 = vmax.f32 %v996, 0.0
        %v1013 = vmax.f32 %v997, 0.0
        %v1014 = vmax.f32 %v998, 0.0
        %v1015 = vmax.f32 %v999, 0.0
        %v1016 = vmax.f32 %v1000, 0.0
        %v1017 = vmax.f32 %v1001, 0.0
        %v1018 = vmax.f32 %v1002, 0.0
        %v1019 = vmax.f32 %v1003, 0.0
        %v1020 = vmax.f32 %v1004, 0.0
        %v1021 = vmax.f32 %v1005, 0.0
        %v1022 = vmax.f32 %v1006, 0.0
        %v1023 = vmax.f32 %v1007, 0.0
        %v1024 = vmax.f32 %v1008, 0.0
        %v1025 = vmax.f32 %v1009, 0.0
        %v1026 = vfloor.f32 %v1010
        %v1027 = vfloor.f32 %v1011
        %v1028 = vfloor.f32 %v1012
        %v1029 = vfloor.f32 %v1013
        %v1030 = vfloor.f32 %v1014
        %v1031 = vfloor.f32 %v1015
        %v1032 = vfloor.f32 %v1016
        %v1033 = vfloor.f32 %v1017
        %v1034 = vfloor.f32 %v1018
        %v1035 = vfloor.f32 %v1019
        %v1036 = vfloor.f32 %v1020
        %v1037 = vfloor.f32 %v1021
        %v1038 = vfloor.f32 %v1022
        %v1039 = vfloor.f32 %v1023
        %v1040 = vfloor.f32 %v1024
        %v1041 = vfloor.f32 %v1025
        %1042 = vst [vmem:[%s132] sm:$0xff] %v1026
        %1043 = vst [vmem:[%s132 + $0x8] sm:$0xff] %v1027
        %1044 = vst [vmem:[%s132 + $0x10] sm:$0xff] %v1028
        %1045 = vst [vmem:[%s132 + $0x18] sm:$0xff] %v1029
        %1046 = vst [vmem:[%s132 + $0x20] sm:$0xff] %v1030
        %1047 = vst [vmem:[%s132 + $0x28] sm:$0xff] %v1031
        %1048 = vst [vmem:[%s132 + $0x30] sm:$0xff] %v1032
        %1049 = vst [vmem:[%s132 + $0x38] sm:$0xff] %v1033
        %1050 = vst [vmem:[%s132 + $0x40] sm:$0xff] %v1034
        %1051 = vst [vmem:[%s132 + $0x48] sm:$0xff] %v1035
        %1052 = vst [vmem:[%s132 + $0x50] sm:$0xff] %v1036
        %1053 = vst [vmem:[%s132 + $0x58] sm:$0xff] %v1037
        %1054 = vst [vmem:[%s132 + $0x60] sm:$0xff] %v1038
        %1055 = vst [vmem:[%s132 + $0x68] sm:$0xff] %v1039
        %1056 = vst [vmem:[%s132 + $0x70] sm:$0xff] %v1040
        %1057 = vst [vmem:[%s132 + $0x78] sm:$0xff] %v1041
        %v1058 = vsub.f32 %v994, %v1026
        %v1059 = vsub.f32 %v995, %v1027
        %v1060 = vsub.f32 %v996, %v1028
        %v1061 = vsub.f32 %v997, %v1029
        %v1062 = vsub.f32 %v998, %v1030
        %v1063 = vsub.f32 %v999, %v1031
        %v1064 = vsub.f32 %v1000, %v1032
        %v1065 = vsub.f32 %v1001, %v1033
        %v1066 = vsub.f32 %v1002, %v1034
        %v1067 = vsub.f32 %v1003, %v1035
        %v1068 = vsub.f32 %v1004, %v1036
        %v1069 = vsub.f32 %v1005, %v1037
        %v1070 = vsub.f32 %v1006, %v1038
        %v1071 = vsub.f32 %v1007, %v1039
        %v1072 = vsub.f32 %v1008, %v1040
        %v1073 = vsub.f32 %v1009, %v1041
        %v1074 = vmax.f32 %v1058, -1.0
        %v1075 = vmax.f32 %v1059, -1.0
        %v1076 = vmax.f32 %v1060, -1.0
        %v1077 = vmax.f32 %v1061, -1.0
        %v1078 = vmax.f32 %v1062, -1.0
        %v1079 = vmax.f32 %v1063, -1.0
        %v1080 = vmax.f32 %v1064, -1.0
        %v1081 = vmax.f32 %v1065, -1.0
        %v1082 = vmax.f32 %v1066, -1.0
        %v1083 = vmax.f32 %v1067, -1.0
        %v1084 = vmax.f32 %v1068, -1.0
        %v1085 = vmax.f32 %v1069, -1.0
        %v1086 = vmax.f32 %v1070, -1.0
        %v1087 = vmax.f32 %v1071, -1.0
        %v1088 = vmax.f32 %v1072, -1.0
        %v1089 = vmax.f32 %v1073, -1.0
        %v1090 = vld [vmem:[#allocation2 + $0x80] sm:$0xff]
        %v1091 = vld [vmem:[#allocation2 + $0x88] sm:$0xff]
        %v1092 = vld [vmem:[#allocation2 + $0x90] sm:$0xff]
        %v1093 = vld [vmem:[#allocation2 + $0x98] sm:$0xff]
        %v1094 = vld [vmem:[#allocation2 + $0xa0] sm:$0xff]
        %v1095 = vld [vmem:[#allocation2 + $0xa8] sm:$0xff]
        %v1096 = vld [vmem:[#allocation2 + $0xb0] sm:$0xff]
        %v1097 = vld [vmem:[#allocation2 + $0xb8] sm:$0xff]
        %v1098 = vld [vmem:[#allocation2 + $0xc0] sm:$0xff]
        %v1099 = vld [vmem:[#allocation2 + $0xc8] sm:$0xff]
        %v1100 = vld [vmem:[#allocation2 + $0xd0] sm:$0xff]
        %v1101 = vld [vmem:[#allocation2 + $0xd8] sm:$0xff]
        %v1102 = vld [vmem:[#allocation2 + $0xe0] sm:$0xff]
        %v1103 = vld [vmem:[#allocation2 + $0xe8] sm:$0xff]
        %v1104 = vld [vmem:[#allocation2 + $0xf0] sm:$0xff]
        %v1105 = vld [vmem:[#allocation2 + $0xf8] sm:$0xff]
        %v1106 = vadd.f32 %v1074, %v1090
        %v1107 = vadd.f32 %v1075, %v1091
        %v1108 = vadd.f32 %v1076, %v1092
        %v1109 = vadd.f32 %v1077, %v1093
        %v1110 = vadd.f32 %v1078, %v1094
        %v1111 = vadd.f32 %v1079, %v1095
        %v1112 = vadd.f32 %v1080, %v1096
        %v1113 = vadd.f32 %v1081, %v1097
        %v1114 = vadd.f32 %v1082, %v1098
        %v1115 = vadd.f32 %v1083, %v1099
        %v1116 = vadd.f32 %v1084, %v1100
        %v1117 = vadd.f32 %v1085, %v1101
        %v1118 = vadd.f32 %v1086, %v1102
        %v1119 = vadd.f32 %v1087, %v1103
        %v1120 = vadd.f32 %v1088, %v1104
        %v1121 = vadd.f32 %v1089, %v1105
        %v1122 = vmax.f32 %v1106, 0.0
        %v1123 = vmax.f32 %v1107, 0.0
        %v1124 = vmax.f32 %v1108, 0.0
        %v1125 = vmax.f32 %v1109, 0.0
        %v1126 = vmax.f32 %v1110, 0.0
        %v1127 = vmax.f32 %v1111, 0.0
        %v1128 = vmax.f32 %v1112, 0.0
        %v1129 = vmax.f32 %v1113, 0.0
        %v1130 = vmax.f32 %v1114, 0.0
        %v1131 = vmax.f32 %v1115, 0.0
        %v1132 = vmax.f32 %v1116, 0.0
        %v1133 = vmax.f32 %v1117, 0.0
        %v1134 = vmax.f32 %v1118, 0.0
        %v1135 = vmax.f32 %v1119, 0.0
        %v1136 = vmax.f32 %v1120, 0.0
        %v1137 = vmax.f32 %v1121, 0.0
        %v1138 = vfloor.f32 %v1122
        %v1139 = vfloor.f32 %v1123
        %v1140 = vfloor.f32 %v1124
        %v1141 = vfloor.f32 %v1125
        %v1142 = vfloor.f32 %v1126
        %v1143 = vfloor.f32 %v1127
        %v1144 = vfloor.f32 %v1128
        %v1145 = vfloor.f32 %v1129
        %v1146 = vfloor.f32 %v1130
        %v1147 = vfloor.f32 %v1131
        %v1148 = vfloor.f32 %v1132
        %v1149 = vfloor.f32 %v1133
        %v1150 = vfloor.f32 %v1134
        %v1151 = vfloor.f32 %v1135
        %v1152 = vfloor.f32 %v1136
        %v1153 = vfloor.f32 %v1137
        %s1154 = scalar_lea.vmem %s132, 128 [#allocation3]
        %1155 = vst [vmem:[%s1154] sm:$0xff] %v1138
        %1156 = vst [vmem:[%s1154 + $0x8] sm:$0xff] %v1139
        %1157 = vst [vmem:[%s1154 + $0x10] sm:$0xff] %v1140
        %1158 = vst [vmem:[%s1154 + $0x18] sm:$0xff] %v1141
        %1159 = vst [vmem:[%s1154 + $0x20] sm:$0xff] %v1142
        %1160 = vst [vmem:[%s1154 + $0x28] sm:$0xff] %v1143
        %1161 = vst [vmem:[%s1154 + $0x30] sm:$0xff] %v1144
        %1162 = vst [vmem:[%s1154 + $0x38] sm:$0xff] %v1145
        %1163 = vst [vmem:[%s1154 + $0x40] sm:$0xff] %v1146
        %1164 = vst [vmem:[%s1154 + $0x48] sm:$0xff] %v1147
        %1165 = vst [vmem:[%s1154 + $0x50] sm:$0xff] %v1148
        %1166 = vst [vmem:[%s1154 + $0x58] sm:$0xff] %v1149
        %1167 = vst [vmem:[%s1154 + $0x60] sm:$0xff] %v1150
        %1168 = vst [vmem:[%s1154 + $0x68] sm:$0xff] %v1151
        %1169 = vst [vmem:[%s1154 + $0x70] sm:$0xff] %v1152
        %1170 = vst [vmem:[%s1154 + $0x78] sm:$0xff] %v1153
        %s1171 = sand.u32 %s68, 1
        %s1172 = sand.u32 %s68, 1
        %s1173 = smul.addr %s1172, 256
        %s1174 = scalar_lea.vmem [#allocation3], %s1173
        // Predicated region
        $region29: #{snn_bptt_forward.3} parent=27 // pred_check
          %p1175 = pneg %p78
        $region30: #{snn_bptt_forward.3} parent=27 // pred_check_branch
          %1177 = sbr.rel (%p1175) target = $region32
        $region31: #{snn_bptt_forward.3} parent=27 // pred_region
          %s1178 = smul.u32 16, %s13
          %s1179 = smul.addr %s1178, 8
          %s1180 = scalar_lea.vmem %s2, %s1179
          // Predicated region
          $region33: #{snn_bptt_forward.3} parent=31 // pred_check
            _
          $region34: #{snn_bptt_forward.3} parent=31 // pred_check_branch
            %1182 = sbr.rel (0) target = $region36
          $region35: #{snn_bptt_forward.3} parent=31 // pred_region
            // Predicated region
            $region37: #{snn_bptt_forward.3} parent=35 // pred_check
              _
            $region38: #{snn_bptt_forward.3} parent=35 // pred_check_branch
              %1184 = sbr.rel (0) target = $region40
            $region39: #{snn_bptt_forward.3} parent=35 // pred_region
              loop: start=0, step=1, limit=1
              $region41: #{snn_bptt_forward.3} parent=39 // loop_pre_header
                _
              $region42: #{snn_bptt_forward.3} parent=39 // loop_header
                %s1186 = sphi 0, %s1190
                %p1187 = scmp.ge.s32.totalorder %s1186, 1
                %s1191 = sphi %s1174, %s1174
                %s1192 = sphi %s1180, %s1180
              $region43: #{snn_bptt_forward.3} parent=39 // loop_header_branch
                %1189 = sbr.rel (%p1187) target = $region47
              $region44: #{snn_bptt_forward.3} parent=39 // loop_body
                %v1193 = vld [vmem:[%s1191] sm:$0xff]
                %1194 = vst [vmem:[%s1192] sm:$0xff] %v1193
                %v1195 = vld [vmem:[%s1191 + $0x8] sm:$0xff]
                %1196 = vst [vmem:[%s1192 + $0x8] sm:$0xff] %v1195
                %v1197 = vld [vmem:[%s1191 + $0x10] sm:$0xff]
                %1198 = vst [vmem:[%s1192 + $0x10] sm:$0xff] %v1197
                %v1199 = vld [vmem:[%s1191 + $0x18] sm:$0xff]
                %1200 = vst [vmem:[%s1192 + $0x18] sm:$0xff] %v1199
                %v1201 = vld [vmem:[%s1191 + $0x20] sm:$0xff]
                %1202 = vst [vmem:[%s1192 + $0x20] sm:$0xff] %v1201
                %v1203 = vld [vmem:[%s1191 + $0x28] sm:$0xff]
                %1204 = vst [vmem:[%s1192 + $0x28] sm:$0xff] %v1203
                %v1205 = vld [vmem:[%s1191 + $0x30] sm:$0xff]
                %1206 = vst [vmem:[%s1192 + $0x30] sm:$0xff] %v1205
                %v1207 = vld [vmem:[%s1191 + $0x38] sm:$0xff]
                %1208 = vst [vmem:[%s1192 + $0x38] sm:$0xff] %v1207
                %v1209 = vld [vmem:[%s1191 + $0x40] sm:$0xff]
                %1210 = vst [vmem:[%s1192 + $0x40] sm:$0xff] %v1209
                %v1211 = vld [vmem:[%s1191 + $0x48] sm:$0xff]
                %1212 = vst [vmem:[%s1192 + $0x48] sm:$0xff] %v1211
                %v1213 = vld [vmem:[%s1191 + $0x50] sm:$0xff]
                %1214 = vst [vmem:[%s1192 + $0x50] sm:$0xff] %v1213
                %v1215 = vld [vmem:[%s1191 + $0x58] sm:$0xff]
                %1216 = vst [vmem:[%s1192 + $0x58] sm:$0xff] %v1215
                %v1217 = vld [vmem:[%s1191 + $0x60] sm:$0xff]
                %1218 = vst [vmem:[%s1192 + $0x60] sm:$0xff] %v1217
                %v1219 = vld [vmem:[%s1191 + $0x68] sm:$0xff]
                %1220 = vst [vmem:[%s1192 + $0x68] sm:$0xff] %v1219
                %v1221 = vld [vmem:[%s1191 + $0x70] sm:$0xff]
                %1222 = vst [vmem:[%s1192 + $0x70] sm:$0xff] %v1221
                %v1223 = vld [vmem:[%s1191 + $0x78] sm:$0xff]
                %1224 = vst [vmem:[%s1192 + $0x78] sm:$0xff] %v1223
                %v1225 = vld [vmem:[%s1191 + $0x80] sm:$0xff]
                %1226 = vst [vmem:[%s1192 + $0x100] sm:$0xff] %v1225
                %v1227 = vld [vmem:[%s1191 + $0x88] sm:$0xff]
                %1228 = vst [vmem:[%s1192 + $0x108] sm:$0xff] %v1227
                %v1229 = vld [vmem:[%s1191 + $0x90] sm:$0xff]
                %1230 = vst [vmem:[%s1192 + $0x110] sm:$0xff] %v1229
                %v1231 = vld [vmem:[%s1191 + $0x98] sm:$0xff]
                %1232 = vst [vmem:[%s1192 + $0x118] sm:$0xff] %v1231
                %v1233 = vld [vmem:[%s1191 + $0xa0] sm:$0xff]
                %1234 = vst [vmem:[%s1192 + $0x120] sm:$0xff] %v1233
                %v1235 = vld [vmem:[%s1191 + $0xa8] sm:$0xff]
                %1236 = vst [vmem:[%s1192 + $0x128] sm:$0xff] %v1235
                %v1237 = vld [vmem:[%s1191 + $0xb0] sm:$0xff]
                %1238 = vst [vmem:[%s1192 + $0x130] sm:$0xff] %v1237
                %v1239 = vld [vmem:[%s1191 + $0xb8] sm:$0xff]
                %1240 = vst [vmem:[%s1192 + $0x138] sm:$0xff] %v1239
                %v1241 = vld [vmem:[%s1191 + $0xc0] sm:$0xff]
                %1242 = vst [vmem:[%s1192 + $0x140] sm:$0xff] %v1241
                %v1243 = vld [vmem:[%s1191 + $0xc8] sm:$0xff]
                %1244 = vst [vmem:[%s1192 + $0x148] sm:$0xff] %v1243
                %v1245 = vld [vmem:[%s1191 + $0xd0] sm:$0xff]
                %1246 = vst [vmem:[%s1192 + $0x150] sm:$0xff] %v1245
                %v1247 = vld [vmem:[%s1191 + $0xd8] sm:$0xff]
                %1248 = vst [vmem:[%s1192 + $0x158] sm:$0xff] %v1247
                %v1249 = vld [vmem:[%s1191 + $0xe0] sm:$0xff]
                %1250 = vst [vmem:[%s1192 + $0x160] sm:$0xff] %v1249
                %v1251 = vld [vmem:[%s1191 + $0xe8] sm:$0xff]
                %1252 = vst [vmem:[%s1192 + $0x168] sm:$0xff] %v1251
                %v1253 = vld [vmem:[%s1191 + $0xf0] sm:$0xff]
                %1254 = vst [vmem:[%s1192 + $0x170] sm:$0xff] %v1253
                %v1255 = vld [vmem:[%s1191 + $0xf8] sm:$0xff]
                %1256 = vst [vmem:[%s1192 + $0x178] sm:$0xff] %v1255
              $region45: #{snn_bptt_forward.3} parent=39 // loop_footer
                %s1190 = sadd.s32 1, %s1186
              $region46: #{snn_bptt_forward.3} parent=39 // loop_footer_branch
                %1185 = sbr.rel target = $region42
              $region47: #{snn_bptt_forward.3} parent=39 // loop_exit
                _
            $region40: #{snn_bptt_forward.3} parent=35 // pred_fallthru
              _
            // Predicated region
            $region48: #{snn_bptt_forward.3} parent=35 // pred_check
              _
            $region49: #{snn_bptt_forward.3} parent=35 // pred_check_branch
              %1258 = sbr.rel target = $region51
            $region50: #{snn_bptt_forward.3} parent=35 // pred_region
              _
            $region51: #{snn_bptt_forward.3} parent=35 // pred_fallthru
              _
          $region36: #{snn_bptt_forward.3} parent=31 // pred_fallthru
            _
          %1259 = vnop
        $region32: #{snn_bptt_forward.3} parent=27 // pred_fallthru
          _
      $region28: #{snn_bptt_forward.3} parent=5 // pred_fallthru
        _
      %p1260 = scmp.le.s32.totalorder 2, %s8
      // Predicated region
      $region52: #{snn_bptt_forward.3} parent=5 // pred_check
        %p1261 = pneg %p1260
      $region53: #{snn_bptt_forward.3} parent=5 // pred_check_branch
        %1263 = sbr.rel (%p1261) target = $region55
      $region54: #{snn_bptt_forward.3} parent=5 // pred_region
        %s1264 = ssub.s32 %s8, 2
        // Predicated region
        $region56: #{snn_bptt_forward.3} parent=54 // pred_check
          %p1265 = pneg %p84
        $region57: #{snn_bptt_forward.3} parent=54 // pred_check_branch
          %1267 = sbr.rel (%p1265) target = $region59
        $region58: #{snn_bptt_forward.3} parent=54 // pred_region
          %s1268 = sand.u32 %s69, 1
          %s1269 = sand.u32 %s69, 1
          %s1270 = smul.addr %s1269, 256
          %s1271 = scalar_lea.vmem [#allocation3], %s1270
        $region59: #{snn_bptt_forward.3} parent=54 // pred_fallthru
          _
      $region55: #{snn_bptt_forward.3} parent=5 // pred_fallthru
        _
    $region6: #{snn_bptt_forward.3} parent=1 // loop_footer
      %s12 = sadd.s32 1, %s8
    $region7: #{snn_bptt_forward.3} parent=1 // loop_footer_branch
      %7 = sbr.rel target = $region3
    $region8: #{snn_bptt_forward.3} parent=1 // loop_exit
      _

// kernel: snn_bptt_forward.4
$region0: #{snn_bptt_forward.4}
  #allocation0 [shape = 'u32[]', space=smem, size = 0x4, offset = 0x4, fixed_abs, tag = 'smem constant byte address 0x4 - core index']
  #allocation1 [shape = 'u32[72,128]{1,0:T(1,128)}', space=vmem, size = 0x9000, scoped, tag = 'internal scratch']
  #allocation2 [shape = 'f32[16,1024]{1,0:T(8,128)}', space=vmem, size = 0x10000, scoped, tag = 'scratch operand']
  %s0 = inlined_call_operand.vmem [shape: bf16[16,72], index: 0, kind: input, shape index: {}]
  %s1 = inlined_call_operand.vmem [shape: bf16[2,72,1024], index: 1, kind: input, shape index: {}]
  %s2 = inlined_call_operand.vmem [shape: f32[2,16,1024], index: 2, kind: output, shape index: {}]
  %s3 = sld [smem:[#allocation0]]
  $region60: #{snn_bptt_forward.4} parent=0
    _
  %s5 = ssub.s32 1, %s3
  %s6 = scalar_select 0, %s5, %s3
  $region1: #{snn_bptt_forward.4} parent=0
    #allocation3 [shape = 'u8[131072]{0}', space=vmem, size = 0x20000, scoped, tag = 'output window, operand 0']
    loop: start=0, step=1, limit=4
    $region2: #{snn_bptt_forward.4} parent=1 // loop_pre_header
      _
    $region3: #{snn_bptt_forward.4} parent=1 // loop_header
      %s8 = sphi 0, %s12
      %p9 = scmp.ge.s32.totalorder %s8, 4
      %s16 = sphi 0, %s16
      %s18 = sphi 0, %s16
      %s19 = sphi 0, %s18
      %s33 = sphi 0, %s19
      %s39 = sphi 0, %s41
      %s42 = sphi 0, %s39
      %s43 = sphi 0, %s42
      %s59 = sphi 0, %s43
      %s65 = sphi 0, %s67
      %s68 = sphi 0, %s65
      %s69 = sphi 0, %s68
      %s85 = sphi 0, %s69
    $region4: #{snn_bptt_forward.4} parent=1 // loop_header_branch
      %11 = sbr.rel (%p9) target = $region8
    $region5: #{snn_bptt_forward.4} parent=1 // loop_body
      %s13 = ssub.s32 %s8, 1
      %s14 = ssub.s32 %s8, 2
      %s15 = sadd.s32 %s8, 1
      %s17 = sadd.s32 %s16, 1
      %p20 = scmp.eq.s32.totalorder %s8, 1
      %p21 = scmp.ne.s32.totalorder %s16, %s18
      %p22 = scmp.eq.s32.totalorder %s8, 0
      %p23 = por %p21, %p22
      %p24 = scmp.ne.s32.totalorder %s16, %s18
      %p25 = scmp.eq.s32.totalorder %s13, 1
      %p26 = por %p24, %p25
      %p27 = scmp.ne.s32.totalorder %s18, %s19
      %p28 = scmp.eq.s32.totalorder %s13, 0
      %p29 = por %p27, %p28
      %p30 = scmp.ne.s32.totalorder %s18, %s19
      %p31 = scmp.eq.s32.totalorder %s14, 1
      %p32 = por %p30, %p31
      %p34 = scmp.ne.s32.totalorder %s19, %s33
      %p35 = scmp.eq.s32.totalorder %s14, 0
      %p36 = por %p34, %p35
      %s37 = ssub.s32 %s8, %s15
      %p38 = scmp.eq.s32.totalorder %s37, 0
      %s40 = sadd.s32 %s39, 1
      %s41 = scalar_select %p38, %s39, %s40
      %p44 = pneg %p38
      %p45 = scmp.eq.s32.totalorder %s8, 1
      %p46 = por %p44, %p45
      %p47 = scmp.ne.s32.totalorder %s39, %s42
      %p48 = scmp.eq.s32.totalorder %s8, 0
      %p49 = por %p47, %p48
      %p50 = scmp.ne.s32.totalorder %s39, %s42
      %p51 = scmp.eq.s32.totalorder %s13, 1
      %p52 = por %p50, %p51
      %p53 = scmp.ne.s32.totalorder %s42, %s43
      %p54 = scmp.eq.s32.totalorder %s13, 0
      %p55 = por %p53, %p54
      %p56 = scmp.ne.s32.totalorder %s42, %s43
      %p57 = scmp.eq.s32.totalorder %s14, 1
      %p58 = por %p56, %p57
      %p60 = scmp.ne.s32.totalorder %s43, %s59
      %p61 = scmp.eq.s32.totalorder %s14, 0
      %p62 = por %p60, %p61
      %s63 = ssub.s32 %s8, %s15
      %p64 = scmp.eq.s32.totalorder %s63, 0
      %s66 = sadd.s32 %s65, 1
      %s67 = scalar_select %p64, %s65, %s66
      %p70 = pneg %p64
      %p71 = scmp.eq.s32.totalorder %s8, 1
      %p72 = por %p70, %p71
      %p73 = scmp.ne.s32.totalorder %s65, %s68
      %p74 = scmp.eq.s32.totalorder %s8, 0
      %p75 = por %p73, %p74
      %p76 = scmp.ne.s32.totalorder %s65, %s68
      %p77 = scmp.eq.s32.totalorder %s13, 1
      %p78 = por %p76, %p77
      %p79 = scmp.ne.s32.totalorder %s68, %s69
      %p80 = scmp.eq.s32.totalorder %s13, 0
      %p81 = por %p79, %p80
      %p82 = scmp.ne.s32.totalorder %s68, %s69
      %p83 = scmp.eq.s32.totalorder %s14, 1
      %p84 = por %p82, %p83
      %p86 = scmp.ne.s32.totalorder %s69, %s85
      %p87 = scmp.eq.s32.totalorder %s14, 0
      %p88 = por %p86, %p87
      %p89 = scmp.le.s32.totalorder 1, %s8
      %p90 = scmp.lt.s32.totalorder %s8, 3
      %p91 = pnand %p89, %p90
      %p92 = pneg %p91
      // Predicated region
      $region9: #{snn_bptt_forward.4} parent=5 // pred_check
        _
      $region10: #{snn_bptt_forward.4} parent=5 // pred_check_branch
        %94 = sbr.rel (%p91) target = $region12
      $region11: #{snn_bptt_forward.4} parent=5 // pred_region
        %s95 = ssub.s32 %s8, 1
        // Predicated region
        $region13: #{snn_bptt_forward.4} parent=11 // pred_check
          %p96 = pneg %p29
        $region14: #{snn_bptt_forward.4} parent=11 // pred_check_branch
          %98 = sbr.rel (%p96) target = $region16
        $region15: #{snn_bptt_forward.4} parent=11 // pred_region
          _
        $region16: #{snn_bptt_forward.4} parent=11 // pred_fallthru
          _
      $region12: #{snn_bptt_forward.4} parent=5 // pred_fallthru
        _
      %p99 = scmp.lt.s32.totalorder %s8, 2
      // Predicated region
      $region17: #{snn_bptt_forward.4} parent=5 // pred_check
        %p100 = pneg %p99
      $region18: #{snn_bptt_forward.4} parent=5 // pred_check_branch
        %102 = sbr.rel (%p100) target = $region20
      $region19: #{snn_bptt_forward.4} parent=5 // pred_region
        // Predicated region
        $region21: #{snn_bptt_forward.4} parent=19 // pred_check
          %p103 = pneg %p49
        $region22: #{snn_bptt_forward.4} parent=19 // pred_check_branch
          %105 = sbr.rel (%p103) target = $region24
        $region23: #{snn_bptt_forward.4} parent=19 // pred_region
          %p106 = scmp.lt.s32.totalorder %s8, 1
          %s107 = scalar_select %p106, %s8, 1
          %s108 = smul.addr %s107, 72
          %s109 = smul.addr %s108, 4
          %s110 = scalar_lea.vmem %s1, %s109
        $region24: #{snn_bptt_forward.4} parent=19 // pred_fallthru
          _
      $region20: #{snn_bptt_forward.4} parent=5 // pred_fallthru
        _
      %p111 = scmp.le.s32.totalorder 1, %s8
      %p112 = scmp.lt.s32.totalorder %s8, 3
      %p113 = pnand %p111, %p112
      %p114 = pneg %p113
      // Predicated region
      $region25: #{snn_bptt_forward.4} parent=5 // pred_check
        _
      $region26: #{snn_bptt_forward.4} parent=5 // pred_check_branch
        %116 = sbr.rel (%p113) target = $region28
      $region27: #{snn_bptt_forward.4} parent=5 // pred_region
        %s117 = ssub.s32 %s8, 1
        %p118 = pneg %p29
        %p119 = pneg %p26
        %p120 = scmp.lt.s32.totalorder %s13, 1
        %s121 = scalar_select %p120, %s13, 1
        %s122 = smul.addr %s121, 72
        %s123 = smul.addr %s122, 4
        %s124 = scalar_lea.vmem %s1, %s123
        %p125 = pneg %p55
        %p126 = pneg %p52
        %p127 = pneg %p81
        %p128 = pneg %p78
        %s129 = sand.u32 %s68, 1
        %s130 = sand.u32 %s68, 1
        %s131 = smul.addr %s130, 128
        %s132 = scalar_lea.vmem [#allocation3], %s131
        %p133 = scmp.lt.s32.totalorder %s13, 1
        %s134 = scalar_select %p133, %s13, 1
        %s135 = smul.addr %s134, 72
        %s136 = smul.addr %s135, 4
        %s137 = scalar_lea.vmem %s1, %s136
        %s138 = smul.u32 4, %s13
        %v140 = vld [vmem:[%s0] sm:$0xf]
        %v141 = vld [vmem:[%s0 + $0x4] sm:$0xf]
        %v142 = vld [vmem:[%s137] sm:$0xff]
        %v143 = vld [vmem:[%s137 + $0x8] sm:$0xff]
        %v144 = vld [vmem:[%s137 + $0x10] sm:$0xff]
        %v145 = vld [vmem:[%s137 + $0x18] sm:$0xff]
        %v146 = vld [vmem:[%s137 + $0x20] sm:$0xff]
        %v147 = vld [vmem:[%s137 + $0x28] sm:$0xff]
        %v148 = vld [vmem:[%s137 + $0x30] sm:$0xff]
        %v149 = vld [vmem:[%s137 + $0x38] sm:$0xff]
        %v150 = vld [vmem:[%s137 + $0x40] sm:$0xff]
        %v151 = vld [vmem:[%s137 + $0x48] sm:$0xff]
        %v152 = vld [vmem:[%s137 + $0x50] sm:$0xff]
        %v153 = vld [vmem:[%s137 + $0x58] sm:$0xff]
        %v154 = vld [vmem:[%s137 + $0x60] sm:$0xff]
        %v155 = vld [vmem:[%s137 + $0x68] sm:$0xff]
        %v156 = vld [vmem:[%s137 + $0x70] sm:$0xff]
        %v157 = vld [vmem:[%s137 + $0x78] sm:$0xff]
        %v158 = vld [vmem:[%s137 + $0x80] sm:$0xff]
        %v159 = vld [vmem:[%s137 + $0x88] sm:$0xff]
        %v160 = vld [vmem:[%s137 + $0x90] sm:$0xff]
        %v161 = vld [vmem:[%s137 + $0x98] sm:$0xff]
        %v162 = vld [vmem:[%s137 + $0xa0] sm:$0xff]
        %v163 = vld [vmem:[%s137 + $0xa8] sm:$0xff]
        %v164 = vld [vmem:[%s137 + $0xb0] sm:$0xff]
        %v165 = vld [vmem:[%s137 + $0xb8] sm:$0xff]
        %v166 = vld [vmem:[%s137 + $0xc0] sm:$0xff]
        %v167 = vld [vmem:[%s137 + $0xc8] sm:$0xff]
        %v168 = vld [vmem:[%s137 + $0xd0] sm:$0xff]
        %v169 = vld [vmem:[%s137 + $0xd8] sm:$0xff]
        %v170 = vld [vmem:[%s137 + $0xe0] sm:$0xff]
        %v171 = vld [vmem:[%s137 + $0xe8] sm:$0xff]
        %v172 = vld [vmem:[%s137 + $0xf0] sm:$0xff]
        %v173 = vld [vmem:[%s137 + $0xf8] sm:$0xff]
        %v174 = vld [vmem:[%s137 + $0x100] sm:$0xff]
        %v175 = vld [vmem:[%s137 + $0x108] sm:$0xff]
        %v176 = vld [vmem:[%s137 + $0x110] sm:$0xff]
        %v177 = vld [vmem:[%s137 + $0x118] sm:$0xff]
        %v180 = vunpack.c.l.b16 %v140
        %v181 = vunpack.c.l.b16 %v141
        %v182 = vpack.c.b16 %v181, %v180
        %v219 = vunpack.c.l.b16 %v142
        %v220 = vunpack.c.h.b16 %v142
        %v221 = vunpack.c.l.b16 %v143
        %v222 = vunpack.c.h.b16 %v143
        %v223 = vunpack.c.l.b16 %v144
        %v224 = vunpack.c.h.b16 %v144
        %v225 = vunpack.c.l.b16 %v145
        %v226 = vunpack.c.h.b16 %v145
        %v227 = vunpack.c.l.b16 %v146
        %v228 = vunpack.c.h.b16 %v146
        %v229 = vunpack.c.l.b16 %v147
        %v230 = vunpack.c.h.b16 %v147
        %v231 = vunpack.c.l.b16 %v148
        %v232 = vunpack.c.h.b16 %v148
        %v233 = vunpack.c.l.b16 %v149
        %v234 = vunpack.c.h.b16 %v149
        %v235 = vunpack.c.l.b16 %v150
        %v236 = vunpack.c.h.b16 %v150
        %v237 = vunpack.c.l.b16 %v151
        %v238 = vunpack.c.h.b16 %v151
        %v239 = vunpack.c.l.b16 %v152
        %v240 = vunpack.c.h.b16 %v152
        %v241 = vunpack.c.l.b16 %v153
        %v242 = vunpack.c.h.b16 %v153
        %v243 = vunpack.c.l.b16 %v154
        %v244 = vunpack.c.h.b16 %v154
        %v245 = vunpack.c.l.b16 %v155
        %v246 = vunpack.c.h.b16 %v155
        %v247 = vunpack.c.l.b16 %v156
        %v248 = vunpack.c.h.b16 %v156
        %v249 = vunpack.c.l.b16 %v157
        %v250 = vunpack.c.h.b16 %v157
        %v251 = vunpack.c.l.b16 %v158
        %v252 = vunpack.c.h.b16 %v158
        %v253 = vunpack.c.l.b16 %v159
        %v254 = vunpack.c.h.b16 %v159
        %v255 = vunpack.c.l.b16 %v160
        %v256 = vunpack.c.h.b16 %v160
        %v257 = vunpack.c.l.b16 %v161
        %v258 = vunpack.c.h.b16 %v161
        %v259 = vunpack.c.l.b16 %v162
        %v260 = vunpack.c.h.b16 %v162
        %v261 = vunpack.c.l.b16 %v163
        %v262 = vunpack.c.h.b16 %v163
        %v263 = vunpack.c.l.b16 %v164
        %v264 = vunpack.c.h.b16 %v164
        %v265 = vunpack.c.l.b16 %v165
        %v266 = vunpack.c.h.b16 %v165
        %v267 = vunpack.c.l.b16 %v166
        %v268 = vunpack.c.h.b16 %v166
        %v269 = vunpack.c.l.b16 %v167
        %v270 = vunpack.c.h.b16 %v167
        %v271 = vunpack.c.l.b16 %v168
        %v272 = vunpack.c.h.b16 %v168
        %v273 = vunpack.c.l.b16 %v169
        %v274 = vunpack.c.h.b16 %v169
        %v275 = vunpack.c.l.b16 %v170
        %v276 = vunpack.c.h.b16 %v170
        %v277 = vunpack.c.l.b16 %v171
        %v278 = vunpack.c.h.b16 %v171
        %v279 = vunpack.c.l.b16 %v172
        %v280 = vunpack.c.h.b16 %v172
        %v281 = vunpack.c.l.b16 %v173
        %v282 = vunpack.c.h.b16 %v173
        %v283 = vunpack.c.l.b16 %v174
        %v284 = vunpack.c.h.b16 %v174
        %v285 = vunpack.c.l.b16 %v175
        %v286 = vunpack.c.h.b16 %v175
        %v287 = vunpack.c.l.b16 %v176
        %v288 = vunpack.c.h.b16 %v176
        %v289 = vunpack.c.l.b16 %v177
        %v290 = vunpack.c.h.b16 %v177
        %v291 = vpack.c.b16 %v227, %v219
        %v292 = vpack.c.b16 %v228, %v220
        %v293 = vpack.c.b16 %v229, %v221
        %v294 = vpack.c.b16 %v230, %v222
        %v295 = vpack.c.b16 %v231, %v223
        %v296 = vpack.c.b16 %v232, %v224
        %v297 = vpack.c.b16 %v233, %v225
        %v298 = vpack.c.b16 %v234, %v226
        %v299 = vpack.c.b16 %v243, %v235
        %v300 = vpack.c.b16 %v244, %v236
        %v301 = vpack.c.b16 %v245, %v237
        %v302 = vpack.c.b16 %v246, %v238
        %v303 = vpack.c.b16 %v247, %v239
        %v304 = vpack.c.b16 %v248, %v240
        %v305 = vpack.c.b16 %v249, %v241
        %v306 = vpack.c.b16 %v250, %v242
        %v307 = vpack.c.b16 %v259, %v251
        %v308 = vpack.c.b16 %v260, %v252
        %v309 = vpack.c.b16 %v261, %v253
        %v310 = vpack.c.b16 %v262, %v254
        %v311 = vpack.c.b16 %v263, %v255
        %v312 = vpack.c.b16 %v264, %v256
        %v313 = vpack.c.b16 %v265, %v257
        %v314 = vpack.c.b16 %v266, %v258
        %v315 = vpack.c.b16 %v275, %v267
        %v316 = vpack.c.b16 %v276, %v268
        %v317 = vpack.c.b16 %v277, %v269
        %v318 = vpack.c.b16 %v278, %v270
        %v319 = vpack.c.b16 %v279, %v271
        %v320 = vpack.c.b16 %v280, %v272
        %v321 = vpack.c.b16 %v281, %v273
        %v322 = vpack.c.b16 %v282, %v274
        %v323 = vpack.c.b16 %v283, %v283
        %v324 = vpack.c.b16 %v284, %v284
        %v325 = vpack.c.b16 %v285, %v285
        %v326 = vpack.c.b16 %v286, %v286
        %v327 = vpack.c.b16 %v287, %v287
        %v328 = vpack.c.b16 %v288, %v288
        %v329 = vpack.c.b16 %v289, %v289
        %v330 = vpack.c.b16 %v290, %v290
        %vm363 = vcmask 588800
        %v365 = vsel %vm363, %v182, 0
        %vm367 = vcmask 1043456
        %v369 = vsel %vm367, %v323, 0
        %v372 = vsel %vm367, %v324, 0
        %v375 = vsel %vm367, %v325, 0
        %v378 = vsel %vm367, %v326, 0
        %v381 = vsel %vm367, %v327, 0
        %v384 = vsel %vm367, %v328, 0
        %v387 = vsel %vm367, %v329, 0
        %v390 = vsel %vm367, %v330, 0
        %392 = vmatpush.bf16.msra.mxu0 0
        %393 = vmatpush.bf16.msra.mxu0 0
        %394 = vmatpush.bf16.msra.mxu0 0
        %395 = vmatpush.bf16.msra.mxu0 %v369
        %396 = vmatpush.bf16.msra.mxu0 %v315
        %397 = vmatpush.bf16.msra.mxu0 %v307
        %398 = vmatpush.bf16.msra.mxu0 %v299
        %399 = vmatpush.bf16.msra.mxu0 %v291
        %400 = vmatmul.bf16.gmra.mxu0 %v365
        %v401 = vpop.f32.mrf.mxu0
        %v402 = vadd.f32 0.0, %v401
        %v403 = vpop.f32.mrf.mxu0
        %v404 = vadd.f32 0.0, %v403
        %405 = vdwg.mxu0
        %406 = vmatpush.bf16.msra.mxu0 0
        %407 = vmatpush.bf16.msra.mxu0 0
        %408 = vmatpush.bf16.msra.mxu0 0
        %409 = vmatpush.bf16.msra.mxu0 %v372
        %410 = vmatpush.bf16.msra.mxu0 %v316
        %411 = vmatpush.bf16.msra.mxu0 %v308
        %412 = vmatpush.bf16.msra.mxu0 %v300
        %413 = vmatpush.bf16.msra.mxu0 %v292
        %414 = vmatmul.bf16.gmra.mxu0 %v365
        %v415 = vpop.f32.mrf.mxu0
        %v416 = vadd.f32 0.0, %v415
        %v417 = vpop.f32.mrf.mxu0
        %v418 = vadd.f32 0.0, %v417
        %419 = vdwg.mxu0
        %420 = vmatpush.bf16.msra.mxu0 0
        %421 = vmatpush.bf16.msra.mxu0 0
        %422 = vmatpush.bf16.msra.mxu0 0
        %423 = vmatpush.bf16.msra.mxu0 %v375
        %424 = vmatpush.bf16.msra.mxu0 %v317
        %425 = vmatpush.bf16.msra.mxu0 %v309
        %426 = vmatpush.bf16.msra.mxu0 %v301
        %427 = vmatpush.bf16.msra.mxu0 %v293
        %428 = vmatmul.bf16.gmra.mxu0 %v365
        %v429 = vpop.f32.mrf.mxu0
        %v430 = vadd.f32 0.0, %v429
        %v431 = vpop.f32.mrf.mxu0
        %v432 = vadd.f32 0.0, %v431
        %433 = vdwg.mxu0
        %434 = vmatpush.bf16.msra.mxu0 0
        %435 = vmatpush.bf16.msra.mxu0 0
        %436 = vmatpush.bf16.msra.mxu0 0
        %437 = vmatpush.bf16.msra.mxu0 %v378
        %438 = vmatpush.bf16.msra.mxu0 %v318
        %439 = vmatpush.bf16.msra.mxu0 %v310
        %440 = vmatpush.bf16.msra.mxu0 %v302
        %441 = vmatpush.bf16.msra.mxu0 %v294
        %442 = vmatmul.bf16.gmra.mxu0 %v365
        %v443 = vpop.f32.mrf.mxu0
        %v444 = vadd.f32 0.0, %v443
        %v445 = vpop.f32.mrf.mxu0
        %v446 = vadd.f32 0.0, %v445
        %447 = vdwg.mxu0
        %448 = vmatpush.bf16.msra.mxu0 0
        %449 = vmatpush.bf16.msra.mxu0 0
        %450 = vmatpush.bf16.msra.mxu0 0
        %451 = vmatpush.bf16.msra.mxu0 %v381
        %452 = vmatpush.bf16.msra.mxu0 %v319
        %453 = vmatpush.bf16.msra.mxu0 %v311
        %454 = vmatpush.bf16.msra.mxu0 %v303
        %455 = vmatpush.bf16.msra.mxu0 %v295
        %456 = vmatmul.bf16.gmra.mxu0 %v365
        %v457 = vpop.f32.mrf.mxu0
        %v458 = vadd.f32 0.0, %v457
        %v459 = vpop.f32.mrf.mxu0
        %v460 = vadd.f32 0.0, %v459
        %461 = vdwg.mxu0
        %462 = vmatpush.bf16.msra.mxu0 0
        %463 = vmatpush.bf16.msra.mxu0 0
        %464 = vmatpush.bf16.msra.mxu0 0
        %465 = vmatpush.bf16.msra.mxu0 %v384
        %466 = vmatpush.bf16.msra.mxu0 %v320
        %467 = vmatpush.bf16.msra.mxu0 %v312
        %468 = vmatpush.bf16.msra.mxu0 %v304
        %469 = vmatpush.bf16.msra.mxu0 %v296
        %470 = vmatmul.bf16.gmra.mxu0 %v365
        %v471 = vpop.f32.mrf.mxu0
        %v472 = vadd.f32 0.0, %v471
        %v473 = vpop.f32.mrf.mxu0
        %v474 = vadd.f32 0.0, %v473
        %475 = vdwg.mxu0
        %476 = vmatpush.bf16.msra.mxu0 0
        %477 = vmatpush.bf16.msra.mxu0 0
        %478 = vmatpush.bf16.msra.mxu0 0
        %479 = vmatpush.bf16.msra.mxu0 %v387
        %480 = vmatpush.bf16.msra.mxu0 %v321
        %481 = vmatpush.bf16.msra.mxu0 %v313
        %482 = vmatpush.bf16.msra.mxu0 %v305
        %483 = vmatpush.bf16.msra.mxu0 %v297
        %484 = vmatmul.bf16.gmra.mxu0 %v365
        %v485 = vpop.f32.mrf.mxu0
        %v486 = vadd.f32 0.0, %v485
        %v487 = vpop.f32.mrf.mxu0
        %v488 = vadd.f32 0.0, %v487
        %489 = vdwg.mxu0
        %490 = vmatpush.bf16.msra.mxu0 0
        %491 = vmatpush.bf16.msra.mxu0 0
        %492 = vmatpush.bf16.msra.mxu0 0
        %493 = vmatpush.bf16.msra.mxu0 %v390
        %494 = vmatpush.bf16.msra.mxu0 %v322
        %495 = vmatpush.bf16.msra.mxu0 %v314
        %496 = vmatpush.bf16.msra.mxu0 %v306
        %497 = vmatpush.bf16.msra.mxu0 %v298
        %498 = vmatmul.bf16.gmra.mxu0 %v365
        %v499 = vpop.f32.mrf.mxu0
        %v500 = vadd.f32 0.0, %v499
        %v501 = vpop.f32.mrf.mxu0
        %v502 = vadd.f32 0.0, %v501
        %503 = vdwg.mxu0
        %504 = vst [vmem:[#allocation2] sm:$0xff] %v402
        %505 = vst [vmem:[#allocation2 + $0x8] sm:$0xff] %v416
        %506 = vst [vmem:[#allocation2 + $0x10] sm:$0xff] %v430
        %507 = vst [vmem:[#allocation2 + $0x18] sm:$0xff] %v444
        %508 = vst [vmem:[#allocation2 + $0x20] sm:$0xff] %v458
        %509 = vst [vmem:[#allocation2 + $0x28] sm:$0xff] %v472
        %510 = vst [vmem:[#allocation2 + $0x30] sm:$0xff] %v486
        %511 = vst [vmem:[#allocation2 + $0x38] sm:$0xff] %v500
        %512 = vst [vmem:[#allocation2 + $0x40] sm:$0xff] %v404
        %513 = vst [vmem:[#allocation2 + $0x48] sm:$0xff] %v418
        %514 = vst [vmem:[#allocation2 + $0x50] sm:$0xff] %v432
        %515 = vst [vmem:[#allocation2 + $0x58] sm:$0xff] %v446
        %516 = vst [vmem:[#allocation2 + $0x60] sm:$0xff] %v460
        %517 = vst [vmem:[#allocation2 + $0x68] sm:$0xff] %v474
        %518 = vst [vmem:[#allocation2 + $0x70] sm:$0xff] %v488
        %519 = vst [vmem:[#allocation2 + $0x78] sm:$0xff] %v502
        %v520 = vld [vmem:[#allocation2] sm:$0xff]
        %v521 = vld [vmem:[#allocation2 + $0x8] sm:$0xff]
        %v522 = vld [vmem:[#allocation2 + $0x10] sm:$0xff]
        %v523 = vld [vmem:[#allocation2 + $0x18] sm:$0xff]
        %v524 = vld [vmem:[#allocation2 + $0x40] sm:$0xff]
        %v525 = vld [vmem:[#allocation2 + $0x48] sm:$0xff]
        %v526 = vld [vmem:[#allocation2 + $0x50] sm:$0xff]
        %v527 = vld [vmem:[#allocation2 + $0x58] sm:$0xff]
        %v528 = vadd.f32 %v520, 0.0
        %v529 = vadd.f32 %v521, 0.0
        %v530 = vadd.f32 %v522, 0.0
        %v531 = vadd.f32 %v523, 0.0
        %v532 = vadd.f32 %v524, 0.0
        %v533 = vadd.f32 %v525, 0.0
        %v534 = vadd.f32 %v526, 0.0
        %v535 = vadd.f32 %v527, 0.0
        %v536 = vmax.f32 %v528, 0.0
        %v537 = vmax.f32 %v529, 0.0
        %v538 = vmax.f32 %v530, 0.0
        %v539 = vmax.f32 %v531, 0.0
        %v540 = vmax.f32 %v532, 0.0
        %v541 = vmax.f32 %v533, 0.0
        %v542 = vmax.f32 %v534, 0.0
        %v543 = vmax.f32 %v535, 0.0
        %v544 = vfloor.f32 %v536
        %v545 = vfloor.f32 %v537
        %v546 = vfloor.f32 %v538
        %v547 = vfloor.f32 %v539
        %v548 = vfloor.f32 %v540
        %v549 = vfloor.f32 %v541
        %v550 = vfloor.f32 %v542
        %v551 = vfloor.f32 %v543
        %552 = vst [vmem:[%s132] sm:$0xff] %v544
        %553 = vst [vmem:[%s132 + $0x8] sm:$0xff] %v545
        %554 = vst [vmem:[%s132 + $0x10] sm:$0xff] %v546
        %555 = vst [vmem:[%s132 + $0x18] sm:$0xff] %v547
        %556 = vst [vmem:[%s132 + $0x20] sm:$0xff] %v548
        %557 = vst [vmem:[%s132 + $0x28] sm:$0xff] %v549
        %558 = vst [vmem:[%s132 + $0x30] sm:$0xff] %v550
        %559 = vst [vmem:[%s132 + $0x38] sm:$0xff] %v551
        %v560 = vsub.f32 %v528, %v544
        %v561 = vsub.f32 %v529, %v545
        %v562 = vsub.f32 %v530, %v546
        %v563 = vsub.f32 %v531, %v547
        %v564 = vsub.f32 %v532, %v548
        %v565 = vsub.f32 %v533, %v549
        %v566 = vsub.f32 %v534, %v550
        %v567 = vsub.f32 %v535, %v551
        %v568 = vmax.f32 %v560, -1.0
        %v569 = vmax.f32 %v561, -1.0
        %v570 = vmax.f32 %v562, -1.0
        %v571 = vmax.f32 %v563, -1.0
        %v572 = vmax.f32 %v564, -1.0
        %v573 = vmax.f32 %v565, -1.0
        %v574 = vmax.f32 %v566, -1.0
        %v575 = vmax.f32 %v567, -1.0
        %v576 = vld [vmem:[#allocation2 + $0x20] sm:$0xff]
        %v577 = vld [vmem:[#allocation2 + $0x28] sm:$0xff]
        %v578 = vld [vmem:[#allocation2 + $0x30] sm:$0xff]
        %v579 = vld [vmem:[#allocation2 + $0x38] sm:$0xff]
        %v580 = vld [vmem:[#allocation2 + $0x60] sm:$0xff]
        %v581 = vld [vmem:[#allocation2 + $0x68] sm:$0xff]
        %v582 = vld [vmem:[#allocation2 + $0x70] sm:$0xff]
        %v583 = vld [vmem:[#allocation2 + $0x78] sm:$0xff]
        %v584 = vadd.f32 %v568, %v576
        %v585 = vadd.f32 %v569, %v577
        %v586 = vadd.f32 %v570, %v578
        %v587 = vadd.f32 %v571, %v579
        %v588 = vadd.f32 %v572, %v580
        %v589 = vadd.f32 %v573, %v581
        %v590 = vadd.f32 %v574, %v582
        %v591 = vadd.f32 %v575, %v583
        %v592 = vmax.f32 %v584, 0.0
        %v593 = vmax.f32 %v585, 0.0
        %v594 = vmax.f32 %v586, 0.0
        %v595 = vmax.f32 %v587, 0.0
        %v596 = vmax.f32 %v588, 0.0
        %v597 = vmax.f32 %v589, 0.0
        %v598 = vmax.f32 %v590, 0.0
        %v599 = vmax.f32 %v591, 0.0
        %v600 = vfloor.f32 %v592
        %v601 = vfloor.f32 %v593
        %v602 = vfloor.f32 %v594
        %v603 = vfloor.f32 %v595
        %v604 = vfloor.f32 %v596
        %v605 = vfloor.f32 %v597
        %v606 = vfloor.f32 %v598
        %v607 = vfloor.f32 %v599
        %s608 = scalar_lea.vmem %s132, 64 [#allocation3]
        %609 = vst [vmem:[%s608] sm:$0xff] %v600
        %610 = vst [vmem:[%s608 + $0x8] sm:$0xff] %v601
        %611 = vst [vmem:[%s608 + $0x10] sm:$0xff] %v602
        %612 = vst [vmem:[%s608 + $0x18] sm:$0xff] %v603
        %613 = vst [vmem:[%s608 + $0x20] sm:$0xff] %v604
        %614 = vst [vmem:[%s608 + $0x28] sm:$0xff] %v605
        %615 = vst [vmem:[%s608 + $0x30] sm:$0xff] %v606
        %616 = vst [vmem:[%s608 + $0x38] sm:$0xff] %v607
        %s617 = sand.u32 %s68, 1
        %s618 = sand.u32 %s68, 1
        %s619 = smul.addr %s618, 128
        %s620 = scalar_lea.vmem [#allocation3], %s619
        // Predicated region
        $region29: #{snn_bptt_forward.4} parent=27 // pred_check
          %p621 = pneg %p78
        $region30: #{snn_bptt_forward.4} parent=27 // pred_check_branch
          %623 = sbr.rel (%p621) target = $region32
        $region31: #{snn_bptt_forward.4} parent=27 // pred_region
          %s624 = smul.u32 4, %s13
          %s625 = smul.addr %s624, 8
          %s626 = scalar_lea.vmem %s2, %s625
          // Predicated region
          $region33: #{snn_bptt_forward.4} parent=31 // pred_check
            _
          $region34: #{snn_bptt_forward.4} parent=31 // pred_check_branch
            %628 = sbr.rel (0) target = $region36
          $region35: #{snn_bptt_forward.4} parent=31 // pred_region
            // Predicated region
            $region37: #{snn_bptt_forward.4} parent=35 // pred_check
              _
            $region38: #{snn_bptt_forward.4} parent=35 // pred_check_branch
              %630 = sbr.rel (0) target = $region40
            $region39: #{snn_bptt_forward.4} parent=35 // pred_region
              loop: start=0, step=1, limit=1
              $region41: #{snn_bptt_forward.4} parent=39 // loop_pre_header
                _
              $region42: #{snn_bptt_forward.4} parent=39 // loop_header
                %s632 = sphi 0, %s636
                %p633 = scmp.ge.s32.totalorder %s632, 1
                %s637 = sphi %s620, %s620
                %s638 = sphi %s626, %s626
              $region43: #{snn_bptt_forward.4} parent=39 // loop_header_branch
                %635 = sbr.rel (%p633) target = $region47
              $region44: #{snn_bptt_forward.4} parent=39 // loop_body
                %v639 = vld [vmem:[%s637] sm:$0xff]
                %640 = vst [vmem:[%s638] sm:$0xff] %v639
                %v641 = vld [vmem:[%s637 + $0x8] sm:$0xff]
                %642 = vst [vmem:[%s638 + $0x8] sm:$0xff] %v641
                %v643 = vld [vmem:[%s637 + $0x10] sm:$0xff]
                %644 = vst [vmem:[%s638 + $0x10] sm:$0xff] %v643
                %v645 = vld [vmem:[%s637 + $0x18] sm:$0xff]
                %646 = vst [vmem:[%s638 + $0x18] sm:$0xff] %v645
                %v647 = vld [vmem:[%s637 + $0x20] sm:$0xff]
                %648 = vst [vmem:[%s638 + $0x40] sm:$0xff] %v647
                %v649 = vld [vmem:[%s637 + $0x28] sm:$0xff]
                %650 = vst [vmem:[%s638 + $0x48] sm:$0xff] %v649
                %v651 = vld [vmem:[%s637 + $0x30] sm:$0xff]
                %652 = vst [vmem:[%s638 + $0x50] sm:$0xff] %v651
                %v653 = vld [vmem:[%s637 + $0x38] sm:$0xff]
                %654 = vst [vmem:[%s638 + $0x58] sm:$0xff] %v653
                %v655 = vld [vmem:[%s637 + $0x40] sm:$0xff]
                %656 = vst [vmem:[%s638 + $0x80] sm:$0xff] %v655
                %v657 = vld [vmem:[%s637 + $0x48] sm:$0xff]
                %658 = vst [vmem:[%s638 + $0x88] sm:$0xff] %v657
                %v659 = vld [vmem:[%s637 + $0x50] sm:$0xff]
                %660 = vst [vmem:[%s638 + $0x90] sm:$0xff] %v659
                %v661 = vld [vmem:[%s637 + $0x58] sm:$0xff]
                %662 = vst [vmem:[%s638 + $0x98] sm:$0xff] %v661
                %v663 = vld [vmem:[%s637 + $0x60] sm:$0xff]
                %664 = vst [vmem:[%s638 + $0xc0] sm:$0xff] %v663
                %v665 = vld [vmem:[%s637 + $0x68] sm:$0xff]
                %666 = vst [vmem:[%s638 + $0xc8] sm:$0xff] %v665
                %v667 = vld [vmem:[%s637 + $0x70] sm:$0xff]
                %668 = vst [vmem:[%s638 + $0xd0] sm:$0xff] %v667
                %v669 = vld [vmem:[%s637 + $0x78] sm:$0xff]
                %670 = vst [vmem:[%s638 + $0xd8] sm:$0xff] %v669
              $region45: #{snn_bptt_forward.4} parent=39 // loop_footer
                %s636 = sadd.s32 1, %s632
              $region46: #{snn_bptt_forward.4} parent=39 // loop_footer_branch
                %631 = sbr.rel target = $region42
              $region47: #{snn_bptt_forward.4} parent=39 // loop_exit
                _
            $region40: #{snn_bptt_forward.4} parent=35 // pred_fallthru
              _
            // Predicated region
            $region48: #{snn_bptt_forward.4} parent=35 // pred_check
              _
            $region49: #{snn_bptt_forward.4} parent=35 // pred_check_branch
              %672 = sbr.rel target = $region51
            $region50: #{snn_bptt_forward.4} parent=35 // pred_region
              _
            $region51: #{snn_bptt_forward.4} parent=35 // pred_fallthru
              _
          $region36: #{snn_bptt_forward.4} parent=31 // pred_fallthru
            _
          %673 = vnop
        $region32: #{snn_bptt_forward.4} parent=27 // pred_fallthru
          _
      $region28: #{snn_bptt_forward.4} parent=5 // pred_fallthru
        _
      %p674 = scmp.le.s32.totalorder 2, %s8
      // Predicated region
      $region52: #{snn_bptt_forward.4} parent=5 // pred_check
        %p675 = pneg %p674
      $region53: #{snn_bptt_forward.4} parent=5 // pred_check_branch
        %677 = sbr.rel (%p675) target = $region55
      $region54: #{snn_bptt_forward.4} parent=5 // pred_region
        %s678 = ssub.s32 %s8, 2
        // Predicated region
        $region56: #{snn_bptt_forward.4} parent=54 // pred_check
          %p679 = pneg %p84
        $region57: #{snn_bptt_forward.4} parent=54 // pred_check_branch
          %681 = sbr.rel (%p679) target = $region59
        $region58: #{snn_bptt_forward.4} parent=54 // pred_region
          %s682 = sand.u32 %s69, 1
          %s683 = sand.u32 %s69, 1
          %s684 = smul.addr %s683, 128
          %s685 = scalar_lea.vmem [#allocation3], %s684
        $region59: #{snn_bptt_forward.4} parent=54 // pred_fallthru
          _
      $region55: #{snn_bptt_forward.4} parent=5 // pred_fallthru
        _
    $region6: #{snn_bptt_forward.4} parent=1 // loop_footer
      %s12 = sadd.s32 1, %s8
    $region7: #{snn_bptt_forward.4} parent=1 // loop_footer_branch
      %7 = sbr.rel target = $region3
    $region8: #{snn_bptt_forward.4} parent=1 // loop_exit
      _

// kernel: snn_bptt_forward.5
$region0: #{snn_bptt_forward.5}
  #allocation0 [shape = 'u32[]', space=smem, size = 0x4, offset = 0x4, fixed_abs, tag = 'smem constant byte address 0x4 - core index']
  #allocation1 [shape = 'u32[72,128]{1,0:T(1,128)}', space=vmem, size = 0x9000, scoped, tag = 'internal scratch']
  %s0 = inlined_call_operand.vmem [shape: f32[128,144], index: 0, kind: input, shape index: {}]
  %s1 = inlined_call_operand.vmem [shape: f32[144,32], index: 1, kind: input, shape index: {}]
  %s2 = inlined_call_operand.vmem [shape: f32[32,64], index: 2, kind: input, shape index: {}]
  %s3 = inlined_call_operand.vmem [shape: f32[4,32,256], index: 3, kind: input, shape index: {}]
  %s4 = inlined_call_operand.vmem [shape: f32[10,256], index: 4, kind: input, shape index: {}]
  %s5 = inlined_call_operand.hbm [shape: f32[4,2,10], index: 5, kind: output, shape index: {}]
  %s6 = sld [smem:[#allocation0]]
  $region30: #{snn_bptt_forward.5} parent=0
    _
  %s8 = ssub.s32 1, %s6
  %s9 = scalar_select 0, %s8, %s6
  $region1: #{snn_bptt_forward.5} parent=0
    #allocation2 [shape = 'u8[4096]{0}', space=vmem, size = 0x1000, scoped, tag = 'output window, operand 0, single buffered']
    #allocation3 [shape = 's32[1]{0}', space=sflag, size = 0x4, scoped, tag = 'scoped memory for snn_bptt_forward.5']
    %10 = vsyncpa [#allocation3], 0
    // Predicated region
    $region2: #{snn_bptt_forward.5} parent=1 // pred_check
      _
    $region3: #{snn_bptt_forward.5} parent=1 // pred_check_branch
      %12 = sbr.rel (0) target = $region5
    $region4: #{snn_bptt_forward.5} parent=1 // pred_region
      _
    $region5: #{snn_bptt_forward.5} parent=1 // pred_fallthru
      _
    // Predicated region
    $region6: #{snn_bptt_forward.5} parent=1 // pred_check
      _
    $region7: #{snn_bptt_forward.5} parent=1 // pred_check_branch
      %14 = sbr.rel (0) target = $region9
    $region8: #{snn_bptt_forward.5} parent=1 // pred_region
      _
    $region9: #{snn_bptt_forward.5} parent=1 // pred_fallthru
      _
    // Predicated region
    $region10: #{snn_bptt_forward.5} parent=1 // pred_check
      _
    $region11: #{snn_bptt_forward.5} parent=1 // pred_check_branch
      %16 = sbr.rel (0) target = $region13
    $region12: #{snn_bptt_forward.5} parent=1 // pred_region
      _
    $region13: #{snn_bptt_forward.5} parent=1 // pred_fallthru
      _
    // Predicated region
    $region14: #{snn_bptt_forward.5} parent=1 // pred_check
      _
    $region15: #{snn_bptt_forward.5} parent=1 // pred_check_branch
      %18 = sbr.rel (0) target = $region17
    $region16: #{snn_bptt_forward.5} parent=1 // pred_region
      _
    $region17: #{snn_bptt_forward.5} parent=1 // pred_fallthru
      _
    // Predicated region
    $region18: #{snn_bptt_forward.5} parent=1 // pred_check
      _
    $region19: #{snn_bptt_forward.5} parent=1 // pred_check_branch
      %20 = sbr.rel (0) target = $region21
    $region20: #{snn_bptt_forward.5} parent=1 // pred_region
      _
    $region21: #{snn_bptt_forward.5} parent=1 // pred_fallthru
      _
    %v21 = vld [vmem:[%s0] sm:$0xff]
    %v22 = vld [vmem:[%s0 + $0x8] sm:$0xff]
    %v23 = vld [vmem:[%s0 + $0x10] sm:$0xff]
    %v24 = vld [vmem:[%s0 + $0x18] sm:$0xff]
    %v25 = vld [vmem:[%s0 + $0x20] sm:$0xff]
    %v26 = vld [vmem:[%s0 + $0x28] sm:$0xff]
    %v27 = vld [vmem:[%s0 + $0x30] sm:$0xff]
    %v28 = vld [vmem:[%s0 + $0x38] sm:$0xff]
    %v29 = vld [vmem:[%s0 + $0x40] sm:$0xff]
    %v30 = vld [vmem:[%s0 + $0x48] sm:$0xff]
    %v31 = vld [vmem:[%s0 + $0x50] sm:$0xff]
    %v32 = vld [vmem:[%s0 + $0x58] sm:$0xff]
    %v33 = vld [vmem:[%s0 + $0x60] sm:$0xff]
    %v34 = vld [vmem:[%s0 + $0x68] sm:$0xff]
    %v35 = vld [vmem:[%s0 + $0x70] sm:$0xff]
    %v36 = vld [vmem:[%s0 + $0x78] sm:$0xff]
    %v37 = vld [vmem:[%s0 + $0x80] sm:$0xff]
    %v38 = vld [vmem:[%s0 + $0x88] sm:$0xff]
    %v39 = vld [vmem:[%s0 + $0x90] sm:$0xff]
    %v40 = vld [vmem:[%s0 + $0x98] sm:$0xff]
    %v41 = vld [vmem:[%s0 + $0xa0] sm:$0xff]
    %v42 = vld [vmem:[%s0 + $0xa8] sm:$0xff]
    %v43 = vld [vmem:[%s0 + $0xb0] sm:$0xff]
    %v44 = vld [vmem:[%s0 + $0xb8] sm:$0xff]
    %v45 = vld [vmem:[%s0 + $0xc0] sm:$0xff]
    %v46 = vld [vmem:[%s0 + $0xc8] sm:$0xff]
    %v47 = vld [vmem:[%s0 + $0xd0] sm:$0xff]
    %v48 = vld [vmem:[%s0 + $0xd8] sm:$0xff]
    %v49 = vld [vmem:[%s0 + $0xe0] sm:$0xff]
    %v50 = vld [vmem:[%s0 + $0xe8] sm:$0xff]
    %v51 = vld [vmem:[%s0 + $0xf0] sm:$0xff]
    %v52 = vld [vmem:[%s0 + $0xf8] sm:$0xff]
    %v53 = vld [vmem:[%s1] sm:$0xff]
    %v54 = vld [vmem:[%s1 + $0x8] sm:$0xff]
    %v55 = vld [vmem:[%s1 + $0x10] sm:$0xff]
    %v56 = vld [vmem:[%s1 + $0x18] sm:$0xff]
    %v57 = vld [vmem:[%s1 + $0x20] sm:$0xff]
    %v58 = vld [vmem:[%s1 + $0x28] sm:$0xff]
    %v59 = vld [vmem:[%s1 + $0x30] sm:$0xff]
    %v60 = vld [vmem:[%s1 + $0x38] sm:$0xff]
    %v61 = vld [vmem:[%s1 + $0x40] sm:$0xff]
    %v62 = vld [vmem:[%s1 + $0x48] sm:$0xff]
    %v63 = vld [vmem:[%s1 + $0x50] sm:$0xff]
    %v64 = vld [vmem:[%s1 + $0x58] sm:$0xff]
    %v65 = vld [vmem:[%s1 + $0x60] sm:$0xff]
    %v66 = vld [vmem:[%s1 + $0x68] sm:$0xff]
    %v67 = vld [vmem:[%s1 + $0x70] sm:$0xff]
    %v68 = vld [vmem:[%s1 + $0x78] sm:$0xff]
    %v69 = vld [vmem:[%s1 + $0x80] sm:$0xff]
    %v70 = vld [vmem:[%s1 + $0x88] sm:$0xff]
    %vm71 = vcmask 130048
    %v73 = vsel %vm71, %v22, 0
    %v76 = vsel %vm71, %v24, 0
    %v79 = vsel %vm71, %v26, 0
    %v82 = vsel %vm71, %v28, 0
    %v85 = vsel %vm71, %v30, 0
    %v88 = vsel %vm71, %v32, 0
    %v91 = vsel %vm71, %v34, 0
    %v94 = vsel %vm71, %v36, 0
    %v97 = vsel %vm71, %v38, 0
    %v100 = vsel %vm71, %v40, 0
    %v103 = vsel %vm71, %v42, 0
    %v106 = vsel %vm71, %v44, 0
    %v109 = vsel %vm71, %v46, 0
    %v112 = vsel %vm71, %v48, 0
    %v115 = vsel %vm71, %v50, 0
    %v118 = vsel %vm71, %v52, 0
    %120 = vmatpush.msra.mxu0 %v68
    %121 = vmatpush.msra.mxu0 %v67
    %122 = vmatpush.msra.mxu0 %v66
    %123 = vmatpush.msra.mxu0 %v65
    %124 = vmatpush.msra.mxu0 %v64
    %125 = vmatpush.msra.mxu0 %v63
    %126 = vmatpush.msra.mxu0 %v62
    %127 = vmatpush.msra.mxu0 %v61
    %128 = vmatpush.msra.mxu0 %v60
    %129 = vmatpush.msra.mxu0 %v59
    %130 = vmatpush.msra.mxu0 %v58
    %131 = vmatpush.msra.mxu0 %v57
    %132 = vmatpush.msra.mxu0 %v56
    %133 = vmatpush.msra.mxu0 %v55
    %134 = vmatpush.msra.mxu0 %v54
    %135 = vmatpush.msra.mxu0 %v53
    %136 = vmatmul.f32.gmra.mxu0 %v21
    %v137 = vpop.f32.mrf.mxu0
    %v138 = vadd.f32 0.0, %v137
    %139 = vmatmul.f32.gmra.mxu0 %v23
    %v140 = vpop.f32.mrf.mxu0
    %v141 = vadd.f32 0.0, %v140
    %142 = vmatmul.f32.gmra.mxu0 %v25
    %v143 = vpop.f32.mrf.mxu0
    %v144 = vadd.f32 0.0, %v143
    %145 = vmatmul.f32.gmra.mxu0 %v27
    %v146 = vpop.f32.mrf.mxu0
    %v147 = vadd.f32 0.0, %v146
    %148 = vmatmul.f32.gmra.mxu0 %v29
    %v149 = vpop.f32.mrf.mxu0
    %v150 = vadd.f32 0.0, %v149
    %151 = vmatmul.f32.gmra.mxu0 %v31
    %v152 = vpop.f32.mrf.mxu0
    %v153 = vadd.f32 0.0, %v152
    %154 = vmatmul.f32.gmra.mxu0 %v33
    %v155 = vpop.f32.mrf.mxu0
    %v156 = vadd.f32 0.0, %v155
    %157 = vmatmul.f32.gmra.mxu0 %v35
    %v158 = vpop.f32.mrf.mxu0
    %v159 = vadd.f32 0.0, %v158
    %160 = vmatmul.f32.gmra.mxu0 %v37
    %v161 = vpop.f32.mrf.mxu0
    %v162 = vadd.f32 0.0, %v161
    %163 = vmatmul.f32.gmra.mxu0 %v39
    %v164 = vpop.f32.mrf.mxu0
    %v165 = vadd.f32 0.0, %v164
    %166 = vmatmul.f32.gmra.mxu0 %v41
    %v167 = vpop.f32.mrf.mxu0
    %v168 = vadd.f32 0.0, %v167
    %169 = vmatmul.f32.gmra.mxu0 %v43
    %v170 = vpop.f32.mrf.mxu0
    %v171 = vadd.f32 0.0, %v170
    %172 = vmatmul.f32.gmra.mxu0 %v45
    %v173 = vpop.f32.mrf.mxu0
    %v174 = vadd.f32 0.0, %v173
    %175 = vmatmul.f32.gmra.mxu0 %v47
    %v176 = vpop.f32.mrf.mxu0
    %v177 = vadd.f32 0.0, %v176
    %178 = vmatmul.f32.gmra.mxu0 %v49
    %v179 = vpop.f32.mrf.mxu0
    %v180 = vadd.f32 0.0, %v179
    %181 = vmatmul.f32.gmra.mxu0 %v51
    %v182 = vpop.f32.mrf.mxu0
    %v183 = vadd.f32 0.0, %v182
    %184 = vdwg.mxu0
    %185 = vmatpush.msra.mxu0 0.0
    %186 = vmatpush.msra.mxu0 0.0
    %187 = vmatpush.msra.mxu0 0.0
    %188 = vmatpush.msra.mxu0 0.0
    %189 = vmatpush.msra.mxu0 0.0
    %190 = vmatpush.msra.mxu0 0.0
    %191 = vmatpush.msra.mxu0 0.0
    %192 = vmatpush.msra.mxu0 0.0
    %193 = vmatpush.msra.mxu0 0.0
    %194 = vmatpush.msra.mxu0 0.0
    %195 = vmatpush.msra.mxu0 0.0
    %196 = vmatpush.msra.mxu0 0.0
    %197 = vmatpush.msra.mxu0 0.0
    %198 = vmatpush.msra.mxu0 0.0
    %199 = vmatpush.msra.mxu0 %v70
    %200 = vmatpush.msra.mxu0 %v69
    %201 = vmatmul.f32.gmra.mxu0 %v73
    %v202 = vpop.f32.mrf.mxu0
    %v203 = vadd.f32 %v138, %v202
    %204 = vmatmul.f32.gmra.mxu0 %v76
    %v205 = vpop.f32.mrf.mxu0
    %v206 = vadd.f32 %v141, %v205
    %207 = vmatmul.f32.gmra.mxu0 %v79
    %v208 = vpop.f32.mrf.mxu0
    %v209 = vadd.f32 %v144, %v208
    %210 = vmatmul.f32.gmra.mxu0 %v82
    %v211 = vpop.f32.mrf.mxu0
    %v212 = vadd.f32 %v147, %v211
    %213 = vmatmul.f32.gmra.mxu0 %v85
    %v214 = vpop.f32.mrf.mxu0
    %v215 = vadd.f32 %v150, %v214
    %216 = vmatmul.f32.gmra.mxu0 %v88
    %v217 = vpop.f32.mrf.mxu0
    %v218 = vadd.f32 %v153, %v217
    %219 = vmatmul.f32.gmra.mxu0 %v91
    %v220 = vpop.f32.mrf.mxu0
    %v221 = vadd.f32 %v156, %v220
    %222 = vmatmul.f32.gmra.mxu0 %v94
    %v223 = vpop.f32.mrf.mxu0
    %v224 = vadd.f32 %v159, %v223
    %225 = vmatmul.f32.gmra.mxu0 %v97
    %v226 = vpop.f32.mrf.mxu0
    %v227 = vadd.f32 %v162, %v226
    %228 = vmatmul.f32.gmra.mxu0 %v100
    %v229 = vpop.f32.mrf.mxu0
    %v230 = vadd.f32 %v165, %v229
    %231 = vmatmul.f32.gmra.mxu0 %v103
    %v232 = vpop.f32.mrf.mxu0
    %v233 = vadd.f32 %v168, %v232
    %234 = vmatmul.f32.gmra.mxu0 %v106
    %v235 = vpop.f32.mrf.mxu0
    %v236 = vadd.f32 %v171, %v235
    %237 = vmatmul.f32.gmra.mxu0 %v109
    %v238 = vpop.f32.mrf.mxu0
    %v239 = vadd.f32 %v174, %v238
    %240 = vmatmul.f32.gmra.mxu0 %v112
    %v241 = vpop.f32.mrf.mxu0
    %v242 = vadd.f32 %v177, %v241
    %243 = vmatmul.f32.gmra.mxu0 %v115
    %v244 = vpop.f32.mrf.mxu0
    %v245 = vadd.f32 %v180, %v244
    %246 = vmatmul.f32.gmra.mxu0 %v118
    %v247 = vpop.f32.mrf.mxu0
    %v248 = vadd.f32 %v183, %v247
    %249 = vdwg.mxu0
    %v250 = vld [vmem:[%s2] sm:$0xff]
    %v251 = vld [vmem:[%s2 + $0x8] sm:$0xff]
    %v252 = vld [vmem:[%s2 + $0x10] sm:$0xff]
    %v253 = vld [vmem:[%s2 + $0x18] sm:$0xff]
    %v254 = vld [vmem:[%s4] sm:$0xff]
    %v255 = vld [vmem:[%s4 + $0x8] sm:$0xff]
    %v256 = vld [vmem:[%s4 + $0x10] sm:$0x3]
    %v257 = vld [vmem:[%s4 + $0x18] sm:$0x3]
    %v258 = vadd.f32 %v203, 0.0
    %v259 = vadd.f32 %v206, 0.0
    %v260 = vadd.f32 %v209, 0.0
    %v261 = vadd.f32 %v212, 0.0
    %v262 = vadd.f32 %v215, 0.0
    %v263 = vadd.f32 %v218, 0.0
    %v264 = vadd.f32 %v221, 0.0
    %v265 = vadd.f32 %v224, 0.0
    %v266 = vmax.f32 %v258, 0.0
    %v267 = vmax.f32 %v259, 0.0
    %v268 = vmax.f32 %v260, 0.0
    %v269 = vmax.f32 %v261, 0.0
    %v270 = vmax.f32 %v262, 0.0
    %v271 = vmax.f32 %v263, 0.0
    %v272 = vmax.f32 %v264, 0.0
    %v273 = vmax.f32 %v265, 0.0
    %v274 = vfloor.f32 %v266
    %v275 = vfloor.f32 %v267
    %v276 = vfloor.f32 %v268
    %v277 = vfloor.f32 %v269
    %v278 = vfloor.f32 %v270
    %v279 = vfloor.f32 %v271
    %v280 = vfloor.f32 %v272
    %v281 = vfloor.f32 %v273
    %v282 = vsub.f32 %v258, %v274
    %v283 = vsub.f32 %v259, %v275
    %v284 = vsub.f32 %v260, %v276
    %v285 = vsub.f32 %v261, %v277
    %v286 = vsub.f32 %v262, %v278
    %v287 = vsub.f32 %v263, %v279
    %v288 = vsub.f32 %v264, %v280
    %v289 = vsub.f32 %v265, %v281
    %v290 = vmax.f32 %v282, -1.0
    %v291 = vmax.f32 %v283, -1.0
    %v292 = vmax.f32 %v284, -1.0
    %v293 = vmax.f32 %v285, -1.0
    %v294 = vmax.f32 %v286, -1.0
    %v295 = vmax.f32 %v287, -1.0
    %v296 = vmax.f32 %v288, -1.0
    %v297 = vmax.f32 %v289, -1.0
    %vm298 = vcmask 523264
    %v300 = vsel %vm298, %v250, 0
    %v303 = vsel %vm298, %v251, 0
    %v306 = vsel %vm298, %v252, 0
    %v309 = vsel %vm298, %v253, 0
    %311 = vmatpush.msra.mxu0 0.0
    %312 = vmatpush.msra.mxu0 0.0
    %313 = vmatpush.msra.mxu0 0.0
    %314 = vmatpush.msra.mxu0 0.0
    %315 = vmatpush.msra.mxu0 0.0
    %316 = vmatpush.msra.mxu0 0.0
    %317 = vmatpush.msra.mxu0 0.0
    %318 = vmatpush.msra.mxu0 0.0
    %319 = vmatpush.msra.mxu0 %v281
    %320 = vmatpush.msra.mxu0 %v280
    %321 = vmatpush.msra.mxu0 %v279
    %322 = vmatpush.msra.mxu0 %v278
    %323 = vmatpush.msra.mxu0 %v277
    %324 = vmatpush.msra.mxu0 %v276
    %325 = vmatpush.msra.mxu0 %v275
    %326 = vmatpush.msra.mxu0 %v274
    %327 = vmatmul.f32.gmra.mxu0 %v300
    %v328 = vpop.f32.mrf.mxu0
    %v329 = vadd.f32 0.0, %v328
    %330 = vmatmul.f32.gmra.mxu0 %v303
    %v331 = vpop.f32.mrf.mxu0
    %v332 = vadd.f32 0.0, %v331
    %333 = vmatmul.f32.gmra.mxu0 %v306
    %v334 = vpop.f32.mrf.mxu0
    %v335 = vadd.f32 0.0, %v334
    %336 = vmatmul.f32.gmra.mxu0 %v309
    %v337 = vpop.f32.mrf.mxu0
    %v338 = vadd.f32 0.0, %v337
    %339 = vdwg.mxu0
    %v340 = vld [vmem:[%s3] sm:$0xff]
    %v341 = vld [vmem:[%s3 + $0x8] sm:$0xff]
    %v342 = vld [vmem:[%s3 + $0x10] sm:$0xff]
    %v343 = vld [vmem:[%s3 + $0x18] sm:$0xff]
    %v344 = vld [vmem:[%s3 + $0x20] sm:$0xff]
    %v345 = vld [vmem:[%s3 + $0x28] sm:$0xff]
    %v346 = vld [vmem:[%s3 + $0x30] sm:$0xff]
    %v347 = vld [vmem:[%s3 + $0x38] sm:$0xff]
    %s348 = scalar_lea.vmem %s3, 64
    %v349 = vld [vmem:[%s348] sm:$0xff]
    %v350 = vld [vmem:[%s348 + $0x8] sm:$0xff]
    %v351 = vld [vmem:[%s348 + $0x10] sm:$0xff]
    %v352 = vld [vmem:[%s348 + $0x18] sm:$0xff]
    %v353 = vld [vmem:[%s348 + $0x20] sm:$0xff]
    %v354 = vld [vmem:[%s348 + $0x28] sm:$0xff]
    %v355 = vld [vmem:[%s348 + $0x30] sm:$0xff]
    %v356 = vld [vmem:[%s348 + $0x38] sm:$0xff]
    %vm357 = vcmask 261120
    %v359 = vsel %vm357, %v332, 0
    %361 = vmatpush.msra.mxu0 0.0
    %362 = vmatpush.msra.mxu0 0.0
    %363 = vmatpush.msra.mxu0 0.0
    %364 = vmatpush.msra.mxu0 0.0
    %365 = vmatpush.msra.mxu0 0.0
    %366 = vmatpush.msra.mxu0 0.0
    %367 = vmatpush.msra.mxu0 0.0
    %368 = vmatpush.msra.mxu0 0.0
    %369 = vmatpush.msra.mxu0 0.0
    %370 = vmatpush.msra.mxu0 0.0
    %371 = vmatpush.msra.mxu0 0.0
    %372 = vmatpush.msra.mxu0 0.0
    %373 = vmatpush.msra.mxu0 %v355
    %374 = vmatpush.msra.mxu0 %v353
    %375 = vmatpush.msra.mxu0 %v351
    %376 = vmatpush.msra.mxu0 %v349
    %377 = vmatmul.f32.gmra.mxu0 %v359
    %v378 = vpop.f32.mrf.mxu0
    %v379 = vadd.f32 0.0, %v378
    %380 = vdwg.mxu0
    %381 = vmatpush.msra.mxu0 0.0
    %382 = vmatpush.msra.mxu0 0.0
    %383 = vmatpush.msra.mxu0 0.0
    %384 = vmatpush.msra.mxu0 0.0
    %385 = vmatpush.msra.mxu0 0.0
    %386 = vmatpush.msra.mxu0 0.0
    %387 = vmatpush.msra.mxu0 0.0
    %388 = vmatpush.msra.mxu0 0.0
    %389 = vmatpush.msra.mxu0 0.0
    %390 = vmatpush.msra.mxu0 0.0
    %391 = vmatpush.msra.mxu0 0.0
    %392 = vmatpush.msra.mxu0 0.0
    %393 = vmatpush.msra.mxu0 %v356
    %394 = vmatpush.msra.mxu0 %v354
    %395 = vmatpush.msra.mxu0 %v352
    %396 = vmatpush.msra.mxu0 %v350
    %397 = vmatmul.f32.gmra.mxu0 %v359
    %v398 = vpop.f32.mrf.mxu0
    %v399 = vadd.f32 0.0, %v398
    %400 = vdwg.mxu0
    %v402 = vsel %vm357, %v329, 0
    %404 = vmatpush.msra.mxu0 0.0
    %405 = vmatpush.msra.mxu0 0.0
    %406 = vmatpush.msra.mxu0 0.0
    %407 = vmatpush.msra.mxu0 0.0
    %408 = vmatpush.msra.mxu0 0.0
    %409 = vmatpush.msra.mxu0 0.0
    %410 = vmatpush.msra.mxu0 0.0
    %411 = vmatpush.msra.mxu0 0.0
    %412 = vmatpush.msra.mxu0 0.0
    %413 = vmatpush.msra.mxu0 0.0
    %414 = vmatpush.msra.mxu0 0.0
    %415 = vmatpush.msra.mxu0 0.0
    %416 = vmatpush.msra.mxu0 %v346
    %417 = vmatpush.msra.mxu0 %v344
    %418 = vmatpush.msra.mxu0 %v342
    %419 = vmatpush.msra.mxu0 %v340
    %420 = vmatmul.f32.gmra.mxu0 %v402
    %v421 = vpop.f32.mrf.mxu0
    %v422 = vadd.f32 %v379, %v421
    %423 = vdwg.mxu0
    %424 = vmatpush.msra.mxu0 0.0
    %425 = vmatpush.msra.mxu0 0.0
    %426 = vmatpush.msra.mxu0 0.0
    %427 = vmatpush.msra.mxu0 0.0
    %428 = vmatpush.msra.mxu0 0.0
    %429 = vmatpush.msra.mxu0 0.0
    %430 = vmatpush.msra.mxu0 0.0
    %431 = vmatpush.msra.mxu0 0.0
    %432 = vmatpush.msra.mxu0 0.0
    %433 = vmatpush.msra.mxu0 0.0
    %434 = vmatpush.msra.mxu0 0.0
    %435 = vmatpush.msra.mxu0 0.0
    %436 = vmatpush.msra.mxu0 %v347
    %437 = vmatpush.msra.mxu0 %v345
    %438 = vmatpush.msra.mxu0 %v343
    %439 = vmatpush.msra.mxu0 %v341
    %440 = vmatmul.f32.gmra.mxu0 %v402
    %v441 = vpop.f32.mrf.mxu0
    %v442 = vadd.f32 %v399, %v441
    %443 = vdwg.mxu0
    %s444 = scalar_lea.vmem %s3, 128
    %v445 = vld [vmem:[%s444] sm:$0xff]
    %v446 = vld [vmem:[%s444 + $0x8] sm:$0xff]
    %v447 = vld [vmem:[%s444 + $0x10] sm:$0xff]
    %v448 = vld [vmem:[%s444 + $0x18] sm:$0xff]
    %v449 = vld [vmem:[%s444 + $0x20] sm:$0xff]
    %v450 = vld [vmem:[%s444 + $0x28] sm:$0xff]
    %v451 = vld [vmem:[%s444 + $0x30] sm:$0xff]
    %v452 = vld [vmem:[%s444 + $0x38] sm:$0xff]
    %v454 = vsel %vm357, %v335, 0
    %456 = vmatpush.msra.mxu0 0.0
    %457 = vmatpush.msra.mxu0 0.0
    %458 = vmatpush.msra.mxu0 0.0
    %459 = vmatpush.msra.mxu0 0.0
    %460 = vmatpush.msra.mxu0 0.0
    %461 = vmatpush.msra.mxu0 0.0
    %462 = vmatpush.msra.mxu0 0.0
    %463 = vmatpush.msra.mxu0 0.0
    %464 = vmatpush.msra.mxu0 0.0
    %465 = vmatpush.msra.mxu0 0.0
    %466 = vmatpush.msra.mxu0 0.0
    %467 = vmatpush.msra.mxu0 0.0
    %468 = vmatpush.msra.mxu0 %v451
    %469 = vmatpush.msra.mxu0 %v449
    %470 = vmatpush.msra.mxu0 %v447
    %471 = vmatpush.msra.mxu0 %v445
    %472 = vmatmul.f32.gmra.mxu0 %v454
    %v473 = vpop.f32.mrf.mxu0
    %v474 = vadd.f32 0.0, %v473
    %475 = vdwg.mxu0
    %476 = vmatpush.msra.mxu0 0.0
    %477 = vmatpush.msra.mxu0 0.0
    %478 = vmatpush.msra.mxu0 0.0
    %479 = vmatpush.msra.mxu0 0.0
    %480 = vmatpush.msra.mxu0 0.0
    %481 = vmatpush.msra.mxu0 0.0
    %482 = vmatpush.msra.mxu0 0.0
    %483 = vmatpush.msra.mxu0 0.0
    %484 = vmatpush.msra.mxu0 0.0
    %485 = vmatpush.msra.mxu0 0.0
    %486 = vmatpush.msra.mxu0 0.0
    %487 = vmatpush.msra.mxu0 0.0
    %488 = vmatpush.msra.mxu0 %v452
    %489 = vmatpush.msra.mxu0 %v450
    %490 = vmatpush.msra.mxu0 %v448
    %491 = vmatpush.msra.mxu0 %v446
    %492 = vmatmul.f32.gmra.mxu0 %v454
    %v493 = vpop.f32.mrf.mxu0
    %v494 = vadd.f32 0.0, %v493
    %495 = vdwg.mxu0
    %v496 = vadd.f32 %v422, %v474
    %v497 = vadd.f32 %v442, %v494
    %s498 = scalar_lea.vmem %s3, 192
    %v499 = vld [vmem:[%s498] sm:$0xff]
    %v500 = vld [vmem:[%s498 + $0x8] sm:$0xff]
    %v501 = vld [vmem:[%s498 + $0x10] sm:$0xff]
    %v502 = vld [vmem:[%s498 + $0x18] sm:$0xff]
    %v503 = vld [vmem:[%s498 + $0x20] sm:$0xff]
    %v504 = vld [vmem:[%s498 + $0x28] sm:$0xff]
    %v505 = vld [vmem:[%s498 + $0x30] sm:$0xff]
    %v506 = vld [vmem:[%s498 + $0x38] sm:$0xff]
    %v508 = vsel %vm357, %v338, 0
    %510 = vmatpush.msra.mxu0 0.0
    %511 = vmatpush.msra.mxu0 0.0
    %512 = vmatpush.msra.mxu0 0.0
    %513 = vmatpush.msra.mxu0 0.0
    %514 = vmatpush.msra.mxu0 0.0
    %515 = vmatpush.msra.mxu0 0.0
    %516 = vmatpush.msra.mxu0 0.0
    %517 = vmatpush.msra.mxu0 0.0
    %518 = vmatpush.msra.mxu0 0.0
    %519 = vmatpush.msra.mxu0 0.0
    %520 = vmatpush.msra.mxu0 0.0
    %521 = vmatpush.msra.mxu0 0.0
    %522 = vmatpush.msra.mxu0 %v505
    %523 = vmatpush.msra.mxu0 %v503
    %524 = vmatpush.msra.mxu0 %v501
    %525 = vmatpush.msra.mxu0 %v499
    %526 = vmatmul.f32.gmra.mxu0 %v508
    %v527 = vpop.f32.mrf.mxu0
    %v528 = vadd.f32 0.0, %v527
    %529 = vdwg.mxu0
    %530 = vmatpush.msra.mxu0 0.0
    %531 = vmatpush.msra.mxu0 0.0
    %532 = vmatpush.msra.mxu0 0.0
    %533 = vmatpush.msra.mxu0 0.0
    %534 = vmatpush.msra.mxu0 0.0
    %535 = vmatpush.msra.mxu0 0.0
    %536 = vmatpush.msra.mxu0 0.0
    %537 = vmatpush.msra.mxu0 0.0
    %538 = vmatpush.msra.mxu0 0.0
    %539 = vmatpush.msra.mxu0 0.0
    %540 = vmatpush.msra.mxu0 0.0
    %541 = vmatpush.msra.mxu0 0.0
    %542 = vmatpush.msra.mxu0 %v506
    %543 = vmatpush.msra.mxu0 %v504
    %544 = vmatpush.msra.mxu0 %v502
    %545 = vmatpush.msra.mxu0 %v500
    %546 = vmatmul.f32.gmra.mxu0 %v508
    %v547 = vpop.f32.mrf.mxu0
    %v548 = vadd.f32 0.0, %v547
    %549 = vdwg.mxu0
    %v550 = vadd.f32 %v496, %v528
    %v551 = vadd.f32 %v497, %v548
    %v552 = vadd.f32 %v550, 0.0
    %v553 = vadd.f32 %v551, 0.0
    %v554 = vmax.f32 %v552, 0.0
    %v555 = vmax.f32 %v553, 0.0
    %v556 = vfloor.f32 %v554
    %v557 = vfloor.f32 %v555
    %v558 = vsub.f32 %v552, %v556
    %v559 = vsub.f32 %v553, %v557
    %v560 = vmax.f32 %v558, -1.0
    %v561 = vmax.f32 %v559, -1.0
    %562 = vmatpush.xpose.msra.mxu0 0.0
    %563 = vmatpush.xpose.msra.mxu0 0.0
    %564 = vmatpush.xpose.msra.mxu0 0.0
    %565 = vmatpush.xpose.msra.mxu0 0.0
    %566 = vmatpush.xpose.msra.mxu0 0.0
    %567 = vmatpush.xpose.msra.mxu0 0.0
    %568 = vmatpush.xpose.msra.mxu0 0.0
    %569 = vmatpush.xpose.msra.mxu0 0.0
    %570 = vmatpush.xpose.msra.mxu0 0.0
    %571 = vmatpush.xpose.msra.mxu0 0.0
    %572 = vmatpush.xpose.msra.mxu0 0.0
    %573 = vmatpush.xpose.msra.mxu0 0.0
    %574 = vmatpush.xpose.msra.mxu0 0.0
    %575 = vmatpush.xpose.msra.mxu0 0.0
    %576 = vmatpush.xpose.msra.mxu0 %v256
    %577 = vmatpush.xpose.msra.mxu0 %v254
    %578 = vmatmul.f32.gmra.mxu0 %v556
    %v579 = vpop.f32.mrf.mxu0
    %v580 = vadd.f32 0.0, %v579
    %581 = vdwg.mxu0
    %582 = vmatpush.xpose.msra.mxu0 0.0
    %583 = vmatpush.xpose.msra.mxu0 0.0
    %584 = vmatpush.xpose.msra.mxu0 0.0
    %585 = vmatpush.xpose.msra.mxu0 0.0
    %586 = vmatpush.xpose.msra.mxu0 0.0
    %587 = vmatpush.xpose.msra.mxu0 0.0
    %588 = vmatpush.xpose.msra.mxu0 0.0
    %589 = vmatpush.xpose.msra.mxu0 0.0
    %590 = vmatpush.xpose.msra.mxu0 0.0
    %591 = vmatpush.xpose.msra.mxu0 0.0
    %592 = vmatpush.xpose.msra.mxu0 0.0
    %593 = vmatpush.xpose.msra.mxu0 0.0
    %594 = vmatpush.xpose.msra.mxu0 0.0
    %595 = vmatpush.xpose.msra.mxu0 0.0
    %596 = vmatpush.xpose.msra.mxu0 %v257
    %597 = vmatpush.xpose.msra.mxu0 %v255
    %598 = vmatmul.f32.gmra.mxu0 %v557
    %v599 = vpop.f32.mrf.mxu0
    %v600 = vadd.f32 %v580, %v599
    %601 = vdwg.mxu0
    %v602 = vmax.f32 %v600, 0.0
    %v603 = vfloor.f32 %v602
    %v604 = vsub.f32 %v600, %v603
    %v605 = vmax.f32 %v604, -1.0
    %v607 = vrot.slane %v603, 1
    %v608 = vrot.slane %v603, 2
    %v609 = vrot.slane %v603, 3
    %vm613 = vcmask 73728
    %614 = vst.msk [vmem:[#allocation2] sm:$0x1] %vm613, %v603
    %615 = vst.msk [vmem:[#allocation2 + $0x2] sm:$0x1] %vm613, %v607
    %616 = vst.msk [vmem:[#allocation2 + $0x4] sm:$0x1] %vm613, %v608
    %617 = vst.msk [vmem:[#allocation2 + $0x6] sm:$0x1] %vm613, %v609
    %v618 = vadd.f32 %v290, %v227
    %v619 = vadd.f32 %v291, %v230
    %v620 = vadd.f32 %v292, %v233
    %v621 = vadd.f32 %v293, %v236
    %v622 = vadd.f32 %v294, %v239
    %v623 = vadd.f32 %v295, %v242
    %v624 = vadd.f32 %v296, %v245
    %v625 = vadd.f32 %v297, %v248
    %v626 = vmax.f32 %v618, 0.0
    %v627 = vmax.f32 %v619, 0.0
    %v628 = vmax.f32 %v620, 0.0
    %v629 = vmax.f32 %v621, 0.0
    %v630 = vmax.f32 %v622, 0.0
    %v631 = vmax.f32 %v623, 0.0
    %v632 = vmax.f32 %v624, 0.0
    %v633 = vmax.f32 %v625, 0.0
    %v634 = vfloor.f32 %v626
    %v635 = vfloor.f32 %v627
    %v636 = vfloor.f32 %v628
    %v637 = vfloor.f32 %v629
    %v638 = vfloor.f32 %v630
    %v639 = vfloor.f32 %v631
    %v640 = vfloor.f32 %v632
    %v641 = vfloor.f32 %v633
    %642 = vmatpush.msra.mxu0 0.0
    %643 = vmatpush.msra.mxu0 0.0
    %644 = vmatpush.msra.mxu0 0.0
    %645 = vmatpush.msra.mxu0 0.0
    %646 = vmatpush.msra.mxu0 0.0
    %647 = vmatpush.msra.mxu0 0.0
    %648 = vmatpush.msra.mxu0 0.0
    %649 = vmatpush.msra.mxu0 0.0
    %650 = vmatpush.msra.mxu0 %v641
    %651 = vmatpush.msra.mxu0 %v640
    %652 = vmatpush.msra.mxu0 %v639
    %653 = vmatpush.msra.mxu0 %v638
    %654 = vmatpush.msra.mxu0 %v637
    %655 = vmatpush.msra.mxu0 %v636
    %656 = vmatpush.msra.mxu0 %v635
    %657 = vmatpush.msra.mxu0 %v634
    %658 = vmatmul.f32.gmra.mxu0 %v300
    %v659 = vpop.f32.mrf.mxu0
    %v660 = vadd.f32 0.0, %v659
    %661 = vmatmul.f32.gmra.mxu0 %v303
    %v662 = vpop.f32.mrf.mxu0
    %v663 = vadd.f32 0.0, %v662
    %664 = vmatmul.f32.gmra.mxu0 %v306
    %v665 = vpop.f32.mrf.mxu0
    %v666 = vadd.f32 0.0, %v665
    %667 = vmatmul.f32.gmra.mxu0 %v309
    %v668 = vpop.f32.mrf.mxu0
    %v669 = vadd.f32 0.0, %v668
    %670 = vdwg.mxu0
    %v671 = vld [vmem:[%s3] sm:$0xff]
    %v672 = vld [vmem:[%s3 + $0x8] sm:$0xff]
    %v673 = vld [vmem:[%s3 + $0x10] sm:$0xff]
    %v674 = vld [vmem:[%s3 + $0x18] sm:$0xff]
    %v675 = vld [vmem:[%s3 + $0x20] sm:$0xff]
    %v676 = vld [vmem:[%s3 + $0x28] sm:$0xff]
    %v677 = vld [vmem:[%s3 + $0x30] sm:$0xff]
    %v678 = vld [vmem:[%s3 + $0x38] sm:$0xff]
    %v679 = vld [vmem:[%s348] sm:$0xff]
    %v680 = vld [vmem:[%s348 + $0x8] sm:$0xff]
    %v681 = vld [vmem:[%s348 + $0x10] sm:$0xff]
    %v682 = vld [vmem:[%s348 + $0x18] sm:$0xff]
    %v683 = vld [vmem:[%s348 + $0x20] sm:$0xff]
    %v684 = vld [vmem:[%s348 + $0x28] sm:$0xff]
    %v685 = vld [vmem:[%s348 + $0x30] sm:$0xff]
    %v686 = vld [vmem:[%s348 + $0x38] sm:$0xff]
    %v688 = vsel %vm357, %v663, 0
    %690 = vmatpush.msra.mxu0 0.0
    %691 = vmatpush.msra.mxu0 0.0
    %692 = vmatpush.msra.mxu0 0.0
    %693 = vmatpush.msra.mxu0 0.0
    %694 = vmatpush.msra.mxu0 0.0
    %695 = vmatpush.msra.mxu0 0.0
    %696 = vmatpush.msra.mxu0 0.0
    %697 = vmatpush.msra.mxu0 0.0
    %698 = vmatpush.msra.mxu0 0.0
    %699 = vmatpush.msra.mxu0 0.0
    %700 = vmatpush.msra.mxu0 0.0
    %701 = vmatpush.msra.mxu0 0.0
    %702 = vmatpush.msra.mxu0 %v685
    %703 = vmatpush.msra.mxu0 %v683
    %704 = vmatpush.msra.mxu0 %v681
    %705 = vmatpush.msra.mxu0 %v679
    %706 = vmatmul.f32.gmra.mxu0 %v688
    %v707 = vpop.f32.mrf.mxu0
    %v708 = vadd.f32 0.0, %v707
    %709 = vdwg.mxu0
    %710 = vmatpush.msra.mxu0 0.0
    %711 = vmatpush.msra.mxu0 0.0
    %712 = vmatpush.msra.mxu0 0.0
    %713 = vmatpush.msra.mxu0 0.0
    %714 = vmatpush.msra.mxu0 0.0
    %715 = vmatpush.msra.mxu0 0.0
    %716 = vmatpush.msra.mxu0 0.0
    %717 = vmatpush.msra.mxu0 0.0
    %718 = vmatpush.msra.mxu0 0.0
    %719 = vmatpush.msra.mxu0 0.0
    %720 = vmatpush.msra.mxu0 0.0
    %721 = vmatpush.msra.mxu0 0.0
    %722 = vmatpush.msra.mxu0 %v686
    %723 = vmatpush.msra.mxu0 %v684
    %724 = vmatpush.msra.mxu0 %v682
    %725 = vmatpush.msra.mxu0 %v680
    %726 = vmatmul.f32.gmra.mxu0 %v688
    %v727 = vpop.f32.mrf.mxu0
    %v728 = vadd.f32 0.0, %v727
    %729 = vdwg.mxu0
    %v731 = vsel %vm357, %v660, 0
    %733 = vmatpush.msra.mxu0 0.0
    %734 = vmatpush.msra.mxu0 0.0
    %735 = vmatpush.msra.mxu0 0.0
    %736 = vmatpush.msra.mxu0 0.0
    %737 = vmatpush.msra.mxu0 0.0
    %738 = vmatpush.msra.mxu0 0.0
    %739 = vmatpush.msra.mxu0 0.0
    %740 = vmatpush.msra.mxu0 0.0
    %741 = vmatpush.msra.mxu0 0.0
    %742 = vmatpush.msra.mxu0 0.0
    %743 = vmatpush.msra.mxu0 0.0
    %744 = vmatpush.msra.mxu0 0.0
    %745 = vmatpush.msra.mxu0 %v677
    %746 = vmatpush.msra.mxu0 %v675
    %747 = vmatpush.msra.mxu0 %v673
    %748 = vmatpush.msra.mxu0 %v671
    %749 = vmatmul.f32.gmra.mxu0 %v731
    %v750 = vpop.f32.mrf.mxu0
    %v751 = vadd.f32 %v708, %v750
    %752 = vdwg.mxu0
    %753 = vmatpush.msra.mxu0 0.0
    %754 = vmatpush.msra.mxu0 0.0
    %755 = vmatpush.msra.mxu0 0.0
    %756 = vmatpush.msra.mxu0 0.0
    %757 = vmatpush.msra.mxu0 0.0
    %758 = vmatpush.msra.mxu0 0.0
    %759 = vmatpush.msra.mxu0 0.0
    %760 = vmatpush.msra.mxu0 0.0
    %761 = vmatpush.msra.mxu0 0.0
    %762 = vmatpush.msra.mxu0 0.0
    %763 = vmatpush.msra.mxu0 0.0
    %764 = vmatpush.msra.mxu0 0.0
    %765 = vmatpush.msra.mxu0 %v678
    %766 = vmatpush.msra.mxu0 %v676
    %767 = vmatpush.msra.mxu0 %v674
    %768 = vmatpush.msra.mxu0 %v672
    %769 = vmatmul.f32.gmra.mxu0 %v731
    %v770 = vpop.f32.mrf.mxu0
    %v771 = vadd.f32 %v728, %v770
    %772 = vdwg.mxu0
    %v773 = vld [vmem:[%s444] sm:$0xff]
    %v774 = vld [vmem:[%s444 + $0x8] sm:$0xff]
    %v775 = vld [vmem:[%s444 + $0x10] sm:$0xff]
    %v776 = vld [vmem:[%s444 + $0x18] sm:$0xff]
    %v777 = vld [vmem:[%s444 + $0x20] sm:$0xff]
    %v778 = vld [vmem:[%s444 + $0x28] sm:$0xff]
    %v779 = vld [vmem:[%s444 + $0x30] sm:$0xff]
    %v780 = vld [vmem:[%s444 + $0x38] sm:$0xff]
    %v782 = vsel %vm357, %v666, 0
    %784 = vmatpush.msra.mxu0 0.0
    %785 = vmatpush.msra.mxu0 0.0
    %786 = vmatpush.msra.mxu0 0.0
    %787 = vmatpush.msra.mxu0 0.0
    %788 = vmatpush.msra.mxu0 0.0
    %789 = vmatpush.msra.mxu0 0.0
    %790 = vmatpush.msra.mxu0 0.0
    %791 = vmatpush.msra.mxu0 0.0
    %792 = vmatpush.msra.mxu0 0.0
    %793 = vmatpush.msra.mxu0 0.0
    %794 = vmatpush.msra.mxu0 0.0
    %795 = vmatpush.msra.mxu0 0.0
    %796 = vmatpush.msra.mxu0 %v779
    %797 = vmatpush.msra.mxu0 %v777
    %798 = vmatpush.msra.mxu0 %v775
    %799 = vmatpush.msra.mxu0 %v773
    %800 = vmatmul.f32.gmra.mxu0 %v782
    %v801 = vpop.f32.mrf.mxu0
    %v802 = vadd.f32 0.0, %v801
    %803 = vdwg.mxu0
    %804 = vmatpush.msra.mxu0 0.0
    %805 = vmatpush.msra.mxu0 0.0
    %806 = vmatpush.msra.mxu0 0.0
    %807 = vmatpush.msra.mxu0 0.0
    %808 = vmatpush.msra.mxu0 0.0
    %809 = vmatpush.msra.mxu0 0.0
    %810 = vmatpush.msra.mxu0 0.0
    %811 = vmatpush.msra.mxu0 0.0
    %812 = vmatpush.msra.mxu0 0.0
    %813 = vmatpush.msra.mxu0 0.0
    %814 = vmatpush.msra.mxu0 0.0
    %815 = vmatpush.msra.mxu0 0.0
    %816 = vmatpush.msra.mxu0 %v780
    %817 = vmatpush.msra.mxu0 %v778
    %818 = vmatpush.msra.mxu0 %v776
    %819 = vmatpush.msra.mxu0 %v774
    %820 = vmatmul.f32.gmra.mxu0 %v782
    %v821 = vpop.f32.mrf.mxu0
    %v822 = vadd.f32 0.0, %v821
    %823 = vdwg.mxu0
    %v824 = vadd.f32 %v751, %v802
    %v825 = vadd.f32 %v771, %v822
    %v826 = vld [vmem:[%s498] sm:$0xff]
    %v827 = vld [vmem:[%s498 + $0x8] sm:$0xff]
    %v828 = vld [vmem:[%s498 + $0x10] sm:$0xff]
    %v829 = vld [vmem:[%s498 + $0x18] sm:$0xff]
    %v830 = vld [vmem:[%s498 + $0x20] sm:$0xff]
    %v831 = vld [vmem:[%s498 + $0x28] sm:$0xff]
    %v832 = vld [vmem:[%s498 + $0x30] sm:$0xff]
    %v833 = vld [vmem:[%s498 + $0x38] sm:$0xff]
    %v835 = vsel %vm357, %v669, 0
    %837 = vmatpush.msra.mxu0 0.0
    %838 = vmatpush.msra.mxu0 0.0
    %839 = vmatpush.msra.mxu0 0.0
    %840 = vmatpush.msra.mxu0 0.0
    %841 = vmatpush.msra.mxu0 0.0
    %842 = vmatpush.msra.mxu0 0.0
    %843 = vmatpush.msra.mxu0 0.0
    %844 = vmatpush.msra.mxu0 0.0
    %845 = vmatpush.msra.mxu0 0.0
    %846 = vmatpush.msra.mxu0 0.0
    %847 = vmatpush.msra.mxu0 0.0
    %848 = vmatpush.msra.mxu0 0.0
    %849 = vmatpush.msra.mxu0 %v832
    %850 = vmatpush.msra.mxu0 %v830
    %851 = vmatpush.msra.mxu0 %v828
    %852 = vmatpush.msra.mxu0 %v826
    %853 = vmatmul.f32.gmra.mxu0 %v835
    %v854 = vpop.f32.mrf.mxu0
    %v855 = vadd.f32 0.0, %v854
    %856 = vdwg.mxu0
    %857 = vmatpush.msra.mxu0 0.0
    %858 = vmatpush.msra.mxu0 0.0
    %859 = vmatpush.msra.mxu0 0.0
    %860 = vmatpush.msra.mxu0 0.0
    %861 = vmatpush.msra.mxu0 0.0
    %862 = vmatpush.msra.mxu0 0.0
    %863 = vmatpush.msra.mxu0 0.0
    %864 = vmatpush.msra.mxu0 0.0
    %865 = vmatpush.msra.mxu0 0.0
    %866 = vmatpush.msra.mxu0 0.0
    %867 = vmatpush.msra.mxu0 0.0
    %868 = vmatpush.msra.mxu0 0.0
    %869 = vmatpush.msra.mxu0 %v833
    %870 = vmatpush.msra.mxu0 %v831
    %871 = vmatpush.msra.mxu0 %v829
    %872 = vmatpush.msra.mxu0 %v827
    %873 = vmatmul.f32.gmra.mxu0 %v835
    %v874 = vpop.f32.mrf.mxu0
    %v875 = vadd.f32 0.0, %v874
    %876 = vdwg.mxu0
    %v877 = vadd.f32 %v824, %v855
    %v878 = vadd.f32 %v825, %v875
    %v879 = vadd.f32 %v560, %v877
    %v880 = vadd.f32 %v561, %v878
    %v881 = vmax.f32 %v879, 0.0
    %v882 = vmax.f32 %v880, 0.0
    %v883 = vfloor.f32 %v881
    %v884 = vfloor.f32 %v882
    %885 = vmatpush.xpose.msra.mxu0 0.0
    %886 = vmatpush.xpose.msra.mxu0 0.0
    %887 = vmatpush.xpose.msra.mxu0 0.0
    %888 = vmatpush.xpose.msra.mxu0 0.0
    %889 = vmatpush.xpose.msra.mxu0 0.0
    %890 = vmatpush.xpose.msra.mxu0 0.0
    %891 = vmatpush.xpose.msra.mxu0 0.0
    %892 = vmatpush.xpose.msra.mxu0 0.0
    %893 = vmatpush.xpose.msra.mxu0 0.0
    %894 = vmatpush.xpose.msra.mxu0 0.0
    %895 = vmatpush.xpose.msra.mxu0 0.0
    %896 = vmatpush.xpose.msra.mxu0 0.0
    %897 = vmatpush.xpose.msra.mxu0 0.0
    %898 = vmatpush.xpose.msra.mxu0 0.0
    %899 = vmatpush.xpose.msra.mxu0 %v256
    %900 = vmatpush.xpose.msra.mxu0 %v254
    %901 = vmatmul.f32.gmra.mxu0 %v883
    %v902 = vpop.f32.mrf.mxu0
    %v903 = vadd.f32 0.0, %v902
    %904 = vdwg.mxu0
    %905 = vmatpush.xpose.msra.mxu0 0.0
    %906 = vmatpush.xpose.msra.mxu0 0.0
    %907 = vmatpush.xpose.msra.mxu0 0.0
    %908 = vmatpush.xpose.msra.mxu0 0.0
    %909 = vmatpush.xpose.msra.mxu0 0.0
    %910 = vmatpush.xpose.msra.mxu0 0.0
    %911 = vmatpush.xpose.msra.mxu0 0.0
    %912 = vmatpush.xpose.msra.mxu0 0.0
    %913 = vmatpush.xpose.msra.mxu0 0.0
    %914 = vmatpush.xpose.msra.mxu0 0.0
    %915 = vmatpush.xpose.msra.mxu0 0.0
    %916 = vmatpush.xpose.msra.mxu0 0.0
    %917 = vmatpush.xpose.msra.mxu0 0.0
    %918 = vmatpush.xpose.msra.mxu0 0.0
    %919 = vmatpush.xpose.msra.mxu0 %v257
    %920 = vmatpush.xpose.msra.mxu0 %v255
    %921 = vmatmul.f32.gmra.mxu0 %v884
    %v922 = vpop.f32.mrf.mxu0
    %v923 = vadd.f32 %v903, %v922
    %924 = vdwg.mxu0
    %v925 = vadd.f32 %v605, %v923
    %v926 = vmax.f32 %v925, 0.0
    %v927 = vfloor.f32 %v926
    %v929 = vrot.slane %v927, 1
    %v930 = vrot.slane %v927, 2
    %v931 = vrot.slane %v927, 3
    %935 = vst.msk [vmem:[#allocation2 + $0x1] sm:$0x1] %vm613, %v927
    %936 = vst.msk [vmem:[#allocation2 + $0x3] sm:$0x1] %vm613, %v929
    %937 = vst.msk [vmem:[#allocation2 + $0x5] sm:$0x1] %vm613, %v930
    %938 = vst.msk [vmem:[#allocation2 + $0x7] sm:$0x1] %vm613, %v931
    // Predicated region
    $region22: #{snn_bptt_forward.5} parent=1 // pred_check
      _
    $region23: #{snn_bptt_forward.5} parent=1 // pred_check_branch
      %940 = sbr.rel (0) target = $region25
    $region24: #{snn_bptt_forward.5} parent=1 // pred_region
      %942 = vsyncadd [#allocation3], 0
      %s943 = sshll.u32 [#allocation2], 4
      %s944 = int_to_ptr.vmem [resolvable:$true] %s943
      %s945 = sshll.u32 %s5, 4
      %s946 = int_to_ptr.hbm [resolvable:$true] %s945
      %951 = dma.vmem_to_hbm [thread:$0]  %s944, 128, %s946, [#allocation3], 32, 32, 2
    $region25: #{snn_bptt_forward.5} parent=1 // pred_fallthru
      _
    // Predicated region
    $region26: #{snn_bptt_forward.5} parent=1 // pred_check
      _
    $region27: #{snn_bptt_forward.5} parent=1 // pred_check_branch
      %953 = sbr.rel (0) target = $region29
    $region28: #{snn_bptt_forward.5} parent=1 // pred_region
      %955 = dma.done [#allocation3], 128
    $region29: #{snn_bptt_forward.5} parent=1 // pred_fallthru
      _
    %956 = vsyncpa [#allocation3], 1

</llo_original>
